<compile_context>
chip_gen: v6e
topology: v6e:2x2x1
jax: 0.10.0
libtpu: 0.0.40
codegen_flags: <defaults>
</compile_context>

<pallas_src>
import functools

import numpy as np
import jax
import jax.numpy as jnp
from jax import lax
from jax.experimental import pallas as pl
from jax.experimental.pallas import tpu as pltpu

EPS = 1e-5  # FrozenBatchNorm2d default eps


def _bottleneck_kernel(x_ref, w1s_ref, w2_ref, w3_ref, b1s_ref, b2_ref,
                       out_ref, pad_ref, *, H, W, Cb, Cp):
    f32 = jnp.float32
    bf16 = jnp.bfloat16
    Wp, Hp = W + 2, H + 2
    G = Wp + 1                      # guard rows so every tap slab stays in-bounds

    x2d = x_ref[0]                  # (H*W, Cin) bf16

    # ---- fused [shortcut-projection | conv1] 1x1 matmul ----------------------
    # BN scale is already folded into the bf16 weights; conv3's BN bias is
    # pre-merged into the shortcut bias, so only one bias add per branch.
    y = jnp.dot(x2d, w1s_ref[...], preferred_element_type=f32) + b1s_ref[...]
    sc = y[:, :Cp]                                      # shortcut (f32, no relu)
    y1 = jnp.maximum(y[:, Cp:], 0.0).astype(bf16)       # conv1 + relu -> (H*W, Cb)

    # ---- conv2: 3x3, pad=1, stride=1 as ONE im2col matmul --------------------
    # Flat row-major padded activation with G zero guard rows on each end:
    # pad_ref[G + h'*Wp + w'] = padded(y1)[h', w'].  Each of the 9 taps is then
    # the contiguous slab pad_ref[dy*Wp+dx : dy*Wp+dx + Hp*Wp] (no per-tap
    # slice+reshape relayout).  The matmul covers the padded grid; the valid
    # H*W rows are extracted once afterwards.
    pad_ref[...] = jnp.zeros((Hp * Wp + 2 * G, Cb), bf16)
    for h in range(H):                                  # unrolled row-band stores
        r0 = G + (h + 1) * Wp + 1
        pad_ref[r0:r0 + W, :] = y1[h * W:(h + 1) * W, :]

    cols = jnp.concatenate(
        [pad_ref[dy * Wp + dx: dy * Wp + dx + Hp * Wp, :]
         for dy in range(3) for dx in range(3)], axis=-1)          # (Hp*Wp, 9*Cb) bf16
    y2p = jnp.dot(cols, w2_ref[...], preferred_element_type=f32)   # (Hp*Wp, Cb) f32
    # keep only interior (valid) output pixels, then BN bias + relu
    y2 = y2p[Wp:Wp + H * Wp, :].reshape(H, Wp, Cb)[:, 1:W + 1, :].reshape(H * W, Cb)
    y2 = jnp.maximum(y2 + b2_ref[...], 0.0)

    # ---- conv3 (1x1, BN bias merged into shortcut) + residual + relu ---------
    y3 = jnp.dot(y2.astype(bf16), w3_ref[...], preferred_element_type=f32)
    out_ref[0] = jnp.maximum(y3 + sc, 0.0).astype(out_ref.dtype)


def bottleneck_block(x_nchw, params):
    """Pallas implementation of BottleneckBlock.forward (stride=1, groups=1)."""
    N, Cin, H, W = x_nchw.shape
    Cb = params["b2"].shape[1]
    Cp = params["w3"].shape[1]          # lane-padded output channels (mult. of 128)
    Cout = params["cout"]
    Wp, Hp = W + 2, H + 2
    T = Hp * Wp + 2 * (Wp + 1)          # flat padded rows + guards

    # NCHW -> NHWC -> (N, H*W, Cin), bf16 matmul operands.
    x = jnp.transpose(x_nchw, (0, 2, 3, 1)).reshape(N, H * W, Cin)
    x = x.astype(jnp.bfloat16)

    kernel = functools.partial(_bottleneck_kernel, H=H, W=W, Cb=Cb, Cp=Cp)

    def fixed(arr):                     # whole (small) array resident each step
        return pl.BlockSpec(arr.shape, lambda n: (0, 0))

    out = pl.pallas_call(
        kernel,
        out_shape=jax.ShapeDtypeStruct((N, H * W, Cp), jnp.bfloat16),
        grid=(N,),
        in_specs=[
            pl.BlockSpec((1, H * W, Cin), lambda n: (n, 0, 0)),
            fixed(params["w1s"]),   # (Cin, Cp+Cb) bf16  [shortcut | conv1], scale folded
            fixed(params["w2"]),    # (9*Cb, Cb)   bf16  im2col 3x3, scale folded
            fixed(params["w3"]),    # (Cb, Cp)     bf16  conv3, scale folded, lane-padded
            fixed(params["b1s"]),   # (1, Cp+Cb)   f32   [shortcut+conv3 bias | conv1 bias]
            fixed(params["b2"]),    # (1, Cb)      f32
        ],
        out_specs=pl.BlockSpec((1, H * W, Cp), lambda n: (n, 0, 0)),
        scratch_shapes=[pltpu.VMEM((T, Cb), jnp.bfloat16)],
        compiler_params=pltpu.CompilerParams(
            dimension_semantics=("parallel",)),    # batch elems independent
    )(x, params["w1s"], params["w2"], params["w3"], params["b1s"], params["b2"])

    out = out[..., :Cout].astype(jnp.float32).reshape(N, H, W, Cout)
    return jnp.transpose(out, (0, 3, 1, 2))        # NHWC -> NCHW


# ---------------------------------------------------------------------------
# Parameter construction (PyTorch layout) + folding / packing helpers
# ---------------------------------------------------------------------------
def make_params(key, in_channels, bottleneck_channels, out_channels):
    ks = jax.random.split(key, 20)
    ki = iter(ks)

    def conv_w(cout, cin, kh, kw):
        return 0.1 * jax.random.normal(next(ki), (cout, cin, kh, kw), jnp.float32)

    def bn(c):
        w = 1.0 + 0.1 * jax.random.normal(next(ki), (c,), jnp.float32)
        b = 0.1 * jax.random.normal(next(ki), (c,), jnp.float32)
        m = 0.1 * jax.random.normal(next(ki), (c,), jnp.float32)
        v = jax.random.uniform(next(ki), (c,), jnp.float32, 0.5, 1.5)
        return (w, b, m, v)

    return {
        "w1_t": conv_w(bottleneck_channels, in_channels, 1, 1),
        "w2_t": conv_w(bottleneck_channels, bottleneck_channels, 3, 3),
        "w3_t": conv_w(out_channels, bottleneck_channels, 1, 1),
        "ws_t": conv_w(out_channels, in_channels, 1, 1),
        "bn1": bn(bottleneck_channels),
        "bn2": bn(bottleneck_channels),
        "bn3": bn(out_channels),
        "bns": bn(out_channels),
    }


def fold_for_kernel(pt):
    """PyTorch-layout weights / BN buffers -> packed kernel-friendly form."""
    def fold_bn(bn):
        w, b, m, v = bn
        g = w / jnp.sqrt(v + EPS)
        return g, b - m * g

    g1, b1 = fold_bn(pt["bn1"])
    g2, b2 = fold_bn(pt["bn2"])
    g3, b3 = fold_bn(pt["bn3"])
    gs, bs = fold_bn(pt["bns"])

    # 1x1 convs: (Cout, Cin, 1, 1) -> (Cin, Cout); BN scale folded into columns.
    w1 = pt["w1_t"][:, :, 0, 0].T * g1[None, :]
    w3 = pt["w3_t"][:, :, 0, 0].T * g3[None, :]
    ws = pt["ws_t"][:, :, 0, 0].T * gs[None, :]
    # 3x3 conv -> im2col weight (9*Cb, Cb), tap order (dy, dx) row-major — must
    # match the kernel's tap order; BN scale folded into columns.
    w2 = jnp.concatenate([pt["w2_t"][:, :, dy, dx].T
                          for dy in range(3) for dx in range(3)],
                         axis=0) * g2[None, :]

    Cout = pt["w3_t"].shape[0]
    Cp = ((Cout + 127) // 128) * 128          # lane-dense output width

    def pad_cols(a):
        return jnp.pad(a, ((0, 0), (0, Cp - a.shape[1])))

    # Fused [shortcut | conv1]: shortcut first so the wide branch starts at
    # lane 0; conv3's BN bias merged into the shortcut bias.
    w1s = jnp.concatenate([pad_cols(ws), w1], axis=1)                 # (Cin, Cp+Cb)
    b1s = jnp.concatenate([jnp.pad(bs + b3, (0, Cp - Cout)), b1])[None, :]

    bf16 = jnp.bfloat16
    return dict(w1s=w1s.astype(bf16),
                w2=w2.astype(bf16),
                w3=pad_cols(w3).astype(bf16),
                b1s=b1s.astype(jnp.float32),
                b2=b2[None, :].astype(jnp.float32),
                cout=Cout)


def reference(x_nchw, pt):
    """Pure-JAX f32 reference mirroring the PyTorch forward."""
    x = jnp.transpose(x_nchw, (0, 2, 3, 1))

    def conv(x, w_t, pad=0):
        k = jnp.transpose(w_t, (2, 3, 1, 0))  # OIHW -> HWIO
        return lax.conv_general_dilated(
            x, k, (1, 1), [(pad, pad), (pad, pad)],
            dimension_numbers=("NHWC", "HWIO", "NHWC"))

    def bn(x, p):
        w, b, m, v = p
        return (x - m) / jnp.sqrt(v + EPS) * w + b

    y = jax.nn.relu(bn(conv(x, pt["w1_t"]), pt["bn1"]))
    y = jax.nn.relu(bn(conv(y, pt["w2_t"], pad=1), pt["bn2"]))
    y = bn(conv(y, pt["w3_t"]), pt["bn3"])
    sc = bn(conv(x, pt["ws_t"]), pt["bns"])
    return jnp.transpose(jax.nn.relu(y + sc), (0, 3, 1, 2))


if __name__ == "__main__":
    # Small, bottleneck-consistent shapes: in=32, bottleneck=16, out=64,
    # stride=1, num_groups=1, dilation=1 (the defaults on the hot path).
    N, Cin, Cb, Cout, H, W = 2, 32, 16, 64, 16, 16

    key = jax.random.PRNGKey(0)
    kx, kp = jax.random.split(key)
    x = jax.random.normal(kx, (N, Cin, H, W), jnp.float32)

    pt_params = make_params(kp, Cin, Cb, Cout)
    kernel_params = fold_for_kernel(pt_params)

    out = jax.block_until_ready(bottleneck_block(x, kernel_params))
    ref = jax.block_until_ready(reference(x, pt_params))

    # bf16 matmul operands / folded scales / bf16 output (f32 MXU accumulation,
    # f32 elementwise) -> loosened tolerance vs the f32 reference.
    np.testing.assert_allclose(np.asarray(out), np.asarray(ref),
                               rtol=5e-2, atol=6e-2)
    print("KERNEL_OK")
</pallas_src>

<mosaic_0001>
module attributes {stable_mosaic.version = 11 : i64} {
  func.func @_bottleneck_kernel(%arg0: i32, %arg1: memref<1x256x32xbf16, #tpu.memory_space<vmem>>, %arg2: memref<32x144xbf16, #tpu.memory_space<vmem>>, %arg3: memref<144x16xbf16, #tpu.memory_space<vmem>>, %arg4: memref<16x128xbf16, #tpu.memory_space<vmem>>, %arg5: memref<1x144xf32, #tpu.memory_space<vmem>>, %arg6: memref<1x16xf32, #tpu.memory_space<vmem>>, %arg7: memref<1x256x128xbf16, #tpu.memory_space<vmem>>, %arg8: memref<362x16xbf16, #tpu.memory_space<vmem>>) attributes {dimension_semantics = [#tpu.dimension_semantics<parallel>], iteration_bounds = array<i64: 2>, scalar_prefetch = 0 : i64, scratch_operands = 1 : i64, tpu.core_type = #tpu.core_type<tc>, window_params = [{transform_indices = @transform_0, window_bounds = array<i64: 1, 256, 32>}, {pipeline_mode = #tpu.pipeline_mode<synchronous>, transform_indices = @transform_1, window_bounds = array<i64: 32, 144>}, {pipeline_mode = #tpu.pipeline_mode<synchronous>, transform_indices = @transform_2, window_bounds = array<i64: 144, 16>}, {pipeline_mode = #tpu.pipeline_mode<synchronous>, transform_indices = @transform_3, window_bounds = array<i64: 16, 128>}, {pipeline_mode = #tpu.pipeline_mode<synchronous>, transform_indices = @transform_4, window_bounds = array<i64: 1, 144>}, {pipeline_mode = #tpu.pipeline_mode<synchronous>, transform_indices = @transform_5, window_bounds = array<i64: 1, 16>}, {transform_indices = @transform_6, window_bounds = array<i64: 1, 256, 128>}]} {
    %c0 = arith.constant 0 : index
    %c0_0 = arith.constant 0 : index
    %c0_1 = arith.constant 0 : index
    %0 = vector.load %arg1[%c0, %c0_0, %c0_1] : memref<1x256x32xbf16, #tpu.memory_space<vmem>>, vector<1x256x32xbf16>
    %1 = vector.shape_cast %0 : vector<1x256x32xbf16> to vector<256x32xbf16>
    %c0_2 = arith.constant 0 : index
    %c0_3 = arith.constant 0 : index
    %2 = vector.load %arg2[%c0_2, %c0_3] : memref<32x144xbf16, #tpu.memory_space<vmem>>, vector<32x144xbf16>
    %cst = arith.constant dense<0.000000e+00> : vector<256x144xf32>
    %3 = tpu.matmul %1, %2, %cst {dimension_numbers = #tpu.dot_dimension_numbers<[1], [0], [0], [1], [0, 0, 1, 1], [], []>} : vector<256x32xbf16>, vector<32x144xbf16>, vector<256x144xf32> -> vector<256x144xf32>
    %c0_4 = arith.constant 0 : index
    %c0_5 = arith.constant 0 : index
    %4 = vector.load %arg5[%c0_4, %c0_5] : memref<1x144xf32, #tpu.memory_space<vmem>>, vector<1x144xf32>
    %5 = vector.broadcast %4 : vector<1x144xf32> to vector<256x144xf32>
    %6 = arith.addf %3, %5 : vector<256x144xf32>
    %7 = vector.extract_strided_slice %6 {offsets = [0, 0], sizes = [256, 128], strides = [1, 1]} : vector<256x144xf32> to vector<256x128xf32>
    %8 = vector.extract_strided_slice %6 {offsets = [0, 128], sizes = [256, 16], strides = [1, 1]} : vector<256x144xf32> to vector<256x16xf32>
    %cst_6 = arith.constant 0.000000e+00 : f32
    %9 = vector.broadcast %cst_6 : f32 to vector<256x16xf32>
    %10 = arith.maximumf %8, %9 : vector<256x16xf32>
    %11 = arith.truncf %10 : vector<256x16xf32> to vector<256x16xbf16>
    %cst_7 = arith.constant 0.000000e+00 : bf16
    %12 = vector.broadcast %cst_7 : bf16 to vector<362x16xbf16>
    %c0_8 = arith.constant 0 : index
    %c0_9 = arith.constant 0 : index
    %13 = vector.load %arg8[%c0_8, %c0_9] : memref<362x16xbf16, #tpu.memory_space<vmem>>, vector<362x16xbf16>
    tpu.vector_store %arg8[%c0_8, %c0_9], %12 {strides = array<i32>} : memref<362x16xbf16, #tpu.memory_space<vmem>>, vector<362x16xbf16>,
    %14 = vector.extract_strided_slice %11 {offsets = [0, 0], sizes = [16, 16], strides = [1, 1]} : vector<256x16xbf16> to vector<16x16xbf16>
    %c38 = arith.constant 38 : index
    %c0_10 = arith.constant 0 : index
    %15 = vector.load %arg8[%c38, %c0_10] : memref<362x16xbf16, #tpu.memory_space<vmem>>, vector<16x16xbf16>
    tpu.vector_store %arg8[%c38, %c0_10], %14 {strides = array<i32>} : memref<362x16xbf16, #tpu.memory_space<vmem>>, vector<16x16xbf16>,
    %16 = vector.extract_strided_slice %11 {offsets = [16, 0], sizes = [16, 16], strides = [1, 1]} : vector<256x16xbf16> to vector<16x16xbf16>
    %c56 = arith.constant 56 : index
    %c0_11 = arith.constant 0 : index
    %17 = vector.load %arg8[%c56, %c0_11] : memref<362x16xbf16, #tpu.memory_space<vmem>>, vector<16x16xbf16>
    tpu.vector_store %arg8[%c56, %c0_11], %16 {strides = array<i32>} : memref<362x16xbf16, #tpu.memory_space<vmem>>, vector<16x16xbf16>,
    %18 = vector.extract_strided_slice %11 {offsets = [32, 0], sizes = [16, 16], strides = [1, 1]} : vector<256x16xbf16> to vector<16x16xbf16>
    %c74 = arith.constant 74 : index
    %c0_12 = arith.constant 0 : index
    %19 = vector.load %arg8[%c74, %c0_12] : memref<362x16xbf16, #tpu.memory_space<vmem>>, vector<16x16xbf16>
    tpu.vector_store %arg8[%c74, %c0_12], %18 {strides = array<i32>} : memref<362x16xbf16, #tpu.memory_space<vmem>>, vector<16x16xbf16>,
    %20 = vector.extract_strided_slice %11 {offsets = [48, 0], sizes = [16, 16], strides = [1, 1]} : vector<256x16xbf16> to vector<16x16xbf16>
    %c92 = arith.constant 92 : index
    %c0_13 = arith.constant 0 : index
    %21 = vector.load %arg8[%c92, %c0_13] : memref<362x16xbf16, #tpu.memory_space<vmem>>, vector<16x16xbf16>
    tpu.vector_store %arg8[%c92, %c0_13], %20 {strides = array<i32>} : memref<362x16xbf16, #tpu.memory_space<vmem>>, vector<16x16xbf16>,
    %22 = vector.extract_strided_slice %11 {offsets = [64, 0], sizes = [16, 16], strides = [1, 1]} : vector<256x16xbf16> to vector<16x16xbf16>
    %c110 = arith.constant 110 : index
    %c0_14 = arith.constant 0 : index
    %23 = vector.load %arg8[%c110, %c0_14] : memref<362x16xbf16, #tpu.memory_space<vmem>>, vector<16x16xbf16>
    tpu.vector_store %arg8[%c110, %c0_14], %22 {strides = array<i32>} : memref<362x16xbf16, #tpu.memory_space<vmem>>, vector<16x16xbf16>,
    %24 = vector.extract_strided_slice %11 {offsets = [80, 0], sizes = [16, 16], strides = [1, 1]} : vector<256x16xbf16> to vector<16x16xbf16>
    %c128 = arith.constant 128 : index
    %c0_15 = arith.constant 0 : index
    %25 = vector.load %arg8[%c128, %c0_15] : memref<362x16xbf16, #tpu.memory_space<vmem>>, vector<16x16xbf16>
    tpu.vector_store %arg8[%c128, %c0_15], %24 {strides = array<i32>} : memref<362x16xbf16, #tpu.memory_space<vmem>>, vector<16x16xbf16>,
    %26 = vector.extract_strided_slice %11 {offsets = [96, 0], sizes = [16, 16], strides = [1, 1]} : vector<256x16xbf16> to vector<16x16xbf16>
    %c146 = arith.constant 146 : index
    %c0_16 = arith.constant 0 : index
    %27 = vector.load %arg8[%c146, %c0_16] : memref<362x16xbf16, #tpu.memory_space<vmem>>, vector<16x16xbf16>
    tpu.vector_store %arg8[%c146, %c0_16], %26 {strides = array<i32>} : memref<362x16xbf16, #tpu.memory_space<vmem>>, vector<16x16xbf16>,
    %28 = vector.extract_strided_slice %11 {offsets = [112, 0], sizes = [16, 16], strides = [1, 1]} : vector<256x16xbf16> to vector<16x16xbf16>
    %c164 = arith.constant 164 : index
    %c0_17 = arith.constant 0 : index
    %29 = vector.load %arg8[%c164, %c0_17] : memref<362x16xbf16, #tpu.memory_space<vmem>>, vector<16x16xbf16>
    tpu.vector_store %arg8[%c164, %c0_17], %28 {strides = array<i32>} : memref<362x16xbf16, #tpu.memory_space<vmem>>, vector<16x16xbf16>,
    %30 = vector.extract_strided_slice %11 {offsets = [128, 0], sizes = [16, 16], strides = [1, 1]} : vector<256x16xbf16> to vector<16x16xbf16>
    %c182 = arith.constant 182 : index
    %c0_18 = arith.constant 0 : index
    %31 = vector.load %arg8[%c182, %c0_18] : memref<362x16xbf16, #tpu.memory_space<vmem>>, vector<16x16xbf16>
    tpu.vector_store %arg8[%c182, %c0_18], %30 {strides = array<i32>} : memref<362x16xbf16, #tpu.memory_space<vmem>>, vector<16x16xbf16>,
    %32 = vector.extract_strided_slice %11 {offsets = [144, 0], sizes = [16, 16], strides = [1, 1]} : vector<256x16xbf16> to vector<16x16xbf16>
    %c200 = arith.constant 200 : index
    %c0_19 = arith.constant 0 : index
    %33 = vector.load %arg8[%c200, %c0_19] : memref<362x16xbf16, #tpu.memory_space<vmem>>, vector<16x16xbf16>
    tpu.vector_store %arg8[%c200, %c0_19], %32 {strides = array<i32>} : memref<362x16xbf16, #tpu.memory_space<vmem>>, vector<16x16xbf16>,
    %34 = vector.extract_strided_slice %11 {offsets = [160, 0], sizes = [16, 16], strides = [1, 1]} : vector<256x16xbf16> to vector<16x16xbf16>
    %c218 = arith.constant 218 : index
    %c0_20 = arith.constant 0 : index
    %35 = vector.load %arg8[%c218, %c0_20] : memref<362x16xbf16, #tpu.memory_space<vmem>>, vector<16x16xbf16>
    tpu.vector_store %arg8[%c218, %c0_20], %34 {strides = array<i32>} : memref<362x16xbf16, #tpu.memory_space<vmem>>, vector<16x16xbf16>,
    %36 = vector.extract_strided_slice %11 {offsets = [176, 0], sizes = [16, 16], strides = [1, 1]} : vector<256x16xbf16> to vector<16x16xbf16>
    %c236 = arith.constant 236 : index
    %c0_21 = arith.constant 0 : index
    %37 = vector.load %arg8[%c236, %c0_21] : memref<362x16xbf16, #tpu.memory_space<vmem>>, vector<16x16xbf16>
    tpu.vector_store %arg8[%c236, %c0_21], %36 {strides = array<i32>} : memref<362x16xbf16, #tpu.memory_space<vmem>>, vector<16x16xbf16>,
    %38 = vector.extract_strided_slice %11 {offsets = [192, 0], sizes = [16, 16], strides = [1, 1]} : vector<256x16xbf16> to vector<16x16xbf16>
    %c254 = arith.constant 254 : index
    %c0_22 = arith.constant 0 : index
    %39 = vector.load %arg8[%c254, %c0_22] : memref<362x16xbf16, #tpu.memory_space<vmem>>, vector<16x16xbf16>
    tpu.vector_store %arg8[%c254, %c0_22], %38 {strides = array<i32>} : memref<362x16xbf16, #tpu.memory_space<vmem>>, vector<16x16xbf16>,
    %40 = vector.extract_strided_slice %11 {offsets = [208, 0], sizes = [16, 16], strides = [1, 1]} : vector<256x16xbf16> to vector<16x16xbf16>
    %c272 = arith.constant 272 : index
    %c0_23 = arith.constant 0 : index
    %41 = vector.load %arg8[%c272, %c0_23] : memref<362x16xbf16, #tpu.memory_space<vmem>>, vector<16x16xbf16>
    tpu.vector_store %arg8[%c272, %c0_23], %40 {strides = array<i32>} : memref<362x16xbf16, #tpu.memory_space<vmem>>, vector<16x16xbf16>,
    %42 = vector.extract_strided_slice %11 {offsets = [224, 0], sizes = [16, 16], strides = [1, 1]} : vector<256x16xbf16> to vector<16x16xbf16>
    %c290 = arith.constant 290 : index
    %c0_24 = arith.constant 0 : index
    %43 = vector.load %arg8[%c290, %c0_24] : memref<362x16xbf16, #tpu.memory_space<vmem>>, vector<16x16xbf16>
    tpu.vector_store %arg8[%c290, %c0_24], %42 {strides = array<i32>} : memref<362x16xbf16, #tpu.memory_space<vmem>>, vector<16x16xbf16>,
    %44 = vector.extract_strided_slice %11 {offsets = [240, 0], sizes = [16, 16], strides = [1, 1]} : vector<256x16xbf16> to vector<16x16xbf16>
    %c308 = arith.constant 308 : index
    %c0_25 = arith.constant 0 : index
    %45 = vector.load %arg8[%c308, %c0_25] : memref<362x16xbf16, #tpu.memory_space<vmem>>, vector<16x16xbf16>
    tpu.vector_store %arg8[%c308, %c0_25], %44 {strides = array<i32>} : memref<362x16xbf16, #tpu.memory_space<vmem>>, vector<16x16xbf16>,
    %c0_26 = arith.constant 0 : index
    %c0_27 = arith.constant 0 : index
    %46 = vector.load %arg8[%c0_26, %c0_27] : memref<362x16xbf16, #tpu.memory_space<vmem>>, vector<324x16xbf16>
    %c1 = arith.constant 1 : index
    %c0_28 = arith.constant 0 : index
    %47 = vector.load %arg8[%c1, %c0_28] : memref<362x16xbf16, #tpu.memory_space<vmem>>, vector<324x16xbf16>
    %c2 = arith.constant 2 : index
    %c0_29 = arith.constant 0 : index
    %48 = vector.load %arg8[%c2, %c0_29] : memref<362x16xbf16, #tpu.memory_space<vmem>>, vector<324x16xbf16>
    %c18 = arith.constant 18 : index
    %c0_30 = arith.constant 0 : index
    %49 = vector.load %arg8[%c18, %c0_30] : memref<362x16xbf16, #tpu.memory_space<vmem>>, vector<324x16xbf16>
    %c19 = arith.constant 19 : index
    %c0_31 = arith.constant 0 : index
    %50 = vector.load %arg8[%c19, %c0_31] : memref<362x16xbf16, #tpu.memory_space<vmem>>, vector<324x16xbf16>
    %c20 = arith.constant 20 : index
    %c0_32 = arith.constant 0 : index
    %51 = vector.load %arg8[%c20, %c0_32] : memref<362x16xbf16, #tpu.memory_space<vmem>>, vector<324x16xbf16>
    %c36 = arith.constant 36 : index
    %c0_33 = arith.constant 0 : index
    %52 = vector.load %arg8[%c36, %c0_33] : memref<362x16xbf16, #tpu.memory_space<vmem>>, vector<324x16xbf16>
    %c37 = arith.constant 37 : index
    %c0_34 = arith.constant 0 : index
    %53 = vector.load %arg8[%c37, %c0_34] : memref<362x16xbf16, #tpu.memory_space<vmem>>, vector<324x16xbf16>
    %c38_35 = arith.constant 38 : index
    %c0_36 = arith.constant 0 : index
    %54 = vector.load %arg8[%c38_35, %c0_36] : memref<362x16xbf16, #tpu.memory_space<vmem>>, vector<324x16xbf16>
    %55 = tpu.concatenate %46, %47, %48, %49, %50, %51, %52, %53, %54 in 1 : vector<324x16xbf16>, vector<324x16xbf16>, vector<324x16xbf16>, vector<324x16xbf16>, vector<324x16xbf16>, vector<324x16xbf16>, vector<324x16xbf16>, vector<324x16xbf16>, vector<324x16xbf16> -> vector<324x144xbf16>
    %c0_37 = arith.constant 0 : index
    %c0_38 = arith.constant 0 : index
    %56 = vector.load %arg3[%c0_37, %c0_38] : memref<144x16xbf16, #tpu.memory_space<vmem>>, vector<144x16xbf16>
    %cst_39 = arith.constant dense<0.000000e+00> : vector<324x16xf32>
    %57 = tpu.matmul %55, %56, %cst_39 {dimension_numbers = #tpu.dot_dimension_numbers<[1], [0], [0], [1], [0, 0, 1, 1], [], []>} : vector<324x144xbf16>, vector<144x16xbf16>, vector<324x16xf32> -> vector<324x16xf32>
    %58 = vector.extract_strided_slice %57 {offsets = [18, 0], sizes = [288, 16], strides = [1, 1]} : vector<324x16xf32> to vector<288x16xf32>
    %59 = vector.shape_cast %58 : vector<288x16xf32> to vector<16x18x16xf32>
    %60 = vector.extract_strided_slice %59 {offsets = [0, 1, 0], sizes = [16, 16, 16], strides = [1, 1, 1]} : vector<16x18x16xf32> to vector<16x16x16xf32>
    %61 = vector.shape_cast %60 : vector<16x16x16xf32> to vector<256x16xf32>
    %c0_40 = arith.constant 0 : index
    %c0_41 = arith.constant 0 : index
    %62 = vector.load %arg6[%c0_40, %c0_41] : memref<1x16xf32, #tpu.memory_space<vmem>>, vector<1x16xf32>
    %63 = vector.broadcast %62 : vector<1x16xf32> to vector<256x16xf32>
    %64 = arith.addf %61, %63 : vector<256x16xf32>
    %cst_42 = arith.constant 0.000000e+00 : f32
    %65 = vector.broadcast %cst_42 : f32 to vector<256x16xf32>
    %66 = arith.maximumf %64, %65 : vector<256x16xf32>
    %67 = arith.truncf %66 : vector<256x16xf32> to vector<256x16xbf16>
    %c0_43 = arith.constant 0 : index
    %c0_44 = arith.constant 0 : index
    %68 = vector.load %arg4[%c0_43, %c0_44] : memref<16x128xbf16, #tpu.memory_space<vmem>>, vector<16x128xbf16>
    %cst_45 = arith.constant dense<0.000000e+00> : vector<256x128xf32>
    %69 = tpu.matmul %67, %68, %cst_45 {dimension_numbers = #tpu.dot_dimension_numbers<[1], [0], [0], [1], [0, 0, 1, 1], [], []>} : vector<256x16xbf16>, vector<16x128xbf16>, vector<256x128xf32> -> vector<256x128xf32>
    %70 = arith.addf %69, %7 : vector<256x128xf32>
    %cst_46 = arith.constant 0.000000e+00 : f32
    %71 = vector.broadcast %cst_46 : f32 to vector<256x128xf32>
    %72 = arith.maximumf %70, %71 : vector<256x128xf32>
    %73 = arith.truncf %72 : vector<256x128xf32> to vector<256x128xbf16>
    %c0_47 = arith.constant 0 : index
    %c0_48 = arith.constant 0 : index
    %c0_49 = arith.constant 0 : index
    %74 = vector.load %arg7[%c0_47, %c0_48, %c0_49] : memref<1x256x128xbf16, #tpu.memory_space<vmem>>, vector<1x256x128xbf16>
    %75 = vector.shape_cast %74 : vector<1x256x128xbf16> to vector<256x128xbf16>
    %76 = vector.shape_cast %73 : vector<256x128xbf16> to vector<1x256x128xbf16>
    tpu.vector_store %arg7[%c0_47, %c0_48, %c0_49], %76 {strides = array<i32>} : memref<1x256x128xbf16, #tpu.memory_space<vmem>>, vector<1x256x128xbf16>,
    return
  }
  func.func @transform_0(%arg0: i32) -> (i32, i32, i32) {
    %c0_i32 = arith.constant 0 : i32
    %c0_i32_0 = arith.constant 0 : i32
    %c0_i32_1 = arith.constant 0 : i32
    return %arg0, %c0_i32, %c0_i32_0 : i32, i32, i32
  }
  func.func @transform_1(%arg0: i32) -> (i32, i32) {
    %c0_i32 = arith.constant 0 : i32
    %c0_i32_0 = arith.constant 0 : i32
    %c0_i32_1 = arith.constant 0 : i32
    return %c0_i32, %c0_i32_0 : i32, i32
  }
  func.func @transform_2(%arg0: i32) -> (i32, i32) {
    %c0_i32 = arith.constant 0 : i32
    %c0_i32_0 = arith.constant 0 : i32
    %c0_i32_1 = arith.constant 0 : i32
    return %c0_i32, %c0_i32_0 : i32, i32
  }
  func.func @transform_3(%arg0: i32) -> (i32, i32) {
    %c0_i32 = arith.constant 0 : i32
    %c0_i32_0 = arith.constant 0 : i32
    %c0_i32_1 = arith.constant 0 : i32
    return %c0_i32, %c0_i32_0 : i32, i32
  }
  func.func @transform_4(%arg0: i32) -> (i32, i32) {
    %c0_i32 = arith.constant 0 : i32
    %c0_i32_0 = arith.constant 0 : i32
    %c0_i32_1 = arith.constant 0 : i32
    return %c0_i32, %c0_i32_0 : i32, i32
  }
  func.func @transform_5(%arg0: i32) -> (i32, i32) {
    %c0_i32 = arith.constant 0 : i32
    %c0_i32_0 = arith.constant 0 : i32
    %c0_i32_1 = arith.constant 0 : i32
    return %c0_i32, %c0_i32_0 : i32, i32
  }
  func.func @transform_6(%arg0: i32) -> (i32, i32, i32) {
    %c0_i32 = arith.constant 0 : i32
    %c0_i32_0 = arith.constant 0 : i32
    %c0_i32_1 = arith.constant 0 : i32
    return %arg0, %c0_i32, %c0_i32_0 : i32, i32, i32
  }
}

</mosaic_0001>

<llo_original>
// kernel: tpu_custom_call.1
$region0: #{tpu_custom_call.1}
  #allocation0 [shape = 'u32[]', space=smem, size = 0x4, offset = 0x4, fixed_abs, tag = 'smem constant byte address 0x4 - core index']
  #allocation1 [shape = 'u32[144,128]{1,0:T(1,128)}', space=vmem, size = 0x12000, scoped, tag = 'internal scratch']
  #allocation2 [shape = 'bf16[362,16]{1,0:T(8,128)(2,1)}', space=vmem, size = 0x17000, scoped, tag = 'scratch operand']
  %s0 = inlined_call_operand.vmem [shape: bf16[2,256,32], index: 0, kind: input, shape index: {}]
  %s1 = inlined_call_operand.vmem [shape: bf16[32,144], index: 1, kind: input, shape index: {}]
  %s2 = inlined_call_operand.vmem [shape: bf16[144,16], index: 2, kind: input, shape index: {}]
  %s3 = inlined_call_operand.vmem [shape: bf16[16,128], index: 3, kind: input, shape index: {}]
  %s4 = inlined_call_operand.vmem [shape: f32[1,144], index: 4, kind: input, shape index: {}]
  %s5 = inlined_call_operand.vmem [shape: f32[1,16], index: 5, kind: input, shape index: {}]
  %s6 = inlined_call_operand.hbm [shape: bf16[2,256,128], index: 6, kind: output, shape index: {}]
  %s7 = sld [smem:[#allocation0]]
  $region57: #{tpu_custom_call.1} parent=0
    _
  %s9 = ssub.s32 1, %s7
  %s10 = scalar_select 0, %s9, %s7
  $region1: #{tpu_custom_call.1} parent=0
    #allocation3 [shape = 'u8[131072]{0}', space=vmem, size = 0x20000, scoped, tag = 'output window, operand 0']
    #allocation4 [shape = 's32[2]{0}', space=sflag, size = 0x8, scoped, tag = 'scoped memory for tpu_custom_call.1']
    %11 = vsyncpa [#allocation4], 0
    %s12 = scalar_lea.sflag [#allocation4], 1
    %13 = vsyncpa %s12, 0
    loop: start=0, step=1, limit=4
    $region2: #{tpu_custom_call.1} parent=1 // loop_pre_header
      _
    $region3: #{tpu_custom_call.1} parent=1 // loop_header
      %s15 = sphi 0, %s19
      %p16 = scmp.ge.s32.totalorder %s15, 4
      %s25 = sphi 0, %s27
      %s28 = sphi 0, %s25
      %s29 = sphi 0, %s28
      %s45 = sphi 0, %s29
      %s49 = sphi 0, %s49
      %s51 = sphi 0, %s49
      %s52 = sphi 0, %s51
      %s66 = sphi 0, %s52
      %s70 = sphi 0, %s70
      %s72 = sphi 0, %s70
      %s73 = sphi 0, %s72
      %s87 = sphi 0, %s73
      %s91 = sphi 0, %s91
      %s93 = sphi 0, %s91
      %s94 = sphi 0, %s93
      %s108 = sphi 0, %s94
      %s112 = sphi 0, %s112
      %s114 = sphi 0, %s112
      %s115 = sphi 0, %s114
      %s129 = sphi 0, %s115
      %s133 = sphi 0, %s133
      %s135 = sphi 0, %s133
      %s136 = sphi 0, %s135
      %s150 = sphi 0, %s136
      %s156 = sphi 0, %s158
      %s159 = sphi 0, %s156
      %s160 = sphi 0, %s159
      %s176 = sphi 0, %s160
    $region4: #{tpu_custom_call.1} parent=1 // loop_header_branch
      %18 = sbr.rel (%p16) target = $region8
    $region5: #{tpu_custom_call.1} parent=1 // loop_body
      %s20 = ssub.s32 %s15, 1
      %s21 = ssub.s32 %s15, 2
      %s22 = sadd.s32 %s15, 1
      %s23 = ssub.s32 %s15, %s22
      %p24 = scmp.eq.s32.totalorder %s23, 0
      %s26 = sadd.s32 %s25, 1
      %s27 = scalar_select %p24, %s25, %s26
      %p30 = pneg %p24
      %p31 = scmp.eq.s32.totalorder %s15, 1
      %p32 = por %p30, %p31
      %p33 = scmp.ne.s32.totalorder %s25, %s28
      %p34 = scmp.eq.s32.totalorder %s15, 0
      %p35 = por %p33, %p34
      %p36 = scmp.ne.s32.totalorder %s25, %s28
      %p37 = scmp.eq.s32.totalorder %s20, 1
      %p38 = por %p36, %p37
      %p39 = scmp.ne.s32.totalorder %s28, %s29
      %p40 = scmp.eq.s32.totalorder %s20, 0
      %p41 = por %p39, %p40
      %p42 = scmp.ne.s32.totalorder %s28, %s29
      %p43 = scmp.eq.s32.totalorder %s21, 1
      %p44 = por %p42, %p43
      %p46 = scmp.ne.s32.totalorder %s29, %s45
      %p47 = scmp.eq.s32.totalorder %s21, 0
      %p48 = por %p46, %p47
      %s50 = sadd.s32 %s49, 1
      %p53 = scmp.eq.s32.totalorder %s15, 1
      %p54 = scmp.ne.s32.totalorder %s49, %s51
      %p55 = scmp.eq.s32.totalorder %s15, 0
      %p56 = por %p54, %p55
      %p57 = scmp.ne.s32.totalorder %s49, %s51
      %p58 = scmp.eq.s32.totalorder %s20, 1
      %p59 = por %p57, %p58
      %p60 = scmp.ne.s32.totalorder %s51, %s52
      %p61 = scmp.eq.s32.totalorder %s20, 0
      %p62 = por %p60, %p61
      %p63 = scmp.ne.s32.totalorder %s51, %s52
      %p64 = scmp.eq.s32.totalorder %s21, 1
      %p65 = por %p63, %p64
      %p67 = scmp.ne.s32.totalorder %s52, %s66
      %p68 = scmp.eq.s32.totalorder %s21, 0
      %p69 = por %p67, %p68
      %s71 = sadd.s32 %s70, 1
      %p74 = scmp.eq.s32.totalorder %s15, 1
      %p75 = scmp.ne.s32.totalorder %s70, %s72
      %p76 = scmp.eq.s32.totalorder %s15, 0
      %p77 = por %p75, %p76
      %p78 = scmp.ne.s32.totalorder %s70, %s72
      %p79 = scmp.eq.s32.totalorder %s20, 1
      %p80 = por %p78, %p79
      %p81 = scmp.ne.s32.totalorder %s72, %s73
      %p82 = scmp.eq.s32.totalorder %s20, 0
      %p83 = por %p81, %p82
      %p84 = scmp.ne.s32.totalorder %s72, %s73
      %p85 = scmp.eq.s32.totalorder %s21, 1
      %p86 = por %p84, %p85
      %p88 = scmp.ne.s32.totalorder %s73, %s87
      %p89 = scmp.eq.s32.totalorder %s21, 0
      %p90 = por %p88, %p89
      %s92 = sadd.s32 %s91, 1
      %p95 = scmp.eq.s32.totalorder %s15, 1
      %p96 = scmp.ne.s32.totalorder %s91, %s93
      %p97 = scmp.eq.s32.totalorder %s15, 0
      %p98 = por %p96, %p97
      %p99 = scmp.ne.s32.totalorder %s91, %s93
      %p100 = scmp.eq.s32.totalorder %s20, 1
      %p101 = por %p99, %p100
      %p102 = scmp.ne.s32.totalorder %s93, %s94
      %p103 = scmp.eq.s32.totalorder %s20, 0
      %p104 = por %p102, %p103
      %p105 = scmp.ne.s32.totalorder %s93, %s94
      %p106 = scmp.eq.s32.totalorder %s21, 1
      %p107 = por %p105, %p106
      %p109 = scmp.ne.s32.totalorder %s94, %s108
      %p110 = scmp.eq.s32.totalorder %s21, 0
      %p111 = por %p109, %p110
      %s113 = sadd.s32 %s112, 1
      %p116 = scmp.eq.s32.totalorder %s15, 1
      %p117 = scmp.ne.s32.totalorder %s112, %s114
      %p118 = scmp.eq.s32.totalorder %s15, 0
      %p119 = por %p117, %p118
      %p120 = scmp.ne.s32.totalorder %s112, %s114
      %p121 = scmp.eq.s32.totalorder %s20, 1
      %p122 = por %p120, %p121
      %p123 = scmp.ne.s32.totalorder %s114, %s115
      %p124 = scmp.eq.s32.totalorder %s20, 0
      %p125 = por %p123, %p124
      %p126 = scmp.ne.s32.totalorder %s114, %s115
      %p127 = scmp.eq.s32.totalorder %s21, 1
      %p128 = por %p126, %p127
      %p130 = scmp.ne.s32.totalorder %s115, %s129
      %p131 = scmp.eq.s32.totalorder %s21, 0
      %p132 = por %p130, %p131
      %s134 = sadd.s32 %s133, 1
      %p137 = scmp.eq.s32.totalorder %s15, 1
      %p138 = scmp.ne.s32.totalorder %s133, %s135
      %p139 = scmp.eq.s32.totalorder %s15, 0
      %p140 = por %p138, %p139
      %p141 = scmp.ne.s32.totalorder %s133, %s135
      %p142 = scmp.eq.s32.totalorder %s20, 1
      %p143 = por %p141, %p142
      %p144 = scmp.ne.s32.totalorder %s135, %s136
      %p145 = scmp.eq.s32.totalorder %s20, 0
      %p146 = por %p144, %p145
      %p147 = scmp.ne.s32.totalorder %s135, %s136
      %p148 = scmp.eq.s32.totalorder %s21, 1
      %p149 = por %p147, %p148
      %p151 = scmp.ne.s32.totalorder %s136, %s150
      %p152 = scmp.eq.s32.totalorder %s21, 0
      %p153 = por %p151, %p152
      %s154 = ssub.s32 %s15, %s22
      %p155 = scmp.eq.s32.totalorder %s154, 0
      %s157 = sadd.s32 %s156, 1
      %s158 = scalar_select %p155, %s156, %s157
      %p161 = pneg %p155
      %p162 = scmp.eq.s32.totalorder %s15, 1
      %p163 = por %p161, %p162
      %p164 = scmp.ne.s32.totalorder %s156, %s159
      %p165 = scmp.eq.s32.totalorder %s15, 0
      %p166 = por %p164, %p165
      %p167 = scmp.ne.s32.totalorder %s156, %s159
      %p168 = scmp.eq.s32.totalorder %s20, 1
      %p169 = por %p167, %p168
      %p170 = scmp.ne.s32.totalorder %s159, %s160
      %p171 = scmp.eq.s32.totalorder %s20, 0
      %p172 = por %p170, %p171
      %p173 = scmp.ne.s32.totalorder %s159, %s160
      %p174 = scmp.eq.s32.totalorder %s21, 1
      %p175 = por %p173, %p174
      %p177 = scmp.ne.s32.totalorder %s160, %s176
      %p178 = scmp.eq.s32.totalorder %s21, 0
      %p179 = por %p177, %p178
      %p180 = scmp.le.s32.totalorder 1, %s15
      %p181 = scmp.lt.s32.totalorder %s15, 3
      %p182 = pnand %p180, %p181
      %p183 = pneg %p182
      // Predicated region
      $region9: #{tpu_custom_call.1} parent=5 // pred_check
        _
      $region10: #{tpu_custom_call.1} parent=5 // pred_check_branch
        %185 = sbr.rel (%p182) target = $region12
      $region11: #{tpu_custom_call.1} parent=5 // pred_region
        %s186 = ssub.s32 %s15, 1
        // Predicated region
        $region13: #{tpu_custom_call.1} parent=11 // pred_check
          %p187 = pneg %p62
        $region14: #{tpu_custom_call.1} parent=11 // pred_check_branch
          %189 = sbr.rel (%p187) target = $region16
        $region15: #{tpu_custom_call.1} parent=11 // pred_region
          _
        $region16: #{tpu_custom_call.1} parent=11 // pred_fallthru
          _
        // Predicated region
        $region17: #{tpu_custom_call.1} parent=11 // pred_check
          %p190 = pneg %p83
        $region18: #{tpu_custom_call.1} parent=11 // pred_check_branch
          %192 = sbr.rel (%p190) target = $region20
        $region19: #{tpu_custom_call.1} parent=11 // pred_region
          _
        $region20: #{tpu_custom_call.1} parent=11 // pred_fallthru
          _
        // Predicated region
        $region21: #{tpu_custom_call.1} parent=11 // pred_check
          %p193 = pneg %p104
        $region22: #{tpu_custom_call.1} parent=11 // pred_check_branch
          %195 = sbr.rel (%p193) target = $region24
        $region23: #{tpu_custom_call.1} parent=11 // pred_region
          _
        $region24: #{tpu_custom_call.1} parent=11 // pred_fallthru
          _
        // Predicated region
        $region25: #{tpu_custom_call.1} parent=11 // pred_check
          %p196 = pneg %p125
        $region26: #{tpu_custom_call.1} parent=11 // pred_check_branch
          %198 = sbr.rel (%p196) target = $region28
        $region27: #{tpu_custom_call.1} parent=11 // pred_region
          _
        $region28: #{tpu_custom_call.1} parent=11 // pred_fallthru
          _
        // Predicated region
        $region29: #{tpu_custom_call.1} parent=11 // pred_check
          %p199 = pneg %p146
        $region30: #{tpu_custom_call.1} parent=11 // pred_check_branch
          %201 = sbr.rel (%p199) target = $region32
        $region31: #{tpu_custom_call.1} parent=11 // pred_region
          _
        $region32: #{tpu_custom_call.1} parent=11 // pred_fallthru
          _
      $region12: #{tpu_custom_call.1} parent=5 // pred_fallthru
        _
      %p202 = scmp.lt.s32.totalorder %s15, 2
      // Predicated region
      $region33: #{tpu_custom_call.1} parent=5 // pred_check
        %p203 = pneg %p202
      $region34: #{tpu_custom_call.1} parent=5 // pred_check_branch
        %205 = sbr.rel (%p203) target = $region36
      $region35: #{tpu_custom_call.1} parent=5 // pred_region
        // Predicated region
        $region37: #{tpu_custom_call.1} parent=35 // pred_check
          %p206 = pneg %p35
        $region38: #{tpu_custom_call.1} parent=35 // pred_check_branch
          %208 = sbr.rel (%p206) target = $region40
        $region39: #{tpu_custom_call.1} parent=35 // pred_region
          %p209 = scmp.lt.s32.totalorder %s15, 1
          %s210 = scalar_select %p209, %s15, 1
          %s211 = smul.addr %s210, 32
          %s212 = smul.addr %s211, 4
          %s213 = scalar_lea.vmem %s0, %s212
        $region40: #{tpu_custom_call.1} parent=35 // pred_fallthru
          _
      $region36: #{tpu_custom_call.1} parent=5 // pred_fallthru
        _
      %p214 = scmp.le.s32.totalorder 1, %s15
      %p215 = scmp.lt.s32.totalorder %s15, 3
      %p216 = pnand %p214, %p215
      %p217 = pneg %p216
      // Predicated region
      $region41: #{tpu_custom_call.1} parent=5 // pred_check
        _
      $region42: #{tpu_custom_call.1} parent=5 // pred_check_branch
        %219 = sbr.rel (%p216) target = $region44
      $region43: #{tpu_custom_call.1} parent=5 // pred_region
        %s220 = ssub.s32 %s15, 1
        %p221 = scmp.lt.s32.totalorder %s20, 1
        %s222 = scalar_select %p221, %s20, 1
        %s223 = smul.addr %s222, 32
        %s224 = smul.addr %s223, 4
        %s225 = scalar_lea.vmem %s0, %s224
        %p226 = pneg %p41
        %p227 = pneg %p38
        %p228 = pneg %p62
        %p229 = pneg %p59
        %p230 = pneg %p83
        %p231 = pneg %p80
        %p232 = pneg %p104
        %p233 = pneg %p101
        %p234 = pneg %p125
        %p235 = pneg %p122
        %p236 = pneg %p146
        %p237 = pneg %p143
        %p238 = pneg %p172
        %p239 = pneg %p169
        %s240 = sand.u32 %s159, 1
        %s241 = scalar_lea.sflag [#allocation4], %s240
        %s242 = sand.u32 %s159, 1
        %s243 = smul.addr %s242, 128
        %s244 = scalar_lea.vmem [#allocation3], %s243
        %p245 = scmp.lt.s32.totalorder %s20, 1
        %s246 = scalar_select %p245, %s20, 1
        %s247 = smul.addr %s246, 32
        %s248 = smul.addr %s247, 4
        %s249 = scalar_lea.vmem %s0, %s248
        %v251 = vld [vmem:[%s249] sm:$0xf]
        %v252 = vld [vmem:[%s249 + $0x4] sm:$0xf]
        %v253 = vld [vmem:[%s249 + $0x8] sm:$0xf]
        %v254 = vld [vmem:[%s249 + $0xc] sm:$0xf]
        %v255 = vld [vmem:[%s249 + $0x10] sm:$0xf]
        %v256 = vld [vmem:[%s249 + $0x14] sm:$0xf]
        %v257 = vld [vmem:[%s249 + $0x18] sm:$0xf]
        %v258 = vld [vmem:[%s249 + $0x1c] sm:$0xf]
        %v259 = vld [vmem:[%s249 + $0x20] sm:$0xf]
        %v260 = vld [vmem:[%s249 + $0x24] sm:$0xf]
        %v261 = vld [vmem:[%s249 + $0x28] sm:$0xf]
        %v262 = vld [vmem:[%s249 + $0x2c] sm:$0xf]
        %v263 = vld [vmem:[%s249 + $0x30] sm:$0xf]
        %v264 = vld [vmem:[%s249 + $0x34] sm:$0xf]
        %v265 = vld [vmem:[%s249 + $0x38] sm:$0xf]
        %v266 = vld [vmem:[%s249 + $0x3c] sm:$0xf]
        %v267 = vld [vmem:[%s249 + $0x40] sm:$0xf]
        %v268 = vld [vmem:[%s249 + $0x44] sm:$0xf]
        %v269 = vld [vmem:[%s249 + $0x48] sm:$0xf]
        %v270 = vld [vmem:[%s249 + $0x4c] sm:$0xf]
        %v271 = vld [vmem:[%s249 + $0x50] sm:$0xf]
        %v272 = vld [vmem:[%s249 + $0x54] sm:$0xf]
        %v273 = vld [vmem:[%s249 + $0x58] sm:$0xf]
        %v274 = vld [vmem:[%s249 + $0x5c] sm:$0xf]
        %v275 = vld [vmem:[%s249 + $0x60] sm:$0xf]
        %v276 = vld [vmem:[%s249 + $0x64] sm:$0xf]
        %v277 = vld [vmem:[%s249 + $0x68] sm:$0xf]
        %v278 = vld [vmem:[%s249 + $0x6c] sm:$0xf]
        %v279 = vld [vmem:[%s249 + $0x70] sm:$0xf]
        %v280 = vld [vmem:[%s249 + $0x74] sm:$0xf]
        %v281 = vld [vmem:[%s249 + $0x78] sm:$0xf]
        %v282 = vld [vmem:[%s249 + $0x7c] sm:$0xf]
        %v283 = vld [vmem:[%s1] sm:$0xff]
        %v284 = vld [vmem:[%s1 + $0x8] sm:$0xff]
        %v285 = vld [vmem:[%s1 + $0x10] sm:$0xff]
        %v286 = vld [vmem:[%s1 + $0x18] sm:$0xff]
        %v287 = vld [vmem:[%s4] sm:$0x3]
        %v289 = vlaneseq
        %v290 = vshrl.u32 %v289, 7
        %v291 = vsub.s32 0, %v290
        %v292 = vrot.slane %v287, %v291
        %v293 = vlaneseq
        %v294 = vshrl.u32 %v293, 7
        %v295 = vsub.s32 1, %v294
        %v296 = vrot.slane %v287, %v295
        %v331 = vunpack.c.l.b16 %v251
        %v332 = vunpack.c.l.b16 %v252
        %v333 = vunpack.c.l.b16 %v253
        %v334 = vunpack.c.l.b16 %v254
        %v335 = vunpack.c.l.b16 %v255
        %v336 = vunpack.c.l.b16 %v256
        %v337 = vunpack.c.l.b16 %v257
        %v338 = vunpack.c.l.b16 %v258
        %v339 = vunpack.c.l.b16 %v259
        %v340 = vunpack.c.l.b16 %v260
        %v341 = vunpack.c.l.b16 %v261
        %v342 = vunpack.c.l.b16 %v262
        %v343 = vunpack.c.l.b16 %v263
        %v344 = vunpack.c.l.b16 %v264
        %v345 = vunpack.c.l.b16 %v265
        %v346 = vunpack.c.l.b16 %v266
        %v347 = vunpack.c.l.b16 %v267
        %v348 = vunpack.c.l.b16 %v268
        %v349 = vunpack.c.l.b16 %v269
        %v350 = vunpack.c.l.b16 %v270
        %v351 = vunpack.c.l.b16 %v271
        %v352 = vunpack.c.l.b16 %v272
        %v353 = vunpack.c.l.b16 %v273
        %v354 = vunpack.c.l.b16 %v274
        %v355 = vunpack.c.l.b16 %v275
        %v356 = vunpack.c.l.b16 %v276
        %v357 = vunpack.c.l.b16 %v277
        %v358 = vunpack.c.l.b16 %v278
        %v359 = vunpack.c.l.b16 %v279
        %v360 = vunpack.c.l.b16 %v280
        %v361 = vunpack.c.l.b16 %v281
        %v362 = vunpack.c.l.b16 %v282
        %v363 = vpack.c.b16 %v332, %v331
        %v364 = vpack.c.b16 %v334, %v333
        %v365 = vpack.c.b16 %v336, %v335
        %v366 = vpack.c.b16 %v338, %v337
        %v367 = vpack.c.b16 %v340, %v339
        %v368 = vpack.c.b16 %v342, %v341
        %v369 = vpack.c.b16 %v344, %v343
        %v370 = vpack.c.b16 %v346, %v345
        %v371 = vpack.c.b16 %v348, %v347
        %v372 = vpack.c.b16 %v350, %v349
        %v373 = vpack.c.b16 %v352, %v351
        %v374 = vpack.c.b16 %v354, %v353
        %v375 = vpack.c.b16 %v356, %v355
        %v376 = vpack.c.b16 %v358, %v357
        %v377 = vpack.c.b16 %v360, %v359
        %v378 = vpack.c.b16 %v362, %v361
        %v383 = vunpack.c.l.b16 %v283
        %v384 = vunpack.c.h.b16 %v283
        %v385 = vunpack.c.l.b16 %v284
        %v386 = vunpack.c.h.b16 %v284
        %v387 = vunpack.c.l.b16 %v285
        %v388 = vunpack.c.h.b16 %v285
        %v389 = vunpack.c.l.b16 %v286
        %v390 = vunpack.c.h.b16 %v286
        %v391 = vpack.c.b16 %v385, %v383
        %v392 = vpack.c.b16 %v386, %v384
        %v393 = vpack.c.b16 %v389, %v387
        %v394 = vpack.c.b16 %v390, %v388
        %vm399 = vcmask 261120
        %v401 = vsel %vm399, %v363, 0
        %v404 = vsel %vm399, %v364, 0
        %v407 = vsel %vm399, %v365, 0
        %v410 = vsel %vm399, %v366, 0
        %v413 = vsel %vm399, %v367, 0
        %v416 = vsel %vm399, %v368, 0
        %v419 = vsel %vm399, %v369, 0
        %v422 = vsel %vm399, %v370, 0
        %v425 = vsel %vm399, %v371, 0
        %v428 = vsel %vm399, %v372, 0
        %v431 = vsel %vm399, %v373, 0
        %v434 = vsel %vm399, %v374, 0
        %v437 = vsel %vm399, %v375, 0
        %v440 = vsel %vm399, %v376, 0
        %v443 = vsel %vm399, %v377, 0
        %v446 = vsel %vm399, %v378, 0
        %448 = vmatprep.subr.bf16.mxu0 0
        %449 = vmatpush1.bf16.msra.mxu0 0
        %450 = vmatprep.subr.bf16.mxu0 0
        %451 = vmatpush1.bf16.msra.mxu0 0
        %452 = vmatprep.subr.bf16.mxu0 0
        %453 = vmatpush1.bf16.msra.mxu0 0
        %454 = vmatprep.subr.bf16.mxu0 0
        %455 = vmatpush1.bf16.msra.mxu0 0
        %456 = vmatprep.subr.bf16.mxu0 0
        %457 = vmatpush1.bf16.msra.mxu0 0
        %458 = vmatprep.subr.bf16.mxu0 0
        %459 = vmatpush1.bf16.msra.mxu0 0
        %460 = vmatprep.subr.bf16.mxu0 %v394
        %461 = vmatpush1.bf16.msra.mxu0 %v393
        %462 = vmatprep.subr.bf16.mxu0 %v392
        %463 = vmatpush1.bf16.msra.mxu0 %v391
        %464 = vmatprep.subr.bf16.mxu0 0
        %465 = vmatpush2.bf16.msra.mxu0 0
        %466 = vmatprep.subr.bf16.mxu0 0
        %467 = vmatpush2.bf16.msra.mxu0 0
        %468 = vmatprep.subr.bf16.mxu0 0
        %469 = vmatpush2.bf16.msra.mxu0 0
        %470 = vmatprep.subr.bf16.mxu0 0
        %471 = vmatpush2.bf16.msra.mxu0 0
        %472 = vmatprep.subr.bf16.mxu0 0
        %473 = vmatpush2.bf16.msra.mxu0 0
        %474 = vmatprep.subr.bf16.mxu0 0
        %475 = vmatpush2.bf16.msra.mxu0 0
        %476 = vmatprep.subr.bf16.mxu0 0
        %477 = vmatpush2.bf16.msra.mxu0 0
        %478 = vmatprep.subr.bf16.mxu0 0
        %479 = vmatpush2.bf16.msra.mxu0 0
        %480 = vmatprep.mubr.bf16.mxu0 0
        %481 = vmatmul.mubr.bf16.gmra.mxu0 %v401
        %v482 = vpop.f32.mrf.mxu0
        %v483 = vadd.f32 %v292, %v482
        %v484 = vpop.f32.mrf.mxu0
        %v485 = vadd.f32 %v296, %v484
        %v486 = vpop.f32.mrf.mxu0
        %v487 = vadd.f32 %v292, %v486
        %v488 = vpop.f32.mrf.mxu0
        %v489 = vadd.f32 %v296, %v488
        %490 = vmatprep.mubr.bf16.mxu0 0
        %491 = vmatmul.mubr.bf16.gmra.mxu0 %v404
        %v492 = vpop.f32.mrf.mxu0
        %v493 = vadd.f32 %v292, %v492
        %v494 = vpop.f32.mrf.mxu0
        %v495 = vadd.f32 %v296, %v494
        %v496 = vpop.f32.mrf.mxu0
        %v497 = vadd.f32 %v292, %v496
        %v498 = vpop.f32.mrf.mxu0
        %v499 = vadd.f32 %v296, %v498
        %500 = vmatprep.mubr.bf16.mxu0 0
        %501 = vmatmul.mubr.bf16.gmra.mxu0 %v407
        %v502 = vpop.f32.mrf.mxu0
        %v503 = vadd.f32 %v292, %v502
        %v504 = vpop.f32.mrf.mxu0
        %v505 = vadd.f32 %v296, %v504
        %v506 = vpop.f32.mrf.mxu0
        %v507 = vadd.f32 %v292, %v506
        %v508 = vpop.f32.mrf.mxu0
        %v509 = vadd.f32 %v296, %v508
        %510 = vmatprep.mubr.bf16.mxu0 0
        %511 = vmatmul.mubr.bf16.gmra.mxu0 %v410
        %v512 = vpop.f32.mrf.mxu0
        %v513 = vadd.f32 %v292, %v512
        %v514 = vpop.f32.mrf.mxu0
        %v515 = vadd.f32 %v296, %v514
        %v516 = vpop.f32.mrf.mxu0
        %v517 = vadd.f32 %v292, %v516
        %v518 = vpop.f32.mrf.mxu0
        %v519 = vadd.f32 %v296, %v518
        %520 = vmatprep.mubr.bf16.mxu0 0
        %521 = vmatmul.mubr.bf16.gmra.mxu0 %v413
        %v522 = vpop.f32.mrf.mxu0
        %v523 = vadd.f32 %v292, %v522
        %v524 = vpop.f32.mrf.mxu0
        %v525 = vadd.f32 %v296, %v524
        %v526 = vpop.f32.mrf.mxu0
        %v527 = vadd.f32 %v292, %v526
        %v528 = vpop.f32.mrf.mxu0
        %v529 = vadd.f32 %v296, %v528
        %530 = vmatprep.mubr.bf16.mxu0 0
        %531 = vmatmul.mubr.bf16.gmra.mxu0 %v416
        %v532 = vpop.f32.mrf.mxu0
        %v533 = vadd.f32 %v292, %v532
        %v534 = vpop.f32.mrf.mxu0
        %v535 = vadd.f32 %v296, %v534
        %v536 = vpop.f32.mrf.mxu0
        %v537 = vadd.f32 %v292, %v536
        %v538 = vpop.f32.mrf.mxu0
        %v539 = vadd.f32 %v296, %v538
        %540 = vmatprep.mubr.bf16.mxu0 0
        %541 = vmatmul.mubr.bf16.gmra.mxu0 %v419
        %v542 = vpop.f32.mrf.mxu0
        %v543 = vadd.f32 %v292, %v542
        %v544 = vpop.f32.mrf.mxu0
        %v545 = vadd.f32 %v296, %v544
        %v546 = vpop.f32.mrf.mxu0
        %v547 = vadd.f32 %v292, %v546
        %v548 = vpop.f32.mrf.mxu0
        %v549 = vadd.f32 %v296, %v548
        %550 = vmatprep.mubr.bf16.mxu0 0
        %551 = vmatmul.mubr.bf16.gmra.mxu0 %v422
        %v552 = vpop.f32.mrf.mxu0
        %v553 = vadd.f32 %v292, %v552
        %v554 = vpop.f32.mrf.mxu0
        %v555 = vadd.f32 %v296, %v554
        %v556 = vpop.f32.mrf.mxu0
        %v557 = vadd.f32 %v292, %v556
        %v558 = vpop.f32.mrf.mxu0
        %v559 = vadd.f32 %v296, %v558
        %560 = vmatprep.mubr.bf16.mxu0 0
        %561 = vmatmul.mubr.bf16.gmra.mxu0 %v425
        %v562 = vpop.f32.mrf.mxu0
        %v563 = vadd.f32 %v292, %v562
        %v564 = vpop.f32.mrf.mxu0
        %v565 = vadd.f32 %v296, %v564
        %v566 = vpop.f32.mrf.mxu0
        %v567 = vadd.f32 %v292, %v566
        %v568 = vpop.f32.mrf.mxu0
        %v569 = vadd.f32 %v296, %v568
        %570 = vmatprep.mubr.bf16.mxu0 0
        %571 = vmatmul.mubr.bf16.gmra.mxu0 %v428
        %v572 = vpop.f32.mrf.mxu0
        %v573 = vadd.f32 %v292, %v572
        %v574 = vpop.f32.mrf.mxu0
        %v575 = vadd.f32 %v296, %v574
        %v576 = vpop.f32.mrf.mxu0
        %v577 = vadd.f32 %v292, %v576
        %v578 = vpop.f32.mrf.mxu0
        %v579 = vadd.f32 %v296, %v578
        %580 = vmatprep.mubr.bf16.mxu0 0
        %581 = vmatmul.mubr.bf16.gmra.mxu0 %v431
        %v582 = vpop.f32.mrf.mxu0
        %v583 = vadd.f32 %v292, %v582
        %v584 = vpop.f32.mrf.mxu0
        %v585 = vadd.f32 %v296, %v584
        %v586 = vpop.f32.mrf.mxu0
        %v587 = vadd.f32 %v292, %v586
        %v588 = vpop.f32.mrf.mxu0
        %v589 = vadd.f32 %v296, %v588
        %590 = vmatprep.mubr.bf16.mxu0 0
        %591 = vmatmul.mubr.bf16.gmra.mxu0 %v434
        %v592 = vpop.f32.mrf.mxu0
        %v593 = vadd.f32 %v292, %v592
        %v594 = vpop.f32.mrf.mxu0
        %v595 = vadd.f32 %v296, %v594
        %v596 = vpop.f32.mrf.mxu0
        %v597 = vadd.f32 %v292, %v596
        %v598 = vpop.f32.mrf.mxu0
        %v599 = vadd.f32 %v296, %v598
        %600 = vmatprep.mubr.bf16.mxu0 0
        %601 = vmatmul.mubr.bf16.gmra.mxu0 %v437
        %v602 = vpop.f32.mrf.mxu0
        %v603 = vadd.f32 %v292, %v602
        %v604 = vpop.f32.mrf.mxu0
        %v605 = vadd.f32 %v296, %v604
        %v606 = vpop.f32.mrf.mxu0
        %v607 = vadd.f32 %v292, %v606
        %v608 = vpop.f32.mrf.mxu0
        %v609 = vadd.f32 %v296, %v608
        %610 = vmatprep.mubr.bf16.mxu0 0
        %611 = vmatmul.mubr.bf16.gmra.mxu0 %v440
        %v612 = vpop.f32.mrf.mxu0
        %v613 = vadd.f32 %v292, %v612
        %v614 = vpop.f32.mrf.mxu0
        %v615 = vadd.f32 %v296, %v614
        %v616 = vpop.f32.mrf.mxu0
        %v617 = vadd.f32 %v292, %v616
        %v618 = vpop.f32.mrf.mxu0
        %v619 = vadd.f32 %v296, %v618
        %620 = vmatprep.mubr.bf16.mxu0 0
        %621 = vmatmul.mubr.bf16.gmra.mxu0 %v443
        %v622 = vpop.f32.mrf.mxu0
        %v623 = vadd.f32 %v292, %v622
        %v624 = vpop.f32.mrf.mxu0
        %v625 = vadd.f32 %v296, %v624
        %v626 = vpop.f32.mrf.mxu0
        %v627 = vadd.f32 %v292, %v626
        %v628 = vpop.f32.mrf.mxu0
        %v629 = vadd.f32 %v296, %v628
        %630 = vmatprep.mubr.bf16.mxu0 0
        %631 = vmatmul.mubr.bf16.gmra.mxu0 %v446
        %v632 = vpop.f32.mrf.mxu0
        %v633 = vadd.f32 %v292, %v632
        %v634 = vpop.f32.mrf.mxu0
        %v635 = vadd.f32 %v296, %v634
        %v636 = vpop.f32.mrf.mxu0
        %v637 = vadd.f32 %v292, %v636
        %v638 = vpop.f32.mrf.mxu0
        %v639 = vadd.f32 %v296, %v638
        %640 = vdwg.mxu0
        %v641 = vmax.f32 %v485, 0.0
        %v642 = vmax.f32 %v489, 0.0
        %v643 = vmax.f32 %v495, 0.0
        %v644 = vmax.f32 %v499, 0.0
        %v645 = vmax.f32 %v505, 0.0
        %v646 = vmax.f32 %v509, 0.0
        %v647 = vmax.f32 %v515, 0.0
        %v648 = vmax.f32 %v519, 0.0
        %v649 = vmax.f32 %v525, 0.0
        %v650 = vmax.f32 %v529, 0.0
        %v651 = vmax.f32 %v535, 0.0
        %v652 = vmax.f32 %v539, 0.0
        %v653 = vmax.f32 %v545, 0.0
        %v654 = vmax.f32 %v549, 0.0
        %v655 = vmax.f32 %v555, 0.0
        %v656 = vmax.f32 %v559, 0.0
        %v657 = vmax.f32 %v565, 0.0
        %v658 = vmax.f32 %v569, 0.0
        %v659 = vmax.f32 %v575, 0.0
        %v660 = vmax.f32 %v579, 0.0
        %v661 = vmax.f32 %v585, 0.0
        %v662 = vmax.f32 %v589, 0.0
        %v663 = vmax.f32 %v595, 0.0
        %v664 = vmax.f32 %v599, 0.0
        %v665 = vmax.f32 %v605, 0.0
        %v666 = vmax.f32 %v609, 0.0
        %v667 = vmax.f32 %v615, 0.0
        %v668 = vmax.f32 %v619, 0.0
        %v669 = vmax.f32 %v625, 0.0
        %v670 = vmax.f32 %v629, 0.0
        %v671 = vmax.f32 %v635, 0.0
        %v672 = vmax.f32 %v639, 0.0
        %v673 = vpack.c.bf16 %v642, %v641
        %v674 = vpack.c.bf16 %v644, %v643
        %v675 = vpack.c.bf16 %v646, %v645
        %v676 = vpack.c.bf16 %v648, %v647
        %v677 = vpack.c.bf16 %v650, %v649
        %v678 = vpack.c.bf16 %v652, %v651
        %v679 = vpack.c.bf16 %v654, %v653
        %v680 = vpack.c.bf16 %v656, %v655
        %v681 = vpack.c.bf16 %v658, %v657
        %v682 = vpack.c.bf16 %v660, %v659
        %v683 = vpack.c.bf16 %v662, %v661
        %v684 = vpack.c.bf16 %v664, %v663
        %v685 = vpack.c.bf16 %v666, %v665
        %v686 = vpack.c.bf16 %v668, %v667
        %v687 = vpack.c.bf16 %v670, %v669
        %v688 = vpack.c.bf16 %v672, %v671
        %vm689 = vcmask 125952
        %690 = vst.msk [vmem:[#allocation2] sm:$0xf] %vm689, 0
        %691 = vst.msk [vmem:[#allocation2 + $0x4] sm:$0xf] %vm689, 0
        %692 = vst.msk [vmem:[#allocation2 + $0x8] sm:$0xf] %vm689, 0
        %693 = vst.msk [vmem:[#allocation2 + $0xc] sm:$0xf] %vm689, 0
        %694 = vst.msk [vmem:[#allocation2 + $0x10] sm:$0xf] %vm689, 0
        %695 = vst.msk [vmem:[#allocation2 + $0x14] sm:$0xf] %vm689, 0
        %696 = vst.msk [vmem:[#allocation2 + $0x18] sm:$0xf] %vm689, 0
        %697 = vst.msk [vmem:[#allocation2 + $0x1c] sm:$0xf] %vm689, 0
        %698 = vst.msk [vmem:[#allocation2 + $0x20] sm:$0xf] %vm689, 0
        %699 = vst.msk [vmem:[#allocation2 + $0x24] sm:$0xf] %vm689, 0
        %700 = vst.msk [vmem:[#allocation2 + $0x28] sm:$0xf] %vm689, 0
        %701 = vst.msk [vmem:[#allocation2 + $0x2c] sm:$0xf] %vm689, 0
        %702 = vst.msk [vmem:[#allocation2 + $0x30] sm:$0xf] %vm689, 0
        %703 = vst.msk [vmem:[#allocation2 + $0x34] sm:$0xf] %vm689, 0
        %704 = vst.msk [vmem:[#allocation2 + $0x38] sm:$0xf] %vm689, 0
        %705 = vst.msk [vmem:[#allocation2 + $0x3c] sm:$0xf] %vm689, 0
        %706 = vst.msk [vmem:[#allocation2 + $0x40] sm:$0xf] %vm689, 0
        %707 = vst.msk [vmem:[#allocation2 + $0x44] sm:$0xf] %vm689, 0
        %708 = vst.msk [vmem:[#allocation2 + $0x48] sm:$0xf] %vm689, 0
        %709 = vst.msk [vmem:[#allocation2 + $0x4c] sm:$0xf] %vm689, 0
        %710 = vst.msk [vmem:[#allocation2 + $0x50] sm:$0xf] %vm689, 0
        %711 = vst.msk [vmem:[#allocation2 + $0x54] sm:$0xf] %vm689, 0
        %712 = vst.msk [vmem:[#allocation2 + $0x58] sm:$0xf] %vm689, 0
        %713 = vst.msk [vmem:[#allocation2 + $0x5c] sm:$0xf] %vm689, 0
        %714 = vst.msk [vmem:[#allocation2 + $0x60] sm:$0xf] %vm689, 0
        %715 = vst.msk [vmem:[#allocation2 + $0x64] sm:$0xf] %vm689, 0
        %716 = vst.msk [vmem:[#allocation2 + $0x68] sm:$0xf] %vm689, 0
        %717 = vst.msk [vmem:[#allocation2 + $0x6c] sm:$0xf] %vm689, 0
        %718 = vst.msk [vmem:[#allocation2 + $0x70] sm:$0xf] %vm689, 0
        %719 = vst.msk [vmem:[#allocation2 + $0x74] sm:$0xf] %vm689, 0
        %720 = vst.msk [vmem:[#allocation2 + $0x78] sm:$0xf] %vm689, 0
        %721 = vst.msk [vmem:[#allocation2 + $0x7c] sm:$0xf] %vm689, 0
        %722 = vst.msk [vmem:[#allocation2 + $0x80] sm:$0xf] %vm689, 0
        %723 = vst.msk [vmem:[#allocation2 + $0x84] sm:$0xf] %vm689, 0
        %724 = vst.msk [vmem:[#allocation2 + $0x88] sm:$0xf] %vm689, 0
        %725 = vst.msk [vmem:[#allocation2 + $0x8c] sm:$0xf] %vm689, 0
        %726 = vst.msk [vmem:[#allocation2 + $0x90] sm:$0xf] %vm689, 0
        %727 = vst.msk [vmem:[#allocation2 + $0x94] sm:$0xf] %vm689, 0
        %728 = vst.msk [vmem:[#allocation2 + $0x98] sm:$0xf] %vm689, 0
        %729 = vst.msk [vmem:[#allocation2 + $0x9c] sm:$0xf] %vm689, 0
        %730 = vst.msk [vmem:[#allocation2 + $0xa0] sm:$0xf] %vm689, 0
        %731 = vst.msk [vmem:[#allocation2 + $0xa4] sm:$0xf] %vm689, 0
        %732 = vst.msk [vmem:[#allocation2 + $0xa8] sm:$0xf] %vm689, 0
        %733 = vst.msk [vmem:[#allocation2 + $0xac] sm:$0xf] %vm689, 0
        %734 = vst.msk [vmem:[#allocation2 + $0xb0] sm:$0xf] %vm689, 0
        %vm735 = vcmask 122880
        %736 = vst.msk [vmem:[#allocation2 + $0xb4] sm:$0x1] %vm735, 0
        %v738 = vunpack.c.l.b16 %v673
        %v739 = vunpack.c.h.b16 %v673
        %v740 = vpack.c.b16 %v738, %v738
        %v741 = vpack.c.b16 %v739, %v739
        %vm742 = vcmask 1042432
        %vm743 = vcmask 1046532
        %vm744 = vmor %vm742, %vm743
        %v745 = vrot.slane %v740, 5
        %v746 = vrot.slane %v745, 4
        %v747 = vrot.slane %v741, 5
        %v748 = vsel %vm744, %v746, %v747
        %v749 = vrot.slane %v747, 4
        %vm753 = vcmask 125955
        %754 = vst.msk [vmem:[#allocation2 + $0x10] sm:$0x8] %vm753, %v745
        %755 = vst.msk [vmem:[#allocation2 + $0x14] sm:$0xf] %vm689, %v748
        %vm756 = vcmask 124928
        %757 = vst.msk [vmem:[#allocation2 + $0x18] sm:$0x7] %vm756, %v749
        %v759 = vunpack.c.l.b16 %v674
        %v760 = vunpack.c.h.b16 %v674
        %v761 = vpack.c.b16 %v759, %v759
        %v762 = vpack.c.b16 %v760, %v760
        %765 = vst.msk [vmem:[#allocation2 + $0x1c] sm:$0xf] %vm689, %v761
        %766 = vst.msk [vmem:[#allocation2 + $0x20] sm:$0xf] %vm689, %v762
        %v768 = vunpack.c.l.b16 %v675
        %v769 = vunpack.c.h.b16 %v675
        %v770 = vpack.c.b16 %v768, %v768
        %v771 = vpack.c.b16 %v769, %v769
        %vm772 = vcmask 1040384
        %vm773 = vcmask 1044484
        %vm774 = vmor %vm772, %vm773
        %v775 = vrot.slane %v770, 7
        %v776 = vrot.slane %v775, 4
        %v777 = vrot.slane %v771, 7
        %v778 = vsel %vm774, %v776, %v777
        %v779 = vrot.slane %v777, 4
        %vm783 = vcmask 125953
        %784 = vst.msk [vmem:[#allocation2 + $0x24] sm:$0xe] %vm783, %v775
        %785 = vst.msk [vmem:[#allocation2 + $0x28] sm:$0xf] %vm689, %v778
        %786 = vst.msk [vmem:[#allocation2 + $0x2c] sm:$0x1] %vm735, %v779
        %v788 = vunpack.c.l.b16 %v676
        %v789 = vunpack.c.h.b16 %v676
        %v790 = vpack.c.b16 %v788, %v788
        %v791 = vpack.c.b16 %v789, %v789
        %vm792 = vcmask 1041408
        %vm793 = vcmask 1045508
        %vm794 = vmor %vm792, %vm793
        %v795 = vrot.slane %v790, 6
        %v796 = vrot.slane %v795, 4
        %v797 = vrot.slane %v791, 6
        %v798 = vsel %vm794, %v796, %v797
        %v799 = vrot.slane %v797, 4
        %vm803 = vcmask 125954
        %804 = vst.msk [vmem:[#allocation2 + $0x2c] sm:$0xc] %vm803, %v795
        %805 = vst.msk [vmem:[#allocation2 + $0x30] sm:$0xf] %vm689, %v798
        %vm806 = vcmask 123904
        %807 = vst.msk [vmem:[#allocation2 + $0x34] sm:$0x3] %vm806, %v799
        %v809 = vunpack.c.l.b16 %v677
        %v810 = vunpack.c.h.b16 %v677
        %v811 = vpack.c.b16 %v809, %v809
        %v812 = vpack.c.b16 %v810, %v810
        %v813 = vrot.slane %v811, 5
        %v814 = vrot.slane %v813, 4
        %v815 = vrot.slane %v812, 5
        %v816 = vsel %vm744, %v814, %v815
        %v817 = vrot.slane %v815, 4
        %821 = vst.msk [vmem:[#allocation2 + $0x34] sm:$0x8] %vm753, %v813
        %822 = vst.msk [vmem:[#allocation2 + $0x38] sm:$0xf] %vm689, %v816
        %823 = vst.msk [vmem:[#allocation2 + $0x3c] sm:$0x7] %vm756, %v817
        %v825 = vunpack.c.l.b16 %v678
        %v826 = vunpack.c.h.b16 %v678
        %v827 = vpack.c.b16 %v825, %v825
        %v828 = vpack.c.b16 %v826, %v826
        %831 = vst.msk [vmem:[#allocation2 + $0x40] sm:$0xf] %vm689, %v827
        %832 = vst.msk [vmem:[#allocation2 + $0x44] sm:$0xf] %vm689, %v828
        %v834 = vunpack.c.l.b16 %v679
        %v835 = vunpack.c.h.b16 %v679
        %v836 = vpack.c.b16 %v834, %v834
        %v837 = vpack.c.b16 %v835, %v835
        %v838 = vrot.slane %v836, 7
        %v839 = vrot.slane %v838, 4
        %v840 = vrot.slane %v837, 7
        %v841 = vsel %vm774, %v839, %v840
        %v842 = vrot.slane %v840, 4
        %846 = vst.msk [vmem:[#allocation2 + $0x48] sm:$0xe] %vm783, %v838
        %847 = vst.msk [vmem:[#allocation2 + $0x4c] sm:$0xf] %vm689, %v841
        %848 = vst.msk [vmem:[#allocation2 + $0x50] sm:$0x1] %vm735, %v842
        %v850 = vunpack.c.l.b16 %v680
        %v851 = vunpack.c.h.b16 %v680
        %v852 = vpack.c.b16 %v850, %v850
        %v853 = vpack.c.b16 %v851, %v851
        %v854 = vrot.slane %v852, 6
        %v855 = vrot.slane %v854, 4
        %v856 = vrot.slane %v853, 6
        %v857 = vsel %vm794, %v855, %v856
        %v858 = vrot.slane %v856, 4
        %862 = vst.msk [vmem:[#allocation2 + $0x50] sm:$0xc] %vm803, %v854
        %863 = vst.msk [vmem:[#allocation2 + $0x54] sm:$0xf] %vm689, %v857
        %864 = vst.msk [vmem:[#allocation2 + $0x58] sm:$0x3] %vm806, %v858
        %v866 = vunpack.c.l.b16 %v681
        %v867 = vunpack.c.h.b16 %v681
        %v868 = vpack.c.b16 %v866, %v866
        %v869 = vpack.c.b16 %v867, %v867
        %v870 = vrot.slane %v868, 5
        %v871 = vrot.slane %v870, 4
        %v872 = vrot.slane %v869, 5
        %v873 = vsel %vm744, %v871, %v872
        %v874 = vrot.slane %v872, 4
        %878 = vst.msk [vmem:[#allocation2 + $0x58] sm:$0x8] %vm753, %v870
        %879 = vst.msk [vmem:[#allocation2 + $0x5c] sm:$0xf] %vm689, %v873
        %880 = vst.msk [vmem:[#allocation2 + $0x60] sm:$0x7] %vm756, %v874
        %v882 = vunpack.c.l.b16 %v682
        %v883 = vunpack.c.h.b16 %v682
        %v884 = vpack.c.b16 %v882, %v882
        %v885 = vpack.c.b16 %v883, %v883
        %888 = vst.msk [vmem:[#allocation2 + $0x64] sm:$0xf] %vm689, %v884
        %889 = vst.msk [vmem:[#allocation2 + $0x68] sm:$0xf] %vm689, %v885
        %v891 = vunpack.c.l.b16 %v683
        %v892 = vunpack.c.h.b16 %v683
        %v893 = vpack.c.b16 %v891, %v891
        %v894 = vpack.c.b16 %v892, %v892
        %v895 = vrot.slane %v893, 7
        %v896 = vrot.slane %v895, 4
        %v897 = vrot.slane %v894, 7
        %v898 = vsel %vm774, %v896, %v897
        %v899 = vrot.slane %v897, 4
        %903 = vst.msk [vmem:[#allocation2 + $0x6c] sm:$0xe] %vm783, %v895
        %904 = vst.msk [vmem:[#allocation2 + $0x70] sm:$0xf] %vm689, %v898
        %905 = vst.msk [vmem:[#allocation2 + $0x74] sm:$0x1] %vm735, %v899
        %v907 = vunpack.c.l.b16 %v684
        %v908 = vunpack.c.h.b16 %v684
        %v909 = vpack.c.b16 %v907, %v907
        %v910 = vpack.c.b16 %v908, %v908
        %v911 = vrot.slane %v909, 6
        %v912 = vrot.slane %v911, 4
        %v913 = vrot.slane %v910, 6
        %v914 = vsel %vm794, %v912, %v913
        %v915 = vrot.slane %v913, 4
        %919 = vst.msk [vmem:[#allocation2 + $0x74] sm:$0xc] %vm803, %v911
        %920 = vst.msk [vmem:[#allocation2 + $0x78] sm:$0xf] %vm689, %v914
        %921 = vst.msk [vmem:[#allocation2 + $0x7c] sm:$0x3] %vm806, %v915
        %v923 = vunpack.c.l.b16 %v685
        %v924 = vunpack.c.h.b16 %v685
        %v925 = vpack.c.b16 %v923, %v923
        %v926 = vpack.c.b16 %v924, %v924
        %v927 = vrot.slane %v925, 5
        %v928 = vrot.slane %v927, 4
        %v929 = vrot.slane %v926, 5
        %v930 = vsel %vm744, %v928, %v929
        %v931 = vrot.slane %v929, 4
        %935 = vst.msk [vmem:[#allocation2 + $0x7c] sm:$0x8] %vm753, %v927
        %936 = vst.msk [vmem:[#allocation2 + $0x80] sm:$0xf] %vm689, %v930
        %937 = vst.msk [vmem:[#allocation2 + $0x84] sm:$0x7] %vm756, %v931
        %v939 = vunpack.c.l.b16 %v686
        %v940 = vunpack.c.h.b16 %v686
        %v941 = vpack.c.b16 %v939, %v939
        %v942 = vpack.c.b16 %v940, %v940
        %945 = vst.msk [vmem:[#allocation2 + $0x88] sm:$0xf] %vm689, %v941
        %946 = vst.msk [vmem:[#allocation2 + $0x8c] sm:$0xf] %vm689, %v942
        %v948 = vunpack.c.l.b16 %v687
        %v949 = vunpack.c.h.b16 %v687
        %v950 = vpack.c.b16 %v948, %v948
        %v951 = vpack.c.b16 %v949, %v949
        %v952 = vrot.slane %v950, 7
        %v953 = vrot.slane %v952, 4
        %v954 = vrot.slane %v951, 7
        %v955 = vsel %vm774, %v953, %v954
        %v956 = vrot.slane %v954, 4
        %960 = vst.msk [vmem:[#allocation2 + $0x90] sm:$0xe] %vm783, %v952
        %961 = vst.msk [vmem:[#allocation2 + $0x94] sm:$0xf] %vm689, %v955
        %962 = vst.msk [vmem:[#allocation2 + $0x98] sm:$0x1] %vm735, %v956
        %v964 = vunpack.c.l.b16 %v688
        %v965 = vunpack.c.h.b16 %v688
        %v966 = vpack.c.b16 %v964, %v964
        %v967 = vpack.c.b16 %v965, %v965
        %v968 = vrot.slane %v966, 6
        %v969 = vrot.slane %v968, 4
        %v970 = vrot.slane %v967, 6
        %v971 = vsel %vm794, %v969, %v970
        %v972 = vrot.slane %v970, 4
        %976 = vst.msk [vmem:[#allocation2 + $0x98] sm:$0xc] %vm803, %v968
        %977 = vst.msk [vmem:[#allocation2 + $0x9c] sm:$0xf] %vm689, %v971
        %978 = vst.msk [vmem:[#allocation2 + $0xa0] sm:$0x3] %vm806, %v972
        %v979 = vld [vmem:[#allocation2] sm:$0xf]
        %v980 = vld [vmem:[#allocation2 + $0x4] sm:$0xf]
        %v981 = vld [vmem:[#allocation2 + $0x8] sm:$0xf]
        %v982 = vld [vmem:[#allocation2 + $0xc] sm:$0xf]
        %v983 = vld [vmem:[#allocation2 + $0x10] sm:$0xf]
        %v984 = vld [vmem:[#allocation2 + $0x14] sm:$0xf]
        %v985 = vld [vmem:[#allocation2 + $0x18] sm:$0xf]
        %v986 = vld [vmem:[#allocation2 + $0x1c] sm:$0xf]
        %v987 = vld [vmem:[#allocation2 + $0x20] sm:$0xf]
        %v988 = vld [vmem:[#allocation2 + $0x24] sm:$0xf]
        %v989 = vld [vmem:[#allocation2 + $0x28] sm:$0xf]
        %v990 = vld [vmem:[#allocation2 + $0x2c] sm:$0xf]
        %v991 = vld [vmem:[#allocation2 + $0x30] sm:$0xf]
        %v992 = vld [vmem:[#allocation2 + $0x34] sm:$0xf]
        %v993 = vld [vmem:[#allocation2 + $0x38] sm:$0xf]
        %v994 = vld [vmem:[#allocation2 + $0x3c] sm:$0xf]
        %v995 = vld [vmem:[#allocation2 + $0x40] sm:$0xf]
        %v996 = vld [vmem:[#allocation2 + $0x44] sm:$0xf]
        %v997 = vld [vmem:[#allocation2 + $0x48] sm:$0xf]
        %v998 = vld [vmem:[#allocation2 + $0x4c] sm:$0xf]
        %v999 = vld [vmem:[#allocation2 + $0x50] sm:$0xf]
        %v1000 = vld [vmem:[#allocation2 + $0x54] sm:$0xf]
        %v1001 = vld [vmem:[#allocation2 + $0x58] sm:$0xf]
        %v1002 = vld [vmem:[#allocation2 + $0x5c] sm:$0xf]
        %v1003 = vld [vmem:[#allocation2 + $0x60] sm:$0xf]
        %v1004 = vld [vmem:[#allocation2 + $0x64] sm:$0xf]
        %v1005 = vld [vmem:[#allocation2 + $0x68] sm:$0xf]
        %v1006 = vld [vmem:[#allocation2 + $0x6c] sm:$0xf]
        %v1007 = vld [vmem:[#allocation2 + $0x70] sm:$0xf]
        %v1008 = vld [vmem:[#allocation2 + $0x74] sm:$0xf]
        %v1009 = vld [vmem:[#allocation2 + $0x78] sm:$0xf]
        %v1010 = vld [vmem:[#allocation2 + $0x7c] sm:$0xf]
        %v1011 = vld [vmem:[#allocation2 + $0x80] sm:$0xf]
        %v1012 = vld [vmem:[#allocation2 + $0x84] sm:$0xf]
        %v1013 = vld [vmem:[#allocation2 + $0x88] sm:$0xf]
        %v1014 = vld [vmem:[#allocation2 + $0x8c] sm:$0xf]
        %v1015 = vld [vmem:[#allocation2 + $0x90] sm:$0xf]
        %v1016 = vld [vmem:[#allocation2 + $0x94] sm:$0xf]
        %v1017 = vld [vmem:[#allocation2 + $0x98] sm:$0xf]
        %v1018 = vld [vmem:[#allocation2 + $0x9c] sm:$0xf]
        %v1019 = vld [vmem:[#allocation2 + $0xa0] sm:$0x3]
        %v1020 = vld [vmem:[#allocation2 + $0xa0] sm:$0x7]
        %v1021 = vld [vmem:[#allocation2] sm:$0xe]
        %v1022 = vld [vmem:[#allocation2 + $0x8] sm:$0xe]
        %v1023 = vld [vmem:[#allocation2 + $0xa0] sm:$0xf]
        %v1024 = vld [vmem:[#allocation2 + $0xa4] sm:$0xf]
        %v1025 = vld [vmem:[#allocation2 + $0xa8] sm:$0x7]
        %v1026 = vld [vmem:[#allocation2 + $0xa8] sm:$0xf]
        %v1027 = vld [vmem:[#allocation2 + $0x8] sm:$0xc]
        %v1028 = vld [vmem:[#allocation2 + $0x10] sm:$0xc]
        %v1029 = vld [vmem:[#allocation2 + $0xac] sm:$0xf]
        %v1030 = vld [vmem:[#allocation2 + $0xb0] sm:$0xf]
        %v1031 = vld [vmem:[#allocation2 + $0xb4] sm:$0x1]
        %v1032 = vld [vmem:[#allocation2 + $0x10] sm:$0x8]
        %v1074 = vunpack.c.l.b16 %v979
        %v1075 = vunpack.c.l.b16 %v980
        %v1076 = vunpack.c.l.b16 %v981
        %v1077 = vunpack.c.l.b16 %v982
        %v1078 = vunpack.c.l.b16 %v983
        %v1079 = vunpack.c.l.b16 %v984
        %v1080 = vunpack.c.l.b16 %v985
        %v1081 = vunpack.c.l.b16 %v986
        %v1082 = vunpack.c.l.b16 %v987
        %v1083 = vunpack.c.l.b16 %v988
        %v1084 = vunpack.c.l.b16 %v989
        %v1085 = vunpack.c.l.b16 %v990
        %v1086 = vunpack.c.l.b16 %v991
        %v1087 = vunpack.c.l.b16 %v992
        %v1088 = vunpack.c.l.b16 %v993
        %v1089 = vunpack.c.l.b16 %v994
        %v1090 = vunpack.c.l.b16 %v995
        %v1091 = vunpack.c.l.b16 %v996
        %v1092 = vunpack.c.l.b16 %v997
        %v1093 = vunpack.c.l.b16 %v998
        %v1094 = vunpack.c.l.b16 %v999
        %v1095 = vunpack.c.l.b16 %v1000
        %v1096 = vunpack.c.l.b16 %v1001
        %v1097 = vunpack.c.l.b16 %v1002
        %v1098 = vunpack.c.l.b16 %v1003
        %v1099 = vunpack.c.l.b16 %v1004
        %v1100 = vunpack.c.l.b16 %v1005
        %v1101 = vunpack.c.l.b16 %v1006
        %v1102 = vunpack.c.l.b16 %v1007
        %v1103 = vunpack.c.l.b16 %v1008
        %v1104 = vunpack.c.l.b16 %v1009
        %v1105 = vunpack.c.l.b16 %v1010
        %v1106 = vunpack.c.l.b16 %v1011
        %v1107 = vunpack.c.l.b16 %v1012
        %v1108 = vunpack.c.l.b16 %v1013
        %v1109 = vunpack.c.l.b16 %v1014
        %v1110 = vunpack.c.l.b16 %v1015
        %v1111 = vunpack.c.l.b16 %v1016
        %v1112 = vunpack.c.l.b16 %v1017
        %v1113 = vunpack.c.l.b16 %v1018
        %v1114 = vunpack.c.l.b16 %v1019
        %v1115 = vpack.c.b16 %v1075, %v1074
        %v1116 = vpack.c.b16 %v1077, %v1076
        %v1117 = vpack.c.b16 %v1079, %v1078
        %v1118 = vpack.c.b16 %v1081, %v1080
        %v1119 = vpack.c.b16 %v1083, %v1082
        %v1120 = vpack.c.b16 %v1085, %v1084
        %v1121 = vpack.c.b16 %v1087, %v1086
        %v1122 = vpack.c.b16 %v1089, %v1088
        %v1123 = vpack.c.b16 %v1091, %v1090
        %v1124 = vpack.c.b16 %v1093, %v1092
        %v1125 = vpack.c.b16 %v1095, %v1094
        %v1126 = vpack.c.b16 %v1097, %v1096
        %v1127 = vpack.c.b16 %v1099, %v1098
        %v1128 = vpack.c.b16 %v1101, %v1100
        %v1129 = vpack.c.b16 %v1103, %v1102
        %v1130 = vpack.c.b16 %v1105, %v1104
        %v1131 = vpack.c.b16 %v1107, %v1106
        %v1132 = vpack.c.b16 %v1109, %v1108
        %v1133 = vpack.c.b16 %v1111, %v1110
        %v1134 = vpack.c.b16 %v1113, %v1112
        %v1135 = vpack.c.b16 %v1114, %v1114
        %v1137 = vunpack.c.l.b16 %v1020
        %v1138 = vpack.c.b16 %v1137, %v1137
        %vm1139 = vsmask.f32 7424
        %v1141 = vshrl.u32 %v1115, 16
        %v1143 = vshll.u32 %v1115, 16
        %v1145 = vrot.slane %v1143, 1
        %v1146 = vor.u32 %v1141, %v1145
        %v1148 = vshll.u32 %v1116, 16
        %v1150 = vrot.slane %v1148, 1
        %v1151 = vsel %vm1139, %v1146, %v1150
        %v1152 = vshrl.u32 %v1116, 16
        %v1154 = vor.u32 %v1152, %v1150
        %v1156 = vshll.u32 %v1117, 16
        %v1158 = vrot.slane %v1156, 1
        %v1159 = vsel %vm1139, %v1154, %v1158
        %v1160 = vshrl.u32 %v1117, 16
        %v1162 = vor.u32 %v1160, %v1158
        %v1164 = vshll.u32 %v1118, 16
        %v1166 = vrot.slane %v1164, 1
        %v1167 = vsel %vm1139, %v1162, %v1166
        %v1168 = vshrl.u32 %v1118, 16
        %v1170 = vor.u32 %v1168, %v1166
        %v1172 = vshll.u32 %v1119, 16
        %v1174 = vrot.slane %v1172, 1
        %v1175 = vsel %vm1139, %v1170, %v1174
        %v1176 = vshrl.u32 %v1119, 16
        %v1178 = vor.u32 %v1176, %v1174
        %v1180 = vshll.u32 %v1120, 16
        %v1182 = vrot.slane %v1180, 1
        %v1183 = vsel %vm1139, %v1178, %v1182
        %v1184 = vshrl.u32 %v1120, 16
        %v1186 = vor.u32 %v1184, %v1182
        %v1188 = vshll.u32 %v1121, 16
        %v1190 = vrot.slane %v1188, 1
        %v1191 = vsel %vm1139, %v1186, %v1190
        %v1192 = vshrl.u32 %v1121, 16
        %v1194 = vor.u32 %v1192, %v1190
        %v1196 = vshll.u32 %v1122, 16
        %v1198 = vrot.slane %v1196, 1
        %v1199 = vsel %vm1139, %v1194, %v1198
        %v1200 = vshrl.u32 %v1122, 16
        %v1202 = vor.u32 %v1200, %v1198
        %v1204 = vshll.u32 %v1123, 16
        %v1206 = vrot.slane %v1204, 1
        %v1207 = vsel %vm1139, %v1202, %v1206
        %v1208 = vshrl.u32 %v1123, 16
        %v1210 = vor.u32 %v1208, %v1206
        %v1212 = vshll.u32 %v1124, 16
        %v1214 = vrot.slane %v1212, 1
        %v1215 = vsel %vm1139, %v1210, %v1214
        %v1216 = vshrl.u32 %v1124, 16
        %v1218 = vor.u32 %v1216, %v1214
        %v1220 = vshll.u32 %v1125, 16
        %v1222 = vrot.slane %v1220, 1
        %v1223 = vsel %vm1139, %v1218, %v1222
        %v1224 = vshrl.u32 %v1125, 16
        %v1226 = vor.u32 %v1224, %v1222
        %v1228 = vshll.u32 %v1126, 16
        %v1230 = vrot.slane %v1228, 1
        %v1231 = vsel %vm1139, %v1226, %v1230
        %v1232 = vshrl.u32 %v1126, 16
        %v1234 = vor.u32 %v1232, %v1230
        %v1236 = vshll.u32 %v1127, 16
        %v1238 = vrot.slane %v1236, 1
        %v1239 = vsel %vm1139, %v1234, %v1238
        %v1240 = vshrl.u32 %v1127, 16
        %v1242 = vor.u32 %v1240, %v1238
        %v1244 = vshll.u32 %v1128, 16
        %v1246 = vrot.slane %v1244, 1
        %v1247 = vsel %vm1139, %v1242, %v1246
        %v1248 = vshrl.u32 %v1128, 16
        %v1250 = vor.u32 %v1248, %v1246
        %v1252 = vshll.u32 %v1129, 16
        %v1254 = vrot.slane %v1252, 1
        %v1255 = vsel %vm1139, %v1250, %v1254
        %v1256 = vshrl.u32 %v1129, 16
        %v1258 = vor.u32 %v1256, %v1254
        %v1260 = vshll.u32 %v1130, 16
        %v1262 = vrot.slane %v1260, 1
        %v1263 = vsel %vm1139, %v1258, %v1262
        %v1264 = vshrl.u32 %v1130, 16
        %v1266 = vor.u32 %v1264, %v1262
        %v1268 = vshll.u32 %v1131, 16
        %v1270 = vrot.slane %v1268, 1
        %v1271 = vsel %vm1139, %v1266, %v1270
        %v1272 = vshrl.u32 %v1131, 16
        %v1274 = vor.u32 %v1272, %v1270
        %v1276 = vshll.u32 %v1132, 16
        %v1278 = vrot.slane %v1276, 1
        %v1279 = vsel %vm1139, %v1274, %v1278
        %v1280 = vshrl.u32 %v1132, 16
        %v1282 = vor.u32 %v1280, %v1278
        %v1284 = vshll.u32 %v1133, 16
        %v1286 = vrot.slane %v1284, 1
        %v1287 = vsel %vm1139, %v1282, %v1286
        %v1288 = vshrl.u32 %v1133, 16
        %v1290 = vor.u32 %v1288, %v1286
        %v1292 = vshll.u32 %v1134, 16
        %v1294 = vrot.slane %v1292, 1
        %v1295 = vsel %vm1139, %v1290, %v1294
        %v1296 = vshrl.u32 %v1134, 16
        %v1298 = vor.u32 %v1296, %v1294
        %v1300 = vshll.u32 %v1138, 16
        %v1302 = vrot.slane %v1300, 1
        %v1303 = vsel %vm1139, %v1298, %v1302
        %v1304 = vshrl.u32 %v1138, 16
        %v1306 = vor.u32 %v1304, %v1302
        %1307 = vrot.lane.b32.xlu0 %v1151, 16
        %v1308 = vpop.permute.xlu0 %1307
        %1309 = vrot.lane.b32.xlu0 %v1159, 16
        %v1310 = vpop.permute.xlu0 %1309
        %1311 = vrot.lane.b32.xlu0 %v1167, 16
        %v1312 = vpop.permute.xlu0 %1311
        %1313 = vrot.lane.b32.xlu0 %v1175, 16
        %v1314 = vpop.permute.xlu0 %1313
        %1315 = vrot.lane.b32.xlu0 %v1183, 16
        %v1316 = vpop.permute.xlu0 %1315
        %1317 = vrot.lane.b32.xlu0 %v1191, 16
        %v1318 = vpop.permute.xlu0 %1317
        %1319 = vrot.lane.b32.xlu0 %v1199, 16
        %v1320 = vpop.permute.xlu0 %1319
        %1321 = vrot.lane.b32.xlu0 %v1207, 16
        %v1322 = vpop.permute.xlu0 %1321
        %1323 = vrot.lane.b32.xlu0 %v1215, 16
        %v1324 = vpop.permute.xlu0 %1323
        %1325 = vrot.lane.b32.xlu0 %v1223, 16
        %v1326 = vpop.permute.xlu0 %1325
        %1327 = vrot.lane.b32.xlu0 %v1231, 16
        %v1328 = vpop.permute.xlu0 %1327
        %1329 = vrot.lane.b32.xlu0 %v1239, 16
        %v1330 = vpop.permute.xlu0 %1329
        %1331 = vrot.lane.b32.xlu0 %v1247, 16
        %v1332 = vpop.permute.xlu0 %1331
        %1333 = vrot.lane.b32.xlu0 %v1255, 16
        %v1334 = vpop.permute.xlu0 %1333
        %1335 = vrot.lane.b32.xlu0 %v1263, 16
        %v1336 = vpop.permute.xlu0 %1335
        %1337 = vrot.lane.b32.xlu0 %v1271, 16
        %v1338 = vpop.permute.xlu0 %1337
        %1339 = vrot.lane.b32.xlu0 %v1279, 16
        %v1340 = vpop.permute.xlu0 %1339
        %1341 = vrot.lane.b32.xlu0 %v1287, 16
        %v1342 = vpop.permute.xlu0 %1341
        %1343 = vrot.lane.b32.xlu0 %v1295, 16
        %v1344 = vpop.permute.xlu0 %1343
        %1345 = vrot.lane.b32.xlu0 %v1303, 16
        %v1346 = vpop.permute.xlu0 %1345
        %1347 = vrot.lane.b32.xlu0 %v1306, 16
        %v1348 = vpop.permute.xlu0 %1347
        %v1350 = vunpack.c.l.b16 %v1021
        %v1351 = vpack.c.b16 %v1075, %v1350
        %vm1352 = vcmask 1046528
        %v1353 = vrot.slane %v1351, 1
        %v1354 = vrot.slane %v1116, 1
        %v1355 = vsel %vm1352, %v1353, %v1354
        %v1356 = vrot.slane %v1117, 1
        %v1357 = vsel %vm1352, %v1354, %v1356
        %v1358 = vrot.slane %v1118, 1
        %v1359 = vsel %vm1352, %v1356, %v1358
        %v1360 = vrot.slane %v1119, 1
        %v1361 = vsel %vm1352, %v1358, %v1360
        %v1362 = vrot.slane %v1120, 1
        %v1363 = vsel %vm1352, %v1360, %v1362
        %v1364 = vrot.slane %v1121, 1
        %v1365 = vsel %vm1352, %v1362, %v1364
        %v1366 = vrot.slane %v1122, 1
        %v1367 = vsel %vm1352, %v1364, %v1366
        %v1368 = vrot.slane %v1123, 1
        %v1369 = vsel %vm1352, %v1366, %v1368
        %v1370 = vrot.slane %v1124, 1
        %v1371 = vsel %vm1352, %v1368, %v1370
        %v1372 = vrot.slane %v1125, 1
        %v1373 = vsel %vm1352, %v1370, %v1372
        %v1374 = vrot.slane %v1126, 1
        %v1375 = vsel %vm1352, %v1372, %v1374
        %v1376 = vrot.slane %v1127, 1
        %v1377 = vsel %vm1352, %v1374, %v1376
        %v1378 = vrot.slane %v1128, 1
        %v1379 = vsel %vm1352, %v1376, %v1378
        %v1380 = vrot.slane %v1129, 1
        %v1381 = vsel %vm1352, %v1378, %v1380
        %v1382 = vrot.slane %v1130, 1
        %v1383 = vsel %vm1352, %v1380, %v1382
        %v1384 = vrot.slane %v1131, 1
        %v1385 = vsel %vm1352, %v1382, %v1384
        %v1386 = vrot.slane %v1132, 1
        %v1387 = vsel %vm1352, %v1384, %v1386
        %v1388 = vrot.slane %v1133, 1
        %v1389 = vsel %vm1352, %v1386, %v1388
        %v1390 = vrot.slane %v1134, 1
        %v1391 = vsel %vm1352, %v1388, %v1390
        %v1392 = vrot.slane %v1138, 1
        %v1393 = vsel %vm1352, %v1390, %v1392
        %1394 = vrot.lane.b32.xlu0 %v1355, 32
        %v1395 = vpop.permute.xlu0 %1394
        %1396 = vrot.lane.b32.xlu0 %v1357, 32
        %v1397 = vpop.permute.xlu0 %1396
        %1398 = vrot.lane.b32.xlu0 %v1359, 32
        %v1399 = vpop.permute.xlu0 %1398
        %1400 = vrot.lane.b32.xlu0 %v1361, 32
        %v1401 = vpop.permute.xlu0 %1400
        %1402 = vrot.lane.b32.xlu0 %v1363, 32
        %v1403 = vpop.permute.xlu0 %1402
        %1404 = vrot.lane.b32.xlu0 %v1365, 32
        %v1405 = vpop.permute.xlu0 %1404
        %1406 = vrot.lane.b32.xlu0 %v1367, 32
        %v1407 = vpop.permute.xlu0 %1406
        %1408 = vrot.lane.b32.xlu0 %v1369, 32
        %v1409 = vpop.permute.xlu0 %1408
        %1410 = vrot.lane.b32.xlu0 %v1371, 32
        %v1411 = vpop.permute.xlu0 %1410
        %1412 = vrot.lane.b32.xlu0 %v1373, 32
        %v1413 = vpop.permute.xlu0 %1412
        %1414 = vrot.lane.b32.xlu0 %v1375, 32
        %v1415 = vpop.permute.xlu0 %1414
        %1416 = vrot.lane.b32.xlu0 %v1377, 32
        %v1417 = vpop.permute.xlu0 %1416
        %1418 = vrot.lane.b32.xlu0 %v1379, 32
        %v1419 = vpop.permute.xlu0 %1418
        %1420 = vrot.lane.b32.xlu0 %v1381, 32
        %v1421 = vpop.permute.xlu0 %1420
        %1422 = vrot.lane.b32.xlu0 %v1383, 32
        %v1423 = vpop.permute.xlu0 %1422
        %1424 = vrot.lane.b32.xlu0 %v1385, 32
        %v1425 = vpop.permute.xlu0 %1424
        %1426 = vrot.lane.b32.xlu0 %v1387, 32
        %v1427 = vpop.permute.xlu0 %1426
        %1428 = vrot.lane.b32.xlu0 %v1389, 32
        %v1429 = vpop.permute.xlu0 %1428
        %1430 = vrot.lane.b32.xlu0 %v1391, 32
        %v1431 = vpop.permute.xlu0 %1430
        %1432 = vrot.lane.b32.xlu0 %v1393, 32
        %v1433 = vpop.permute.xlu0 %1432
        %1434 = vrot.lane.b32.xlu0 %v1392, 32
        %v1435 = vpop.permute.xlu0 %1434
        %v1440 = vunpack.c.l.b16 %v1022
        %v1441 = vunpack.c.l.b16 %v1023
        %v1442 = vunpack.c.l.b16 %v1024
        %v1443 = vunpack.c.l.b16 %v1025
        %v1444 = vpack.c.b16 %v1077, %v1440
        %v1445 = vpack.c.b16 %v1442, %v1441
        %v1446 = vpack.c.b16 %v1443, %v1443
        %v1447 = vrot.slane %v1444, 1
        %v1448 = vsel %vm1352, %v1447, %v1356
        %v1449 = vrot.slane %v1445, 1
        %v1450 = vsel %vm1352, %v1390, %v1449
        %v1451 = vrot.slane %v1446, 1
        %v1452 = vsel %vm1352, %v1449, %v1451
        %1453 = vrot.lane.b32.xlu0 %v1448, 48
        %v1454 = vpop.permute.xlu0 %1453
        %1455 = vrot.lane.b32.xlu0 %v1359, 48
        %v1456 = vpop.permute.xlu0 %1455
        %1457 = vrot.lane.b32.xlu0 %v1361, 48
        %v1458 = vpop.permute.xlu0 %1457
        %1459 = vrot.lane.b32.xlu0 %v1363, 48
        %v1460 = vpop.permute.xlu0 %1459
        %1461 = vrot.lane.b32.xlu0 %v1365, 48
        %v1462 = vpop.permute.xlu0 %1461
        %1463 = vrot.lane.b32.xlu0 %v1367, 48
        %v1464 = vpop.permute.xlu0 %1463
        %1465 = vrot.lane.b32.xlu0 %v1369, 48
        %v1466 = vpop.permute.xlu0 %1465
        %1467 = vrot.lane.b32.xlu0 %v1371, 48
        %v1468 = vpop.permute.xlu0 %1467
        %1469 = vrot.lane.b32.xlu0 %v1373, 48
        %v1470 = vpop.permute.xlu0 %1469
        %1471 = vrot.lane.b32.xlu0 %v1375, 48
        %v1472 = vpop.permute.xlu0 %1471
        %1473 = vrot.lane.b32.xlu0 %v1377, 48
        %v1474 = vpop.permute.xlu0 %1473
        %1475 = vrot.lane.b32.xlu0 %v1379, 48
        %v1476 = vpop.permute.xlu0 %1475
        %1477 = vrot.lane.b32.xlu0 %v1381, 48
        %v1478 = vpop.permute.xlu0 %1477
        %1479 = vrot.lane.b32.xlu0 %v1383, 48
        %v1480 = vpop.permute.xlu0 %1479
        %1481 = vrot.lane.b32.xlu0 %v1385, 48
        %v1482 = vpop.permute.xlu0 %1481
        %1483 = vrot.lane.b32.xlu0 %v1387, 48
        %v1484 = vpop.permute.xlu0 %1483
        %1485 = vrot.lane.b32.xlu0 %v1389, 48
        %v1486 = vpop.permute.xlu0 %1485
        %1487 = vrot.lane.b32.xlu0 %v1391, 48
        %v1488 = vpop.permute.xlu0 %1487
        %1489 = vrot.lane.b32.xlu0 %v1450, 48
        %v1490 = vpop.permute.xlu0 %1489
        %1491 = vrot.lane.b32.xlu0 %v1452, 48
        %v1492 = vpop.permute.xlu0 %1491
        %1493 = vrot.lane.b32.xlu0 %v1451, 48
        %v1494 = vpop.permute.xlu0 %1493
        %v1496 = vunpack.c.l.b16 %v1026
        %v1497 = vpack.c.b16 %v1496, %v1496
        %vm1498 = vsmask.f32 6400
        %v1500 = vshrl.u32 %v1444, 16
        %v1502 = vrot.slane %v1500, 1
        %v1503 = vshll.u32 %v1444, 16
        %v1505 = vrot.slane %v1503, 2
        %v1506 = vor.u32 %v1502, %v1505
        %v1507 = vrot.slane %v1160, 1
        %v1508 = vrot.slane %v1156, 2
        %v1509 = vor.u32 %v1507, %v1508
        %v1510 = vsel %vm1498, %v1506, %v1509
        %v1511 = vrot.slane %v1168, 1
        %v1512 = vrot.slane %v1164, 2
        %v1513 = vor.u32 %v1511, %v1512
        %v1514 = vsel %vm1498, %v1509, %v1513
        %v1515 = vrot.slane %v1176, 1
        %v1516 = vrot.slane %v1172, 2
        %v1517 = vor.u32 %v1515, %v1516
        %v1518 = vsel %vm1498, %v1513, %v1517
        %v1519 = vrot.slane %v1184, 1
        %v1520 = vrot.slane %v1180, 2
        %v1521 = vor.u32 %v1519, %v1520
        %v1522 = vsel %vm1498, %v1517, %v1521
        %v1523 = vrot.slane %v1192, 1
        %v1524 = vrot.slane %v1188, 2
        %v1525 = vor.u32 %v1523, %v1524
        %v1526 = vsel %vm1498, %v1521, %v1525
        %v1527 = vrot.slane %v1200, 1
        %v1528 = vrot.slane %v1196, 2
        %v1529 = vor.u32 %v1527, %v1528
        %v1530 = vsel %vm1498, %v1525, %v1529
        %v1531 = vrot.slane %v1208, 1
        %v1532 = vrot.slane %v1204, 2
        %v1533 = vor.u32 %v1531, %v1532
        %v1534 = vsel %vm1498, %v1529, %v1533
        %v1535 = vrot.slane %v1216, 1
        %v1536 = vrot.slane %v1212, 2
        %v1537 = vor.u32 %v1535, %v1536
        %v1538 = vsel %vm1498, %v1533, %v1537
        %v1539 = vrot.slane %v1224, 1
        %v1540 = vrot.slane %v1220, 2
        %v1541 = vor.u32 %v1539, %v1540
        %v1542 = vsel %vm1498, %v1537, %v1541
        %v1543 = vrot.slane %v1232, 1
        %v1544 = vrot.slane %v1228, 2
        %v1545 = vor.u32 %v1543, %v1544
        %v1546 = vsel %vm1498, %v1541, %v1545
        %v1547 = vrot.slane %v1240, 1
        %v1548 = vrot.slane %v1236, 2
        %v1549 = vor.u32 %v1547, %v1548
        %v1550 = vsel %vm1498, %v1545, %v1549
        %v1551 = vrot.slane %v1248, 1
        %v1552 = vrot.slane %v1244, 2
        %v1553 = vor.u32 %v1551, %v1552
        %v1554 = vsel %vm1498, %v1549, %v1553
        %v1555 = vrot.slane %v1256, 1
        %v1556 = vrot.slane %v1252, 2
        %v1557 = vor.u32 %v1555, %v1556
        %v1558 = vsel %vm1498, %v1553, %v1557
        %v1559 = vrot.slane %v1264, 1
        %v1560 = vrot.slane %v1260, 2
        %v1561 = vor.u32 %v1559, %v1560
        %v1562 = vsel %vm1498, %v1557, %v1561
        %v1563 = vrot.slane %v1272, 1
        %v1564 = vrot.slane %v1268, 2
        %v1565 = vor.u32 %v1563, %v1564
        %v1566 = vsel %vm1498, %v1561, %v1565
        %v1567 = vrot.slane %v1280, 1
        %v1568 = vrot.slane %v1276, 2
        %v1569 = vor.u32 %v1567, %v1568
        %v1570 = vsel %vm1498, %v1565, %v1569
        %v1571 = vrot.slane %v1288, 1
        %v1572 = vrot.slane %v1284, 2
        %v1573 = vor.u32 %v1571, %v1572
        %v1574 = vsel %vm1498, %v1569, %v1573
        %v1575 = vrot.slane %v1296, 1
        %v1576 = vrot.slane %v1292, 2
        %v1577 = vor.u32 %v1575, %v1576
        %v1578 = vsel %vm1498, %v1573, %v1577
        %v1580 = vshrl.u32 %v1445, 16
        %v1582 = vrot.slane %v1580, 1
        %v1583 = vshll.u32 %v1445, 16
        %v1585 = vrot.slane %v1583, 2
        %v1586 = vor.u32 %v1582, %v1585
        %v1587 = vsel %vm1498, %v1577, %v1586
        %v1589 = vshrl.u32 %v1497, 16
        %v1591 = vrot.slane %v1589, 1
        %v1592 = vshll.u32 %v1497, 16
        %v1594 = vrot.slane %v1592, 2
        %v1595 = vor.u32 %v1591, %v1594
        %v1596 = vsel %vm1498, %v1586, %v1595
        %1597 = vrot.lane.b32.xlu0 %v1510, 64
        %v1598 = vpop.permute.xlu0 %1597
        %1599 = vrot.lane.b32.xlu0 %v1514, 64
        %v1600 = vpop.permute.xlu0 %1599
        %1601 = vrot.lane.b32.xlu0 %v1518, 64
        %v1602 = vpop.permute.xlu0 %1601
        %1603 = vrot.lane.b32.xlu0 %v1522, 64
        %v1604 = vpop.permute.xlu0 %1603
        %1605 = vrot.lane.b32.xlu0 %v1526, 64
        %v1606 = vpop.permute.xlu0 %1605
        %1607 = vrot.lane.b32.xlu0 %v1530, 64
        %v1608 = vpop.permute.xlu0 %1607
        %1609 = vrot.lane.b32.xlu0 %v1534, 64
        %v1610 = vpop.permute.xlu0 %1609
        %1611 = vrot.lane.b32.xlu0 %v1538, 64
        %v1612 = vpop.permute.xlu0 %1611
        %1613 = vrot.lane.b32.xlu0 %v1542, 64
        %v1614 = vpop.permute.xlu0 %1613
        %1615 = vrot.lane.b32.xlu0 %v1546, 64
        %v1616 = vpop.permute.xlu0 %1615
        %1617 = vrot.lane.b32.xlu0 %v1550, 64
        %v1618 = vpop.permute.xlu0 %1617
        %1619 = vrot.lane.b32.xlu0 %v1554, 64
        %v1620 = vpop.permute.xlu0 %1619
        %1621 = vrot.lane.b32.xlu0 %v1558, 64
        %v1622 = vpop.permute.xlu0 %1621
        %1623 = vrot.lane.b32.xlu0 %v1562, 64
        %v1624 = vpop.permute.xlu0 %1623
        %1625 = vrot.lane.b32.xlu0 %v1566, 64
        %v1626 = vpop.permute.xlu0 %1625
        %1627 = vrot.lane.b32.xlu0 %v1570, 64
        %v1628 = vpop.permute.xlu0 %1627
        %1629 = vrot.lane.b32.xlu0 %v1574, 64
        %v1630 = vpop.permute.xlu0 %1629
        %1631 = vrot.lane.b32.xlu0 %v1578, 64
        %v1632 = vpop.permute.xlu0 %1631
        %1633 = vrot.lane.b32.xlu0 %v1587, 64
        %v1634 = vpop.permute.xlu0 %1633
        %1635 = vrot.lane.b32.xlu0 %v1596, 64
        %v1636 = vpop.permute.xlu0 %1635
        %1637 = vrot.lane.b32.xlu0 %v1595, 64
        %v1638 = vpop.permute.xlu0 %1637
        %v1640 = vunpack.c.l.b16 %v1027
        %v1641 = vpack.c.b16 %v1077, %v1640
        %vm1642 = vcmask 1045504
        %v1643 = vrot.slane %v1641, 2
        %v1644 = vrot.slane %v1117, 2
        %v1645 = vsel %vm1642, %v1643, %v1644
        %v1646 = vrot.slane %v1118, 2
        %v1647 = vsel %vm1642, %v1644, %v1646
        %v1648 = vrot.slane %v1119, 2
        %v1649 = vsel %vm1642, %v1646, %v1648
        %v1650 = vrot.slane %v1120, 2
        %v1651 = vsel %vm1642, %v1648, %v1650
        %v1652 = vrot.slane %v1121, 2
        %v1653 = vsel %vm1642, %v1650, %v1652
        %v1654 = vrot.slane %v1122, 2
        %v1655 = vsel %vm1642, %v1652, %v1654
        %v1656 = vrot.slane %v1123, 2
        %v1657 = vsel %vm1642, %v1654, %v1656
        %v1658 = vrot.slane %v1124, 2
        %v1659 = vsel %vm1642, %v1656, %v1658
        %v1660 = vrot.slane %v1125, 2
        %v1661 = vsel %vm1642, %v1658, %v1660
        %v1662 = vrot.slane %v1126, 2
        %v1663 = vsel %vm1642, %v1660, %v1662
        %v1664 = vrot.slane %v1127, 2
        %v1665 = vsel %vm1642, %v1662, %v1664
        %v1666 = vrot.slane %v1128, 2
        %v1667 = vsel %vm1642, %v1664, %v1666
        %v1668 = vrot.slane %v1129, 2
        %v1669 = vsel %vm1642, %v1666, %v1668
        %v1670 = vrot.slane %v1130, 2
        %v1671 = vsel %vm1642, %v1668, %v1670
        %v1672 = vrot.slane %v1131, 2
        %v1673 = vsel %vm1642, %v1670, %v1672
        %v1674 = vrot.slane %v1132, 2
        %v1675 = vsel %vm1642, %v1672, %v1674
        %v1676 = vrot.slane %v1133, 2
        %v1677 = vsel %vm1642, %v1674, %v1676
        %v1678 = vrot.slane %v1134, 2
        %v1679 = vsel %vm1642, %v1676, %v1678
        %v1680 = vrot.slane %v1445, 2
        %v1681 = vsel %vm1642, %v1678, %v1680
        %v1682 = vrot.slane %v1497, 2
        %v1683 = vsel %vm1642, %v1680, %v1682
        %1684 = vrot.lane.b32.xlu0 %v1645, 80
        %v1685 = vpop.permute.xlu0 %1684
        %1686 = vrot.lane.b32.xlu0 %v1647, 80
        %v1687 = vpop.permute.xlu0 %1686
        %1688 = vrot.lane.b32.xlu0 %v1649, 80
        %v1689 = vpop.permute.xlu0 %1688
        %1690 = vrot.lane.b32.xlu0 %v1651, 80
        %v1691 = vpop.permute.xlu0 %1690
        %1692 = vrot.lane.b32.xlu0 %v1653, 80
        %v1693 = vpop.permute.xlu0 %1692
        %1694 = vrot.lane.b32.xlu0 %v1655, 80
        %v1695 = vpop.permute.xlu0 %1694
        %1696 = vrot.lane.b32.xlu0 %v1657, 80
        %v1697 = vpop.permute.xlu0 %1696
        %1698 = vrot.lane.b32.xlu0 %v1659, 80
        %v1699 = vpop.permute.xlu0 %1698
        %1700 = vrot.lane.b32.xlu0 %v1661, 80
        %v1701 = vpop.permute.xlu0 %1700
        %1702 = vrot.lane.b32.xlu0 %v1663, 80
        %v1703 = vpop.permute.xlu0 %1702
        %1704 = vrot.lane.b32.xlu0 %v1665, 80
        %v1705 = vpop.permute.xlu0 %1704
        %1706 = vrot.lane.b32.xlu0 %v1667, 80
        %v1707 = vpop.permute.xlu0 %1706
        %1708 = vrot.lane.b32.xlu0 %v1669, 80
        %v1709 = vpop.permute.xlu0 %1708
        %1710 = vrot.lane.b32.xlu0 %v1671, 80
        %v1711 = vpop.permute.xlu0 %1710
        %1712 = vrot.lane.b32.xlu0 %v1673, 80
        %v1713 = vpop.permute.xlu0 %1712
        %1714 = vrot.lane.b32.xlu0 %v1675, 80
        %v1715 = vpop.permute.xlu0 %1714
        %1716 = vrot.lane.b32.xlu0 %v1677, 80
        %v1717 = vpop.permute.xlu0 %1716
        %1718 = vrot.lane.b32.xlu0 %v1679, 80
        %v1719 = vpop.permute.xlu0 %1718
        %1720 = vrot.lane.b32.xlu0 %v1681, 80
        %v1721 = vpop.permute.xlu0 %1720
        %1722 = vrot.lane.b32.xlu0 %v1683, 80
        %v1723 = vpop.permute.xlu0 %1722
        %1724 = vrot.lane.b32.xlu0 %v1682, 80
        %v1725 = vpop.permute.xlu0 %1724
        %v1729 = vunpack.c.l.b16 %v1028
        %v1730 = vunpack.c.l.b16 %v1029
        %v1731 = vunpack.c.l.b16 %v1030
        %v1732 = vpack.c.b16 %v1079, %v1729
        %v1733 = vpack.c.b16 %v1730, %v1496
        %v1734 = vpack.c.b16 %v1731, %v1731
        %v1735 = vrot.slane %v1732, 2
        %v1736 = vsel %vm1642, %v1735, %v1646
        %v1737 = vrot.slane %v1733, 2
        %v1738 = vsel %vm1642, %v1680, %v1737
        %v1739 = vrot.slane %v1734, 2
        %v1740 = vsel %vm1642, %v1737, %v1739
        %1741 = vrot.lane.b32.xlu0 %v1736, 96
        %v1742 = vpop.permute.xlu0 %1741
        %1743 = vrot.lane.b32.xlu0 %v1649, 96
        %v1744 = vpop.permute.xlu0 %1743
        %1745 = vrot.lane.b32.xlu0 %v1651, 96
        %v1746 = vpop.permute.xlu0 %1745
        %1747 = vrot.lane.b32.xlu0 %v1653, 96
        %v1748 = vpop.permute.xlu0 %1747
        %1749 = vrot.lane.b32.xlu0 %v1655, 96
        %v1750 = vpop.permute.xlu0 %1749
        %1751 = vrot.lane.b32.xlu0 %v1657, 96
        %v1752 = vpop.permute.xlu0 %1751
        %1753 = vrot.lane.b32.xlu0 %v1659, 96
        %v1754 = vpop.permute.xlu0 %1753
        %1755 = vrot.lane.b32.xlu0 %v1661, 96
        %v1756 = vpop.permute.xlu0 %1755
        %1757 = vrot.lane.b32.xlu0 %v1663, 96
        %v1758 = vpop.permute.xlu0 %1757
        %1759 = vrot.lane.b32.xlu0 %v1665, 96
        %v1760 = vpop.permute.xlu0 %1759
        %1761 = vrot.lane.b32.xlu0 %v1667, 96
        %v1762 = vpop.permute.xlu0 %1761
        %1763 = vrot.lane.b32.xlu0 %v1669, 96
        %v1764 = vpop.permute.xlu0 %1763
        %1765 = vrot.lane.b32.xlu0 %v1671, 96
        %v1766 = vpop.permute.xlu0 %1765
        %1767 = vrot.lane.b32.xlu0 %v1673, 96
        %v1768 = vpop.permute.xlu0 %1767
        %1769 = vrot.lane.b32.xlu0 %v1675, 96
        %v1770 = vpop.permute.xlu0 %1769
        %1771 = vrot.lane.b32.xlu0 %v1677, 96
        %v1772 = vpop.permute.xlu0 %1771
        %1773 = vrot.lane.b32.xlu0 %v1679, 96
        %v1774 = vpop.permute.xlu0 %1773
        %1775 = vrot.lane.b32.xlu0 %v1681, 96
        %v1776 = vpop.permute.xlu0 %1775
        %1777 = vrot.lane.b32.xlu0 %v1738, 96
        %v1778 = vpop.permute.xlu0 %1777
        %1779 = vrot.lane.b32.xlu0 %v1740, 96
        %v1780 = vpop.permute.xlu0 %1779
        %1781 = vrot.lane.b32.xlu0 %v1739, 96
        %v1782 = vpop.permute.xlu0 %1781
        %v1784 = vunpack.c.l.b16 %v1031
        %v1785 = vpack.c.b16 %v1784, %v1731
        %vm1786 = vsmask.f32 5376
        %v1788 = vshrl.u32 %v1732, 16
        %v1790 = vrot.slane %v1788, 2
        %v1791 = vshll.u32 %v1732, 16
        %v1793 = vrot.slane %v1791, 3
        %v1794 = vor.u32 %v1790, %v1793
        %v1795 = vrot.slane %v1168, 2
        %v1796 = vrot.slane %v1164, 3
        %v1797 = vor.u32 %v1795, %v1796
        %v1798 = vsel %vm1786, %v1794, %v1797
        %v1799 = vrot.slane %v1176, 2
        %v1800 = vrot.slane %v1172, 3
        %v1801 = vor.u32 %v1799, %v1800
        %v1802 = vsel %vm1786, %v1797, %v1801
        %v1803 = vrot.slane %v1184, 2
        %v1804 = vrot.slane %v1180, 3
        %v1805 = vor.u32 %v1803, %v1804
        %v1806 = vsel %vm1786, %v1801, %v1805
        %v1807 = vrot.slane %v1192, 2
        %v1808 = vrot.slane %v1188, 3
        %v1809 = vor.u32 %v1807, %v1808
        %v1810 = vsel %vm1786, %v1805, %v1809
        %v1811 = vrot.slane %v1200, 2
        %v1812 = vrot.slane %v1196, 3
        %v1813 = vor.u32 %v1811, %v1812
        %v1814 = vsel %vm1786, %v1809, %v1813
        %v1815 = vrot.slane %v1208, 2
        %v1816 = vrot.slane %v1204, 3
        %v1817 = vor.u32 %v1815, %v1816
        %v1818 = vsel %vm1786, %v1813, %v1817
        %v1819 = vrot.slane %v1216, 2
        %v1820 = vrot.slane %v1212, 3
        %v1821 = vor.u32 %v1819, %v1820
        %v1822 = vsel %vm1786, %v1817, %v1821
        %v1823 = vrot.slane %v1224, 2
        %v1824 = vrot.slane %v1220, 3
        %v1825 = vor.u32 %v1823, %v1824
        %v1826 = vsel %vm1786, %v1821, %v1825
        %v1827 = vrot.slane %v1232, 2
        %v1828 = vrot.slane %v1228, 3
        %v1829 = vor.u32 %v1827, %v1828
        %v1830 = vsel %vm1786, %v1825, %v1829
        %v1831 = vrot.slane %v1240, 2
        %v1832 = vrot.slane %v1236, 3
        %v1833 = vor.u32 %v1831, %v1832
        %v1834 = vsel %vm1786, %v1829, %v1833
        %v1835 = vrot.slane %v1248, 2
        %v1836 = vrot.slane %v1244, 3
        %v1837 = vor.u32 %v1835, %v1836
        %v1838 = vsel %vm1786, %v1833, %v1837
        %v1839 = vrot.slane %v1256, 2
        %v1840 = vrot.slane %v1252, 3
        %v1841 = vor.u32 %v1839, %v1840
        %v1842 = vsel %vm1786, %v1837, %v1841
        %v1843 = vrot.slane %v1264, 2
        %v1844 = vrot.slane %v1260, 3
        %v1845 = vor.u32 %v1843, %v1844
        %v1846 = vsel %vm1786, %v1841, %v1845
        %v1847 = vrot.slane %v1272, 2
        %v1848 = vrot.slane %v1268, 3
        %v1849 = vor.u32 %v1847, %v1848
        %v1850 = vsel %vm1786, %v1845, %v1849
        %v1851 = vrot.slane %v1280, 2
        %v1852 = vrot.slane %v1276, 3
        %v1853 = vor.u32 %v1851, %v1852
        %v1854 = vsel %vm1786, %v1849, %v1853
        %v1855 = vrot.slane %v1288, 2
        %v1856 = vrot.slane %v1284, 3
        %v1857 = vor.u32 %v1855, %v1856
        %v1858 = vsel %vm1786, %v1853, %v1857
        %v1859 = vrot.slane %v1296, 2
        %v1860 = vrot.slane %v1292, 3
        %v1861 = vor.u32 %v1859, %v1860
        %v1862 = vsel %vm1786, %v1857, %v1861
        %v1863 = vrot.slane %v1580, 2
        %v1864 = vrot.slane %v1583, 3
        %v1865 = vor.u32 %v1863, %v1864
        %v1866 = vsel %vm1786, %v1861, %v1865
        %v1868 = vshrl.u32 %v1733, 16
        %v1870 = vrot.slane %v1868, 2
        %v1871 = vshll.u32 %v1733, 16
        %v1873 = vrot.slane %v1871, 3
        %v1874 = vor.u32 %v1870, %v1873
        %v1875 = vsel %vm1786, %v1865, %v1874
        %v1877 = vshrl.u32 %v1785, 16
        %v1879 = vrot.slane %v1877, 2
        %v1880 = vshll.u32 %v1785, 16
        %v1882 = vrot.slane %v1880, 3
        %v1883 = vor.u32 %v1879, %v1882
        %v1884 = vsel %vm1786, %v1874, %v1883
        %1885 = vrot.lane.b32.xlu0 %v1798, 112
        %v1886 = vpop.permute.xlu0 %1885
        %1887 = vrot.lane.b32.xlu0 %v1802, 112
        %v1888 = vpop.permute.xlu0 %1887
        %1889 = vrot.lane.b32.xlu0 %v1806, 112
        %v1890 = vpop.permute.xlu0 %1889
        %1891 = vrot.lane.b32.xlu0 %v1810, 112
        %v1892 = vpop.permute.xlu0 %1891
        %1893 = vrot.lane.b32.xlu0 %v1814, 112
        %v1894 = vpop.permute.xlu0 %1893
        %1895 = vrot.lane.b32.xlu0 %v1818, 112
        %v1896 = vpop.permute.xlu0 %1895
        %1897 = vrot.lane.b32.xlu0 %v1822, 112
        %v1898 = vpop.permute.xlu0 %1897
        %1899 = vrot.lane.b32.xlu0 %v1826, 112
        %v1900 = vpop.permute.xlu0 %1899
        %1901 = vrot.lane.b32.xlu0 %v1830, 112
        %v1902 = vpop.permute.xlu0 %1901
        %1903 = vrot.lane.b32.xlu0 %v1834, 112
        %v1904 = vpop.permute.xlu0 %1903
        %1905 = vrot.lane.b32.xlu0 %v1838, 112
        %v1906 = vpop.permute.xlu0 %1905
        %1907 = vrot.lane.b32.xlu0 %v1842, 112
        %v1908 = vpop.permute.xlu0 %1907
        %1909 = vrot.lane.b32.xlu0 %v1846, 112
        %v1910 = vpop.permute.xlu0 %1909
        %1911 = vrot.lane.b32.xlu0 %v1850, 112
        %v1912 = vpop.permute.xlu0 %1911
        %1913 = vrot.lane.b32.xlu0 %v1854, 112
        %v1914 = vpop.permute.xlu0 %1913
        %1915 = vrot.lane.b32.xlu0 %v1858, 112
        %v1916 = vpop.permute.xlu0 %1915
        %1917 = vrot.lane.b32.xlu0 %v1862, 112
        %v1918 = vpop.permute.xlu0 %1917
        %1919 = vrot.lane.b32.xlu0 %v1866, 112
        %v1920 = vpop.permute.xlu0 %1919
        %1921 = vrot.lane.b32.xlu0 %v1875, 112
        %v1922 = vpop.permute.xlu0 %1921
        %1923 = vrot.lane.b32.xlu0 %v1884, 112
        %v1924 = vpop.permute.xlu0 %1923
        %1925 = vrot.lane.b32.xlu0 %v1883, 112
        %v1926 = vpop.permute.xlu0 %1925
        %v1928 = vunpack.c.l.b16 %v1032
        %v1929 = vpack.c.b16 %v1079, %v1928
        %vm1930 = vcmask 1044480
        %v1931 = vrot.slane %v1929, 3
        %v1932 = vrot.slane %v1118, 3
        %v1933 = vsel %vm1930, %v1931, %v1932
        %v1934 = vrot.slane %v1119, 3
        %v1935 = vsel %vm1930, %v1932, %v1934
        %v1936 = vrot.slane %v1120, 3
        %v1937 = vsel %vm1930, %v1934, %v1936
        %v1938 = vrot.slane %v1121, 3
        %v1939 = vsel %vm1930, %v1936, %v1938
        %v1940 = vrot.slane %v1122, 3
        %v1941 = vsel %vm1930, %v1938, %v1940
        %v1942 = vrot.slane %v1123, 3
        %v1943 = vsel %vm1930, %v1940, %v1942
        %v1944 = vrot.slane %v1124, 3
        %v1945 = vsel %vm1930, %v1942, %v1944
        %v1946 = vrot.slane %v1125, 3
        %v1947 = vsel %vm1930, %v1944, %v1946
        %v1948 = vrot.slane %v1126, 3
        %v1949 = vsel %vm1930, %v1946, %v1948
        %v1950 = vrot.slane %v1127, 3
        %v1951 = vsel %vm1930, %v1948, %v1950
        %v1952 = vrot.slane %v1128, 3
        %v1953 = vsel %vm1930, %v1950, %v1952
        %v1954 = vrot.slane %v1129, 3
        %v1955 = vsel %vm1930, %v1952, %v1954
        %v1956 = vrot.slane %v1130, 3
        %v1957 = vsel %vm1930, %v1954, %v1956
        %v1958 = vrot.slane %v1131, 3
        %v1959 = vsel %vm1930, %v1956, %v1958
        %v1960 = vrot.slane %v1132, 3
        %v1961 = vsel %vm1930, %v1958, %v1960
        %v1962 = vrot.slane %v1133, 3
        %v1963 = vsel %vm1930, %v1960, %v1962
        %v1964 = vrot.slane %v1134, 3
        %v1965 = vsel %vm1930, %v1962, %v1964
        %v1966 = vrot.slane %v1445, 3
        %v1967 = vsel %vm1930, %v1964, %v1966
        %v1968 = vrot.slane %v1733, 3
        %v1969 = vsel %vm1930, %v1966, %v1968
        %v1970 = vrot.slane %v1785, 3
        %v1971 = vsel %vm1930, %v1968, %v1970
        %vm1972 = vcmask 130048
        %v1974 = vsel %vm1972, %v1115, %v1308
        %v1976 = vsel %vm1972, %v1116, %v1310
        %v1978 = vsel %vm1972, %v1117, %v1312
        %v1980 = vsel %vm1972, %v1118, %v1314
        %v1982 = vsel %vm1972, %v1119, %v1316
        %v1984 = vsel %vm1972, %v1120, %v1318
        %v1986 = vsel %vm1972, %v1121, %v1320
        %v1988 = vsel %vm1972, %v1122, %v1322
        %v1990 = vsel %vm1972, %v1123, %v1324
        %v1992 = vsel %vm1972, %v1124, %v1326
        %v1994 = vsel %vm1972, %v1125, %v1328
        %v1996 = vsel %vm1972, %v1126, %v1330
        %v1998 = vsel %vm1972, %v1127, %v1332
        %v2000 = vsel %vm1972, %v1128, %v1334
        %v2002 = vsel %vm1972, %v1129, %v1336
        %v2004 = vsel %vm1972, %v1130, %v1338
        %v2006 = vsel %vm1972, %v1131, %v1340
        %v2008 = vsel %vm1972, %v1132, %v1342
        %v2010 = vsel %vm1972, %v1133, %v1344
        %v2012 = vsel %vm1972, %v1134, %v1346
        %v2015 = vsel %vm1972, %v1135, %v1348
        %v2017 = vsel %vm399, %v1974, %v1395
        %v2019 = vsel %vm399, %v1976, %v1397
        %v2021 = vsel %vm399, %v1978, %v1399
        %v2023 = vsel %vm399, %v1980, %v1401
        %v2025 = vsel %vm399, %v1982, %v1403
        %v2027 = vsel %vm399, %v1984, %v1405
        %v2029 = vsel %vm399, %v1986, %v1407
        %v2031 = vsel %vm399, %v1988, %v1409
        %v2033 = vsel %vm399, %v1990, %v1411
        %v2035 = vsel %vm399, %v1992, %v1413
        %v2037 = vsel %vm399, %v1994, %v1415
        %v2039 = vsel %vm399, %v1996, %v1417
        %v2041 = vsel %vm399, %v1998, %v1419
        %v2043 = vsel %vm399, %v2000, %v1421
        %v2045 = vsel %vm399, %v2002, %v1423
        %v2047 = vsel %vm399, %v2004, %v1425
        %v2049 = vsel %vm399, %v2006, %v1427
        %v2051 = vsel %vm399, %v2008, %v1429
        %v2053 = vsel %vm399, %v2010, %v1431
        %v2055 = vsel %vm399, %v2012, %v1433
        %v2057 = vsel %vm399, %v2015, %v1435
        %vm2058 = vcmask 392192
        %v2060 = vsel %vm2058, %v2017, %v1454
        %v2062 = vsel %vm2058, %v2019, %v1456
        %v2064 = vsel %vm2058, %v2021, %v1458
        %v2066 = vsel %vm2058, %v2023, %v1460
        %v2068 = vsel %vm2058, %v2025, %v1462
        %v2070 = vsel %vm2058, %v2027, %v1464
        %v2072 = vsel %vm2058, %v2029, %v1466
        %v2074 = vsel %vm2058, %v2031, %v1468
        %v2076 = vsel %vm2058, %v2033, %v1470
        %v2078 = vsel %vm2058, %v2035, %v1472
        %v2080 = vsel %vm2058, %v2037, %v1474
        %v2082 = vsel %vm2058, %v2039, %v1476
        %v2084 = vsel %vm2058, %v2041, %v1478
        %v2086 = vsel %vm2058, %v2043, %v1480
        %v2088 = vsel %vm2058, %v2045, %v1482
        %v2090 = vsel %vm2058, %v2047, %v1484
        %v2092 = vsel %vm2058, %v2049, %v1486
        %v2094 = vsel %vm2058, %v2051, %v1488
        %v2096 = vsel %vm2058, %v2053, %v1490
        %v2098 = vsel %vm2058, %v2055, %v1492
        %v2100 = vsel %vm2058, %v2057, %v1494
        %vm2101 = vcmask 523264
        %v2103 = vsel %vm2101, %v2060, %v1598
        %v2105 = vsel %vm2101, %v2062, %v1600
        %v2107 = vsel %vm2101, %v2064, %v1602
        %v2109 = vsel %vm2101, %v2066, %v1604
        %v2111 = vsel %vm2101, %v2068, %v1606
        %v2113 = vsel %vm2101, %v2070, %v1608
        %v2115 = vsel %vm2101, %v2072, %v1610
        %v2117 = vsel %vm2101, %v2074, %v1612
        %v2119 = vsel %vm2101, %v2076, %v1614
        %v2121 = vsel %vm2101, %v2078, %v1616
        %v2123 = vsel %vm2101, %v2080, %v1618
        %v2125 = vsel %vm2101, %v2082, %v1620
        %v2127 = vsel %vm2101, %v2084, %v1622
        %v2129 = vsel %vm2101, %v2086, %v1624
        %v2131 = vsel %vm2101, %v2088, %v1626
        %v2133 = vsel %vm2101, %v2090, %v1628
        %v2135 = vsel %vm2101, %v2092, %v1630
        %v2137 = vsel %vm2101, %v2094, %v1632
        %v2139 = vsel %vm2101, %v2096, %v1634
        %v2141 = vsel %vm2101, %v2098, %v1636
        %v2143 = vsel %vm2101, %v2100, %v1638
        %vm2144 = vcmask 654336
        %v2146 = vsel %vm2144, %v2103, %v1685
        %v2148 = vsel %vm2144, %v2105, %v1687
        %v2150 = vsel %vm2144, %v2107, %v1689
        %v2152 = vsel %vm2144, %v2109, %v1691
        %v2154 = vsel %vm2144, %v2111, %v1693
        %v2156 = vsel %vm2144, %v2113, %v1695
        %v2158 = vsel %vm2144, %v2115, %v1697
        %v2160 = vsel %vm2144, %v2117, %v1699
        %v2162 = vsel %vm2144, %v2119, %v1701
        %v2164 = vsel %vm2144, %v2121, %v1703
        %v2166 = vsel %vm2144, %v2123, %v1705
        %v2168 = vsel %vm2144, %v2125, %v1707
        %v2170 = vsel %vm2144, %v2127, %v1709
        %v2172 = vsel %vm2144, %v2129, %v1711
        %v2174 = vsel %vm2144, %v2131, %v1713
        %v2176 = vsel %vm2144, %v2133, %v1715
        %v2178 = vsel %vm2144, %v2135, %v1717
        %v2180 = vsel %vm2144, %v2137, %v1719
        %v2182 = vsel %vm2144, %v2139, %v1721
        %v2184 = vsel %vm2144, %v2141, %v1723
        %v2186 = vsel %vm2144, %v2143, %v1725
        %vm2187 = vcmask 785408
        %v2189 = vsel %vm2187, %v2146, %v1742
        %v2191 = vsel %vm2187, %v2148, %v1744
        %v2193 = vsel %vm2187, %v2150, %v1746
        %v2195 = vsel %vm2187, %v2152, %v1748
        %v2197 = vsel %vm2187, %v2154, %v1750
        %v2199 = vsel %vm2187, %v2156, %v1752
        %v2201 = vsel %vm2187, %v2158, %v1754
        %v2203 = vsel %vm2187, %v2160, %v1756
        %v2205 = vsel %vm2187, %v2162, %v1758
        %v2207 = vsel %vm2187, %v2164, %v1760
        %v2209 = vsel %vm2187, %v2166, %v1762
        %v2211 = vsel %vm2187, %v2168, %v1764
        %v2213 = vsel %vm2187, %v2170, %v1766
        %v2215 = vsel %vm2187, %v2172, %v1768
        %v2217 = vsel %vm2187, %v2174, %v1770
        %v2219 = vsel %vm2187, %v2176, %v1772
        %v2221 = vsel %vm2187, %v2178, %v1774
        %v2223 = vsel %vm2187, %v2180, %v1776
        %v2225 = vsel %vm2187, %v2182, %v1778
        %v2227 = vsel %vm2187, %v2184, %v1780
        %v2229 = vsel %vm2187, %v2186, %v1782
        %vm2230 = vcmask 916480
        %v2232 = vsel %vm2230, %v2189, %v1886
        %v2235 = vsel %vm2230, %v2191, %v1888
        %v2238 = vsel %vm2230, %v2193, %v1890
        %v2241 = vsel %vm2230, %v2195, %v1892
        %v2244 = vsel %vm2230, %v2197, %v1894
        %v2247 = vsel %vm2230, %v2199, %v1896
        %v2250 = vsel %vm2230, %v2201, %v1898
        %v2253 = vsel %vm2230, %v2203, %v1900
        %v2256 = vsel %vm2230, %v2205, %v1902
        %v2259 = vsel %vm2230, %v2207, %v1904
        %v2262 = vsel %vm2230, %v2209, %v1906
        %v2265 = vsel %vm2230, %v2211, %v1908
        %v2268 = vsel %vm2230, %v2213, %v1910
        %v2271 = vsel %vm2230, %v2215, %v1912
        %v2274 = vsel %vm2230, %v2217, %v1914
        %v2277 = vsel %vm2230, %v2219, %v1916
        %v2280 = vsel %vm2230, %v2221, %v1918
        %v2283 = vsel %vm2230, %v2223, %v1920
        %v2286 = vsel %vm2230, %v2225, %v1922
        %v2289 = vsel %vm2230, %v2227, %v1924
        %v2292 = vsel %vm2230, %v2229, %v1926
        %v2294 = vld [vmem:[%s2] sm:$0xf]
        %v2295 = vld [vmem:[%s2 + $0x4] sm:$0xf]
        %v2296 = vld [vmem:[%s2 + $0x8] sm:$0xf]
        %v2297 = vld [vmem:[%s2 + $0xc] sm:$0xf]
        %v2298 = vld [vmem:[%s2 + $0x10] sm:$0xf]
        %v2299 = vld [vmem:[%s2 + $0x14] sm:$0xf]
        %v2300 = vld [vmem:[%s2 + $0x18] sm:$0xf]
        %v2301 = vld [vmem:[%s2 + $0x1c] sm:$0xf]
        %v2302 = vld [vmem:[%s2 + $0x20] sm:$0xf]
        %v2303 = vld [vmem:[%s2 + $0x24] sm:$0xf]
        %v2304 = vld [vmem:[%s2 + $0x28] sm:$0xf]
        %v2305 = vld [vmem:[%s2 + $0x2c] sm:$0xf]
        %v2306 = vld [vmem:[%s2 + $0x30] sm:$0xf]
        %v2307 = vld [vmem:[%s2 + $0x34] sm:$0xf]
        %v2308 = vld [vmem:[%s2 + $0x38] sm:$0xf]
        %v2309 = vld [vmem:[%s2 + $0x3c] sm:$0xf]
        %v2310 = vld [vmem:[%s2 + $0x40] sm:$0xf]
        %v2311 = vld [vmem:[%s2 + $0x44] sm:$0xf]
        %v2330 = vunpack.c.l.b16 %v2294
        %v2331 = vunpack.c.l.b16 %v2295
        %v2332 = vunpack.c.l.b16 %v2296
        %v2333 = vunpack.c.l.b16 %v2297
        %v2334 = vunpack.c.l.b16 %v2298
        %v2335 = vunpack.c.l.b16 %v2299
        %v2336 = vunpack.c.l.b16 %v2300
        %v2337 = vunpack.c.l.b16 %v2301
        %v2338 = vunpack.c.l.b16 %v2302
        %v2339 = vunpack.c.l.b16 %v2303
        %v2340 = vunpack.c.l.b16 %v2304
        %v2341 = vunpack.c.l.b16 %v2305
        %v2342 = vunpack.c.l.b16 %v2306
        %v2343 = vunpack.c.l.b16 %v2307
        %v2344 = vunpack.c.l.b16 %v2308
        %v2345 = vunpack.c.l.b16 %v2309
        %v2346 = vunpack.c.l.b16 %v2310
        %v2347 = vunpack.c.l.b16 %v2311
        %v2348 = vpack.c.b16 %v2331, %v2330
        %v2349 = vpack.c.b16 %v2333, %v2332
        %v2350 = vpack.c.b16 %v2335, %v2334
        %v2351 = vpack.c.b16 %v2337, %v2336
        %v2352 = vpack.c.b16 %v2339, %v2338
        %v2353 = vpack.c.b16 %v2341, %v2340
        %v2354 = vpack.c.b16 %v2343, %v2342
        %v2355 = vpack.c.b16 %v2345, %v2344
        %v2356 = vpack.c.b16 %v2347, %v2346
        %v2367 = vsel %vm1972, %v1933, 0
        %v2370 = vsel %vm1972, %v1935, 0
        %v2373 = vsel %vm1972, %v1937, 0
        %v2376 = vsel %vm1972, %v1939, 0
        %v2379 = vsel %vm1972, %v1941, 0
        %v2382 = vsel %vm1972, %v1943, 0
        %v2385 = vsel %vm1972, %v1945, 0
        %v2388 = vsel %vm1972, %v1947, 0
        %v2391 = vsel %vm1972, %v1949, 0
        %v2394 = vsel %vm1972, %v1951, 0
        %v2397 = vsel %vm1972, %v1953, 0
        %v2400 = vsel %vm1972, %v1955, 0
        %v2403 = vsel %vm1972, %v1957, 0
        %v2406 = vsel %vm1972, %v1959, 0
        %v2409 = vsel %vm1972, %v1961, 0
        %v2412 = vsel %vm1972, %v1963, 0
        %v2415 = vsel %vm1972, %v1965, 0
        %v2418 = vsel %vm1972, %v1967, 0
        %v2421 = vsel %vm1972, %v1969, 0
        %v2424 = vsel %vm1972, %v1971, 0
        %v2427 = vsel %vm1972, %v1970, 0
        %2429 = vmatprep.subr.bf16.mxu0 0
        %2430 = vmatpush1.bf16.msra.mxu0 %v2355
        %2431 = vmatprep.subr.bf16.mxu0 0
        %2432 = vmatpush1.bf16.msra.mxu0 %v2354
        %2433 = vmatprep.subr.bf16.mxu0 0
        %2434 = vmatpush1.bf16.msra.mxu0 %v2353
        %2435 = vmatprep.subr.bf16.mxu0 0
        %2436 = vmatpush1.bf16.msra.mxu0 %v2352
        %2437 = vmatprep.subr.bf16.mxu0 0
        %2438 = vmatpush1.bf16.msra.mxu0 %v2351
        %2439 = vmatprep.subr.bf16.mxu0 0
        %2440 = vmatpush1.bf16.msra.mxu0 %v2350
        %2441 = vmatprep.subr.bf16.mxu0 0
        %2442 = vmatpush1.bf16.msra.mxu0 %v2349
        %2443 = vmatprep.subr.bf16.mxu0 0
        %2444 = vmatpush1.bf16.msra.mxu0 %v2348
        %2445 = vmatprep.subr.bf16.mxu0 0
        %2446 = vmatpush2.bf16.msra.mxu0 0
        %2447 = vmatprep.subr.bf16.mxu0 0
        %2448 = vmatpush2.bf16.msra.mxu0 0
        %2449 = vmatprep.subr.bf16.mxu0 0
        %2450 = vmatpush2.bf16.msra.mxu0 0
        %2451 = vmatprep.subr.bf16.mxu0 0
        %2452 = vmatpush2.bf16.msra.mxu0 0
        %2453 = vmatprep.subr.bf16.mxu0 0
        %2454 = vmatpush2.bf16.msra.mxu0 0
        %2455 = vmatprep.subr.bf16.mxu0 0
        %2456 = vmatpush2.bf16.msra.mxu0 0
        %2457 = vmatprep.subr.bf16.mxu0 0
        %2458 = vmatpush2.bf16.msra.mxu0 0
        %2459 = vmatprep.subr.bf16.mxu0 0
        %2460 = vmatpush2.bf16.msra.mxu0 %v2356
        %2461 = vmatprep.mubr.bf16.mxu0 %v2367
        %2462 = vmatmul.mubr.bf16.gmra.mxu0 %v2232
        %v2463 = vpop.f32.mrf.mxu0
        %v2464 = vpop.f32.mrf.mxu0
        %v2465 = vpop.f32.mrf.mxu0
        %v2466 = vpop.f32.mrf.mxu0
        %2467 = vmatprep.mubr.bf16.mxu0 %v2370
        %2468 = vmatmul.mubr.bf16.gmra.mxu0 %v2235
        %v2469 = vpop.f32.mrf.mxu0
        %v2470 = vadd.f32 0.0, %v2469
        %v2471 = vpop.f32.mrf.mxu0
        %v2472 = vpop.f32.mrf.mxu0
        %v2473 = vadd.f32 0.0, %v2472
        %v2474 = vpop.f32.mrf.mxu0
        %2475 = vmatprep.mubr.bf16.mxu0 %v2373
        %2476 = vmatmul.mubr.bf16.gmra.mxu0 %v2238
        %v2477 = vpop.f32.mrf.mxu0
        %v2478 = vadd.f32 0.0, %v2477
        %v2479 = vpop.f32.mrf.mxu0
        %v2480 = vpop.f32.mrf.mxu0
        %v2481 = vadd.f32 0.0, %v2480
        %v2482 = vpop.f32.mrf.mxu0
        %2483 = vmatprep.mubr.bf16.mxu0 %v2376
        %2484 = vmatmul.mubr.bf16.gmra.mxu0 %v2241
        %v2485 = vpop.f32.mrf.mxu0
        %v2486 = vadd.f32 0.0, %v2485
        %v2487 = vpop.f32.mrf.mxu0
        %v2488 = vpop.f32.mrf.mxu0
        %v2489 = vadd.f32 0.0, %v2488
        %v2490 = vpop.f32.mrf.mxu0
        %2491 = vmatprep.mubr.bf16.mxu0 %v2379
        %2492 = vmatmul.mubr.bf16.gmra.mxu0 %v2244
        %v2493 = vpop.f32.mrf.mxu0
        %v2494 = vadd.f32 0.0, %v2493
        %v2495 = vpop.f32.mrf.mxu0
        %v2496 = vpop.f32.mrf.mxu0
        %v2497 = vadd.f32 0.0, %v2496
        %v2498 = vpop.f32.mrf.mxu0
        %2499 = vmatprep.mubr.bf16.mxu0 %v2382
        %2500 = vmatmul.mubr.bf16.gmra.mxu0 %v2247
        %v2501 = vpop.f32.mrf.mxu0
        %v2502 = vadd.f32 0.0, %v2501
        %v2503 = vpop.f32.mrf.mxu0
        %v2504 = vpop.f32.mrf.mxu0
        %v2505 = vadd.f32 0.0, %v2504
        %v2506 = vpop.f32.mrf.mxu0
        %2507 = vmatprep.mubr.bf16.mxu0 %v2385
        %2508 = vmatmul.mubr.bf16.gmra.mxu0 %v2250
        %v2509 = vpop.f32.mrf.mxu0
        %v2510 = vadd.f32 0.0, %v2509
        %v2511 = vpop.f32.mrf.mxu0
        %v2512 = vpop.f32.mrf.mxu0
        %v2513 = vadd.f32 0.0, %v2512
        %v2514 = vpop.f32.mrf.mxu0
        %2515 = vmatprep.mubr.bf16.mxu0 %v2388
        %2516 = vmatmul.mubr.bf16.gmra.mxu0 %v2253
        %v2517 = vpop.f32.mrf.mxu0
        %v2518 = vadd.f32 0.0, %v2517
        %v2519 = vpop.f32.mrf.mxu0
        %v2520 = vpop.f32.mrf.mxu0
        %v2521 = vadd.f32 0.0, %v2520
        %v2522 = vpop.f32.mrf.mxu0
        %2523 = vmatprep.mubr.bf16.mxu0 %v2391
        %2524 = vmatmul.mubr.bf16.gmra.mxu0 %v2256
        %v2525 = vpop.f32.mrf.mxu0
        %v2526 = vadd.f32 0.0, %v2525
        %v2527 = vpop.f32.mrf.mxu0
        %v2528 = vpop.f32.mrf.mxu0
        %v2529 = vadd.f32 0.0, %v2528
        %v2530 = vpop.f32.mrf.mxu0
        %2531 = vmatprep.mubr.bf16.mxu0 %v2394
        %2532 = vmatmul.mubr.bf16.gmra.mxu0 %v2259
        %v2533 = vpop.f32.mrf.mxu0
        %v2534 = vadd.f32 0.0, %v2533
        %v2535 = vpop.f32.mrf.mxu0
        %v2536 = vpop.f32.mrf.mxu0
        %v2537 = vadd.f32 0.0, %v2536
        %v2538 = vpop.f32.mrf.mxu0
        %2539 = vmatprep.mubr.bf16.mxu0 %v2397
        %2540 = vmatmul.mubr.bf16.gmra.mxu0 %v2262
        %v2541 = vpop.f32.mrf.mxu0
        %v2542 = vadd.f32 0.0, %v2541
        %v2543 = vpop.f32.mrf.mxu0
        %v2544 = vpop.f32.mrf.mxu0
        %v2545 = vadd.f32 0.0, %v2544
        %v2546 = vpop.f32.mrf.mxu0
        %2547 = vmatprep.mubr.bf16.mxu0 %v2400
        %2548 = vmatmul.mubr.bf16.gmra.mxu0 %v2265
        %v2549 = vpop.f32.mrf.mxu0
        %v2550 = vadd.f32 0.0, %v2549
        %v2551 = vpop.f32.mrf.mxu0
        %v2552 = vpop.f32.mrf.mxu0
        %v2553 = vadd.f32 0.0, %v2552
        %v2554 = vpop.f32.mrf.mxu0
        %2555 = vmatprep.mubr.bf16.mxu0 %v2403
        %2556 = vmatmul.mubr.bf16.gmra.mxu0 %v2268
        %v2557 = vpop.f32.mrf.mxu0
        %v2558 = vadd.f32 0.0, %v2557
        %v2559 = vpop.f32.mrf.mxu0
        %v2560 = vpop.f32.mrf.mxu0
        %v2561 = vadd.f32 0.0, %v2560
        %v2562 = vpop.f32.mrf.mxu0
        %2563 = vmatprep.mubr.bf16.mxu0 %v2406
        %2564 = vmatmul.mubr.bf16.gmra.mxu0 %v2271
        %v2565 = vpop.f32.mrf.mxu0
        %v2566 = vadd.f32 0.0, %v2565
        %v2567 = vpop.f32.mrf.mxu0
        %v2568 = vpop.f32.mrf.mxu0
        %v2569 = vadd.f32 0.0, %v2568
        %v2570 = vpop.f32.mrf.mxu0
        %2571 = vmatprep.mubr.bf16.mxu0 %v2409
        %2572 = vmatmul.mubr.bf16.gmra.mxu0 %v2274
        %v2573 = vpop.f32.mrf.mxu0
        %v2574 = vadd.f32 0.0, %v2573
        %v2575 = vpop.f32.mrf.mxu0
        %v2576 = vpop.f32.mrf.mxu0
        %v2577 = vadd.f32 0.0, %v2576
        %v2578 = vpop.f32.mrf.mxu0
        %2579 = vmatprep.mubr.bf16.mxu0 %v2412
        %2580 = vmatmul.mubr.bf16.gmra.mxu0 %v2277
        %v2581 = vpop.f32.mrf.mxu0
        %v2582 = vadd.f32 0.0, %v2581
        %v2583 = vpop.f32.mrf.mxu0
        %v2584 = vpop.f32.mrf.mxu0
        %v2585 = vadd.f32 0.0, %v2584
        %v2586 = vpop.f32.mrf.mxu0
        %2587 = vmatprep.mubr.bf16.mxu0 %v2415
        %2588 = vmatmul.mubr.bf16.gmra.mxu0 %v2280
        %v2589 = vpop.f32.mrf.mxu0
        %v2590 = vadd.f32 0.0, %v2589
        %v2591 = vpop.f32.mrf.mxu0
        %v2592 = vpop.f32.mrf.mxu0
        %v2593 = vadd.f32 0.0, %v2592
        %v2594 = vpop.f32.mrf.mxu0
        %2595 = vmatprep.mubr.bf16.mxu0 %v2418
        %2596 = vmatmul.mubr.bf16.gmra.mxu0 %v2283
        %v2597 = vpop.f32.mrf.mxu0
        %v2598 = vadd.f32 0.0, %v2597
        %v2599 = vpop.f32.mrf.mxu0
        %v2600 = vpop.f32.mrf.mxu0
        %v2601 = vadd.f32 0.0, %v2600
        %v2602 = vpop.f32.mrf.mxu0
        %2603 = vmatprep.mubr.bf16.mxu0 %v2421
        %2604 = vmatmul.mubr.bf16.gmra.mxu0 %v2286
        %v2605 = vpop.f32.mrf.mxu0
        %v2606 = vadd.f32 0.0, %v2605
        %v2607 = vpop.f32.mrf.mxu0
        %v2608 = vpop.f32.mrf.mxu0
        %v2609 = vadd.f32 0.0, %v2608
        %v2610 = vpop.f32.mrf.mxu0
        %2611 = vmatprep.mubr.bf16.mxu0 %v2424
        %2612 = vmatmul.mubr.bf16.gmra.mxu0 %v2289
        %v2613 = vpop.f32.mrf.mxu0
        %v2614 = vadd.f32 0.0, %v2613
        %v2615 = vpop.f32.mrf.mxu0
        %v2616 = vpop.f32.mrf.mxu0
        %v2617 = vpop.f32.mrf.mxu0
        %2618 = vmatprep.mubr.bf16.mxu0 %v2427
        %2619 = vmatmul.mubr.bf16.gmra.mxu0 %v2292
        %v2620 = vpop.f32.mrf.mxu0
        %v2621 = vpop.f32.mrf.mxu0
        %v2622 = vpop.f32.mrf.mxu0
        %v2623 = vpop.f32.mrf.mxu0
        %2624 = vdwg.mxu0
        %v2662 = vcombine.high %v2470, %v2470
        %v2664 = vunpack.c.l.s4 1983009808
        %v2665 = vunpack.c.0.s8 %v2664
        %v2666 = vlaneseq
        %v2667 = vshrl.u32 %v2666, 7
        %v2668 = vsub.s32 %v2665, %v2667
        %v2669 = vrot.slane %v2470, %v2668
        %v2671 = vunpack.c.l.s4 1983009808
        %v2672 = vunpack.c.0.s8 %v2671
        %v2673 = vlaneseq
        %v2674 = vshrl.u32 %v2673, 7
        %v2675 = vsub.s32 %v2672, %v2674
        %v2676 = vrot.slane %v2662, %v2675
        %v2677 = vcombine.high %v2669, %v2669
        %v2678 = vcombine.high %v2676, %v2676
        %v2679 = vcombine.high %v2473, %v2473
        %v2681 = vunpack.c.l.s4 1983009808
        %v2682 = vunpack.c.0.s8 %v2681
        %v2683 = vlaneseq
        %v2684 = vshrl.u32 %v2683, 7
        %v2685 = vsub.s32 %v2682, %v2684
        %v2686 = vrot.slane %v2473, %v2685
        %v2688 = vunpack.c.l.s4 1983009808
        %v2689 = vunpack.c.0.s8 %v2688
        %v2690 = vlaneseq
        %v2691 = vshrl.u32 %v2690, 7
        %v2692 = vsub.s32 %v2689, %v2691
        %v2693 = vrot.slane %v2679, %v2692
        %v2694 = vcombine.high %v2686, %v2686
        %v2695 = vcombine.high %v2693, %v2693
        %v2696 = vcombine.high %v2478, %v2478
        %v2698 = vunpack.c.l.s4 1983009808
        %v2699 = vunpack.c.0.s8 %v2698
        %v2700 = vlaneseq
        %v2701 = vshrl.u32 %v2700, 7
        %v2702 = vsub.s32 %v2699, %v2701
        %v2703 = vrot.slane %v2478, %v2702
        %v2705 = vunpack.c.l.s4 1983009808
        %v2706 = vunpack.c.0.s8 %v2705
        %v2707 = vlaneseq
        %v2708 = vshrl.u32 %v2707, 7
        %v2709 = vsub.s32 %v2706, %v2708
        %v2710 = vrot.slane %v2696, %v2709
        %v2711 = vcombine.high %v2703, %v2703
        %v2712 = vcombine.high %v2710, %v2710
        %v2713 = vcombine.high %v2481, %v2481
        %v2715 = vunpack.c.l.s4 1983009808
        %v2716 = vunpack.c.0.s8 %v2715
        %v2717 = vlaneseq
        %v2718 = vshrl.u32 %v2717, 7
        %v2719 = vsub.s32 %v2716, %v2718
        %v2720 = vrot.slane %v2481, %v2719
        %v2722 = vunpack.c.l.s4 1983009808
        %v2723 = vunpack.c.0.s8 %v2722
        %v2724 = vlaneseq
        %v2725 = vshrl.u32 %v2724, 7
        %v2726 = vsub.s32 %v2723, %v2725
        %v2727 = vrot.slane %v2713, %v2726
        %v2728 = vcombine.high %v2720, %v2720
        %v2729 = vcombine.high %v2727, %v2727
        %v2730 = vcombine.high %v2486, %v2486
        %v2732 = vunpack.c.l.s4 1983009808
        %v2733 = vunpack.c.0.s8 %v2732
        %v2734 = vlaneseq
        %v2735 = vshrl.u32 %v2734, 7
        %v2736 = vsub.s32 %v2733, %v2735
        %v2737 = vrot.slane %v2486, %v2736
        %v2739 = vunpack.c.l.s4 1983009808
        %v2740 = vunpack.c.0.s8 %v2739
        %v2741 = vlaneseq
        %v2742 = vshrl.u32 %v2741, 7
        %v2743 = vsub.s32 %v2740, %v2742
        %v2744 = vrot.slane %v2730, %v2743
        %v2745 = vcombine.high %v2737, %v2737
        %v2746 = vcombine.high %v2744, %v2744
        %v2747 = vcombine.high %v2489, %v2489
        %v2749 = vunpack.c.l.s4 1983009808
        %v2750 = vunpack.c.0.s8 %v2749
        %v2751 = vlaneseq
        %v2752 = vshrl.u32 %v2751, 7
        %v2753 = vsub.s32 %v2750, %v2752
        %v2754 = vrot.slane %v2489, %v2753
        %v2756 = vunpack.c.l.s4 1983009808
        %v2757 = vunpack.c.0.s8 %v2756
        %v2758 = vlaneseq
        %v2759 = vshrl.u32 %v2758, 7
        %v2760 = vsub.s32 %v2757, %v2759
        %v2761 = vrot.slane %v2747, %v2760
        %v2762 = vcombine.high %v2754, %v2754
        %v2763 = vcombine.high %v2761, %v2761
        %v2764 = vcombine.high %v2494, %v2494
        %v2766 = vunpack.c.l.s4 1983009808
        %v2767 = vunpack.c.0.s8 %v2766
        %v2768 = vlaneseq
        %v2769 = vshrl.u32 %v2768, 7
        %v2770 = vsub.s32 %v2767, %v2769
        %v2771 = vrot.slane %v2494, %v2770
        %v2773 = vunpack.c.l.s4 1983009808
        %v2774 = vunpack.c.0.s8 %v2773
        %v2775 = vlaneseq
        %v2776 = vshrl.u32 %v2775, 7
        %v2777 = vsub.s32 %v2774, %v2776
        %v2778 = vrot.slane %v2764, %v2777
        %v2779 = vcombine.high %v2771, %v2771
        %v2780 = vcombine.high %v2778, %v2778
        %v2781 = vcombine.high %v2497, %v2497
        %v2783 = vunpack.c.l.s4 1983009808
        %v2784 = vunpack.c.0.s8 %v2783
        %v2785 = vlaneseq
        %v2786 = vshrl.u32 %v2785, 7
        %v2787 = vsub.s32 %v2784, %v2786
        %v2788 = vrot.slane %v2497, %v2787
        %v2790 = vunpack.c.l.s4 1983009808
        %v2791 = vunpack.c.0.s8 %v2790
        %v2792 = vlaneseq
        %v2793 = vshrl.u32 %v2792, 7
        %v2794 = vsub.s32 %v2791, %v2793
        %v2795 = vrot.slane %v2781, %v2794
        %v2796 = vcombine.high %v2788, %v2788
        %v2797 = vcombine.high %v2795, %v2795
        %v2798 = vcombine.high %v2502, %v2502
        %v2800 = vunpack.c.l.s4 1983009808
        %v2801 = vunpack.c.0.s8 %v2800
        %v2802 = vlaneseq
        %v2803 = vshrl.u32 %v2802, 7
        %v2804 = vsub.s32 %v2801, %v2803
        %v2805 = vrot.slane %v2502, %v2804
        %v2807 = vunpack.c.l.s4 1983009808
        %v2808 = vunpack.c.0.s8 %v2807
        %v2809 = vlaneseq
        %v2810 = vshrl.u32 %v2809, 7
        %v2811 = vsub.s32 %v2808, %v2810
        %v2812 = vrot.slane %v2798, %v2811
        %v2813 = vcombine.high %v2805, %v2805
        %v2814 = vcombine.high %v2812, %v2812
        %v2815 = vcombine.high %v2505, %v2505
        %v2817 = vunpack.c.l.s4 1983009808
        %v2818 = vunpack.c.0.s8 %v2817
        %v2819 = vlaneseq
        %v2820 = vshrl.u32 %v2819, 7
        %v2821 = vsub.s32 %v2818, %v2820
        %v2822 = vrot.slane %v2505, %v2821
        %v2824 = vunpack.c.l.s4 1983009808
        %v2825 = vunpack.c.0.s8 %v2824
        %v2826 = vlaneseq
        %v2827 = vshrl.u32 %v2826, 7
        %v2828 = vsub.s32 %v2825, %v2827
        %v2829 = vrot.slane %v2815, %v2828
        %v2830 = vcombine.high %v2822, %v2822
        %v2831 = vcombine.high %v2829, %v2829
        %v2832 = vcombine.high %v2510, %v2510
        %v2834 = vunpack.c.l.s4 1983009808
        %v2835 = vunpack.c.0.s8 %v2834
        %v2836 = vlaneseq
        %v2837 = vshrl.u32 %v2836, 7
        %v2838 = vsub.s32 %v2835, %v2837
        %v2839 = vrot.slane %v2510, %v2838
        %v2841 = vunpack.c.l.s4 1983009808
        %v2842 = vunpack.c.0.s8 %v2841
        %v2843 = vlaneseq
        %v2844 = vshrl.u32 %v2843, 7
        %v2845 = vsub.s32 %v2842, %v2844
        %v2846 = vrot.slane %v2832, %v2845
        %v2847 = vcombine.high %v2839, %v2839
        %v2848 = vcombine.high %v2846, %v2846
        %v2849 = vcombine.high %v2513, %v2513
        %v2851 = vunpack.c.l.s4 1983009808
        %v2852 = vunpack.c.0.s8 %v2851
        %v2853 = vlaneseq
        %v2854 = vshrl.u32 %v2853, 7
        %v2855 = vsub.s32 %v2852, %v2854
        %v2856 = vrot.slane %v2513, %v2855
        %v2858 = vunpack.c.l.s4 1983009808
        %v2859 = vunpack.c.0.s8 %v2858
        %v2860 = vlaneseq
        %v2861 = vshrl.u32 %v2860, 7
        %v2862 = vsub.s32 %v2859, %v2861
        %v2863 = vrot.slane %v2849, %v2862
        %v2864 = vcombine.high %v2856, %v2856
        %v2865 = vcombine.high %v2863, %v2863
        %v2866 = vcombine.high %v2518, %v2518
        %v2868 = vunpack.c.l.s4 1983009808
        %v2869 = vunpack.c.0.s8 %v2868
        %v2870 = vlaneseq
        %v2871 = vshrl.u32 %v2870, 7
        %v2872 = vsub.s32 %v2869, %v2871
        %v2873 = vrot.slane %v2518, %v2872
        %v2875 = vunpack.c.l.s4 1983009808
        %v2876 = vunpack.c.0.s8 %v2875
        %v2877 = vlaneseq
        %v2878 = vshrl.u32 %v2877, 7
        %v2879 = vsub.s32 %v2876, %v2878
        %v2880 = vrot.slane %v2866, %v2879
        %v2881 = vcombine.high %v2873, %v2873
        %v2882 = vcombine.high %v2880, %v2880
        %v2883 = vcombine.high %v2521, %v2521
        %v2885 = vunpack.c.l.s4 1983009808
        %v2886 = vunpack.c.0.s8 %v2885
        %v2887 = vlaneseq
        %v2888 = vshrl.u32 %v2887, 7
        %v2889 = vsub.s32 %v2886, %v2888
        %v2890 = vrot.slane %v2521, %v2889
        %v2892 = vunpack.c.l.s4 1983009808
        %v2893 = vunpack.c.0.s8 %v2892
        %v2894 = vlaneseq
        %v2895 = vshrl.u32 %v2894, 7
        %v2896 = vsub.s32 %v2893, %v2895
        %v2897 = vrot.slane %v2883, %v2896
        %v2898 = vcombine.high %v2890, %v2890
        %v2899 = vcombine.high %v2897, %v2897
        %v2900 = vcombine.high %v2526, %v2526
        %v2902 = vunpack.c.l.s4 1983009808
        %v2903 = vunpack.c.0.s8 %v2902
        %v2904 = vlaneseq
        %v2905 = vshrl.u32 %v2904, 7
        %v2906 = vsub.s32 %v2903, %v2905
        %v2907 = vrot.slane %v2526, %v2906
        %v2909 = vunpack.c.l.s4 1983009808
        %v2910 = vunpack.c.0.s8 %v2909
        %v2911 = vlaneseq
        %v2912 = vshrl.u32 %v2911, 7
        %v2913 = vsub.s32 %v2910, %v2912
        %v2914 = vrot.slane %v2900, %v2913
        %v2915 = vcombine.high %v2907, %v2907
        %v2916 = vcombine.high %v2914, %v2914
        %v2917 = vcombine.high %v2529, %v2529
        %v2919 = vunpack.c.l.s4 1983009808
        %v2920 = vunpack.c.0.s8 %v2919
        %v2921 = vlaneseq
        %v2922 = vshrl.u32 %v2921, 7
        %v2923 = vsub.s32 %v2920, %v2922
        %v2924 = vrot.slane %v2529, %v2923
        %v2926 = vunpack.c.l.s4 1983009808
        %v2927 = vunpack.c.0.s8 %v2926
        %v2928 = vlaneseq
        %v2929 = vshrl.u32 %v2928, 7
        %v2930 = vsub.s32 %v2927, %v2929
        %v2931 = vrot.slane %v2917, %v2930
        %v2932 = vcombine.high %v2924, %v2924
        %v2933 = vcombine.high %v2931, %v2931
        %v2934 = vcombine.high %v2534, %v2534
        %v2936 = vunpack.c.l.s4 1983009808
        %v2937 = vunpack.c.0.s8 %v2936
        %v2938 = vlaneseq
        %v2939 = vshrl.u32 %v2938, 7
        %v2940 = vsub.s32 %v2937, %v2939
        %v2941 = vrot.slane %v2534, %v2940
        %v2943 = vunpack.c.l.s4 1983009808
        %v2944 = vunpack.c.0.s8 %v2943
        %v2945 = vlaneseq
        %v2946 = vshrl.u32 %v2945, 7
        %v2947 = vsub.s32 %v2944, %v2946
        %v2948 = vrot.slane %v2934, %v2947
        %v2949 = vcombine.high %v2941, %v2941
        %v2950 = vcombine.high %v2948, %v2948
        %v2951 = vcombine.high %v2537, %v2537
        %v2953 = vunpack.c.l.s4 1983009808
        %v2954 = vunpack.c.0.s8 %v2953
        %v2955 = vlaneseq
        %v2956 = vshrl.u32 %v2955, 7
        %v2957 = vsub.s32 %v2954, %v2956
        %v2958 = vrot.slane %v2537, %v2957
        %v2960 = vunpack.c.l.s4 1983009808
        %v2961 = vunpack.c.0.s8 %v2960
        %v2962 = vlaneseq
        %v2963 = vshrl.u32 %v2962, 7
        %v2964 = vsub.s32 %v2961, %v2963
        %v2965 = vrot.slane %v2951, %v2964
        %v2966 = vcombine.high %v2958, %v2958
        %v2967 = vcombine.high %v2965, %v2965
        %v2968 = vcombine.high %v2542, %v2542
        %v2970 = vunpack.c.l.s4 1983009808
        %v2971 = vunpack.c.0.s8 %v2970
        %v2972 = vlaneseq
        %v2973 = vshrl.u32 %v2972, 7
        %v2974 = vsub.s32 %v2971, %v2973
        %v2975 = vrot.slane %v2542, %v2974
        %v2977 = vunpack.c.l.s4 1983009808
        %v2978 = vunpack.c.0.s8 %v2977
        %v2979 = vlaneseq
        %v2980 = vshrl.u32 %v2979, 7
        %v2981 = vsub.s32 %v2978, %v2980
        %v2982 = vrot.slane %v2968, %v2981
        %v2983 = vcombine.high %v2975, %v2975
        %v2984 = vcombine.high %v2982, %v2982
        %v2985 = vcombine.high %v2545, %v2545
        %v2987 = vunpack.c.l.s4 1983009808
        %v2988 = vunpack.c.0.s8 %v2987
        %v2989 = vlaneseq
        %v2990 = vshrl.u32 %v2989, 7
        %v2991 = vsub.s32 %v2988, %v2990
        %v2992 = vrot.slane %v2545, %v2991
        %v2994 = vunpack.c.l.s4 1983009808
        %v2995 = vunpack.c.0.s8 %v2994
        %v2996 = vlaneseq
        %v2997 = vshrl.u32 %v2996, 7
        %v2998 = vsub.s32 %v2995, %v2997
        %v2999 = vrot.slane %v2985, %v2998
        %v3000 = vcombine.high %v2992, %v2992
        %v3001 = vcombine.high %v2999, %v2999
        %v3002 = vcombine.high %v2550, %v2550
        %v3004 = vunpack.c.l.s4 1983009808
        %v3005 = vunpack.c.0.s8 %v3004
        %v3006 = vlaneseq
        %v3007 = vshrl.u32 %v3006, 7
        %v3008 = vsub.s32 %v3005, %v3007
        %v3009 = vrot.slane %v2550, %v3008
        %v3011 = vunpack.c.l.s4 1983009808
        %v3012 = vunpack.c.0.s8 %v3011
        %v3013 = vlaneseq
        %v3014 = vshrl.u32 %v3013, 7
        %v3015 = vsub.s32 %v3012, %v3014
        %v3016 = vrot.slane %v3002, %v3015
        %v3017 = vcombine.high %v3009, %v3009
        %v3018 = vcombine.high %v3016, %v3016
        %v3019 = vcombine.high %v2553, %v2553
        %v3021 = vunpack.c.l.s4 1983009808
        %v3022 = vunpack.c.0.s8 %v3021
        %v3023 = vlaneseq
        %v3024 = vshrl.u32 %v3023, 7
        %v3025 = vsub.s32 %v3022, %v3024
        %v3026 = vrot.slane %v2553, %v3025
        %v3028 = vunpack.c.l.s4 1983009808
        %v3029 = vunpack.c.0.s8 %v3028
        %v3030 = vlaneseq
        %v3031 = vshrl.u32 %v3030, 7
        %v3032 = vsub.s32 %v3029, %v3031
        %v3033 = vrot.slane %v3019, %v3032
        %v3034 = vcombine.high %v3026, %v3026
        %v3035 = vcombine.high %v3033, %v3033
        %v3036 = vcombine.high %v2558, %v2558
        %v3038 = vunpack.c.l.s4 1983009808
        %v3039 = vunpack.c.0.s8 %v3038
        %v3040 = vlaneseq
        %v3041 = vshrl.u32 %v3040, 7
        %v3042 = vsub.s32 %v3039, %v3041
        %v3043 = vrot.slane %v2558, %v3042
        %v3045 = vunpack.c.l.s4 1983009808
        %v3046 = vunpack.c.0.s8 %v3045
        %v3047 = vlaneseq
        %v3048 = vshrl.u32 %v3047, 7
        %v3049 = vsub.s32 %v3046, %v3048
        %v3050 = vrot.slane %v3036, %v3049
        %v3051 = vcombine.high %v3043, %v3043
        %v3052 = vcombine.high %v3050, %v3050
        %v3053 = vcombine.high %v2561, %v2561
        %v3055 = vunpack.c.l.s4 1983009808
        %v3056 = vunpack.c.0.s8 %v3055
        %v3057 = vlaneseq
        %v3058 = vshrl.u32 %v3057, 7
        %v3059 = vsub.s32 %v3056, %v3058
        %v3060 = vrot.slane %v2561, %v3059
        %v3062 = vunpack.c.l.s4 1983009808
        %v3063 = vunpack.c.0.s8 %v3062
        %v3064 = vlaneseq
        %v3065 = vshrl.u32 %v3064, 7
        %v3066 = vsub.s32 %v3063, %v3065
        %v3067 = vrot.slane %v3053, %v3066
        %v3068 = vcombine.high %v3060, %v3060
        %v3069 = vcombine.high %v3067, %v3067
        %v3070 = vcombine.high %v2566, %v2566
        %v3072 = vunpack.c.l.s4 1983009808
        %v3073 = vunpack.c.0.s8 %v3072
        %v3074 = vlaneseq
        %v3075 = vshrl.u32 %v3074, 7
        %v3076 = vsub.s32 %v3073, %v3075
        %v3077 = vrot.slane %v2566, %v3076
        %v3079 = vunpack.c.l.s4 1983009808
        %v3080 = vunpack.c.0.s8 %v3079
        %v3081 = vlaneseq
        %v3082 = vshrl.u32 %v3081, 7
        %v3083 = vsub.s32 %v3080, %v3082
        %v3084 = vrot.slane %v3070, %v3083
        %v3085 = vcombine.high %v3077, %v3077
        %v3086 = vcombine.high %v3084, %v3084
        %v3087 = vcombine.high %v2569, %v2569
        %v3089 = vunpack.c.l.s4 1983009808
        %v3090 = vunpack.c.0.s8 %v3089
        %v3091 = vlaneseq
        %v3092 = vshrl.u32 %v3091, 7
        %v3093 = vsub.s32 %v3090, %v3092
        %v3094 = vrot.slane %v2569, %v3093
        %v3096 = vunpack.c.l.s4 1983009808
        %v3097 = vunpack.c.0.s8 %v3096
        %v3098 = vlaneseq
        %v3099 = vshrl.u32 %v3098, 7
        %v3100 = vsub.s32 %v3097, %v3099
        %v3101 = vrot.slane %v3087, %v3100
        %v3102 = vcombine.high %v3094, %v3094
        %v3103 = vcombine.high %v3101, %v3101
        %v3104 = vcombine.high %v2574, %v2574
        %v3106 = vunpack.c.l.s4 1983009808
        %v3107 = vunpack.c.0.s8 %v3106
        %v3108 = vlaneseq
        %v3109 = vshrl.u32 %v3108, 7
        %v3110 = vsub.s32 %v3107, %v3109
        %v3111 = vrot.slane %v2574, %v3110
        %v3113 = vunpack.c.l.s4 1983009808
        %v3114 = vunpack.c.0.s8 %v3113
        %v3115 = vlaneseq
        %v3116 = vshrl.u32 %v3115, 7
        %v3117 = vsub.s32 %v3114, %v3116
        %v3118 = vrot.slane %v3104, %v3117
        %v3119 = vcombine.high %v3111, %v3111
        %v3120 = vcombine.high %v3118, %v3118
        %v3121 = vcombine.high %v2577, %v2577
        %v3123 = vunpack.c.l.s4 1983009808
        %v3124 = vunpack.c.0.s8 %v3123
        %v3125 = vlaneseq
        %v3126 = vshrl.u32 %v3125, 7
        %v3127 = vsub.s32 %v3124, %v3126
        %v3128 = vrot.slane %v2577, %v3127
        %v3130 = vunpack.c.l.s4 1983009808
        %v3131 = vunpack.c.0.s8 %v3130
        %v3132 = vlaneseq
        %v3133 = vshrl.u32 %v3132, 7
        %v3134 = vsub.s32 %v3131, %v3133
        %v3135 = vrot.slane %v3121, %v3134
        %v3136 = vcombine.high %v3128, %v3128
        %v3137 = vcombine.high %v3135, %v3135
        %v3138 = vcombine.high %v2582, %v2582
        %v3140 = vunpack.c.l.s4 1983009808
        %v3141 = vunpack.c.0.s8 %v3140
        %v3142 = vlaneseq
        %v3143 = vshrl.u32 %v3142, 7
        %v3144 = vsub.s32 %v3141, %v3143
        %v3145 = vrot.slane %v2582, %v3144
        %v3147 = vunpack.c.l.s4 1983009808
        %v3148 = vunpack.c.0.s8 %v3147
        %v3149 = vlaneseq
        %v3150 = vshrl.u32 %v3149, 7
        %v3151 = vsub.s32 %v3148, %v3150
        %v3152 = vrot.slane %v3138, %v3151
        %v3153 = vcombine.high %v3145, %v3145
        %v3154 = vcombine.high %v3152, %v3152
        %v3155 = vcombine.high %v2585, %v2585
        %v3157 = vunpack.c.l.s4 1983009808
        %v3158 = vunpack.c.0.s8 %v3157
        %v3159 = vlaneseq
        %v3160 = vshrl.u32 %v3159, 7
        %v3161 = vsub.s32 %v3158, %v3160
        %v3162 = vrot.slane %v2585, %v3161
        %v3164 = vunpack.c.l.s4 1983009808
        %v3165 = vunpack.c.0.s8 %v3164
        %v3166 = vlaneseq
        %v3167 = vshrl.u32 %v3166, 7
        %v3168 = vsub.s32 %v3165, %v3167
        %v3169 = vrot.slane %v3155, %v3168
        %v3170 = vcombine.high %v3162, %v3162
        %v3171 = vcombine.high %v3169, %v3169
        %v3172 = vcombine.high %v2590, %v2590
        %v3174 = vunpack.c.l.s4 1983009808
        %v3175 = vunpack.c.0.s8 %v3174
        %v3176 = vlaneseq
        %v3177 = vshrl.u32 %v3176, 7
        %v3178 = vsub.s32 %v3175, %v3177
        %v3179 = vrot.slane %v2590, %v3178
        %v3181 = vunpack.c.l.s4 1983009808
        %v3182 = vunpack.c.0.s8 %v3181
        %v3183 = vlaneseq
        %v3184 = vshrl.u32 %v3183, 7
        %v3185 = vsub.s32 %v3182, %v3184
        %v3186 = vrot.slane %v3172, %v3185
        %v3187 = vcombine.high %v3179, %v3179
        %v3188 = vcombine.high %v3186, %v3186
        %v3189 = vcombine.high %v2593, %v2593
        %v3191 = vunpack.c.l.s4 1983009808
        %v3192 = vunpack.c.0.s8 %v3191
        %v3193 = vlaneseq
        %v3194 = vshrl.u32 %v3193, 7
        %v3195 = vsub.s32 %v3192, %v3194
        %v3196 = vrot.slane %v2593, %v3195
        %v3198 = vunpack.c.l.s4 1983009808
        %v3199 = vunpack.c.0.s8 %v3198
        %v3200 = vlaneseq
        %v3201 = vshrl.u32 %v3200, 7
        %v3202 = vsub.s32 %v3199, %v3201
        %v3203 = vrot.slane %v3189, %v3202
        %v3204 = vcombine.high %v3196, %v3196
        %v3205 = vcombine.high %v3203, %v3203
        %v3206 = vcombine.high %v2598, %v2598
        %v3208 = vunpack.c.l.s4 1983009808
        %v3209 = vunpack.c.0.s8 %v3208
        %v3210 = vlaneseq
        %v3211 = vshrl.u32 %v3210, 7
        %v3212 = vsub.s32 %v3209, %v3211
        %v3213 = vrot.slane %v2598, %v3212
        %v3215 = vunpack.c.l.s4 1983009808
        %v3216 = vunpack.c.0.s8 %v3215
        %v3217 = vlaneseq
        %v3218 = vshrl.u32 %v3217, 7
        %v3219 = vsub.s32 %v3216, %v3218
        %v3220 = vrot.slane %v3206, %v3219
        %v3221 = vcombine.high %v3213, %v3213
        %v3222 = vcombine.high %v3220, %v3220
        %v3223 = vcombine.high %v2601, %v2601
        %v3225 = vunpack.c.l.s4 1983009808
        %v3226 = vunpack.c.0.s8 %v3225
        %v3227 = vlaneseq
        %v3228 = vshrl.u32 %v3227, 7
        %v3229 = vsub.s32 %v3226, %v3228
        %v3230 = vrot.slane %v2601, %v3229
        %v3232 = vunpack.c.l.s4 1983009808
        %v3233 = vunpack.c.0.s8 %v3232
        %v3234 = vlaneseq
        %v3235 = vshrl.u32 %v3234, 7
        %v3236 = vsub.s32 %v3233, %v3235
        %v3237 = vrot.slane %v3223, %v3236
        %v3238 = vcombine.high %v3230, %v3230
        %v3239 = vcombine.high %v3237, %v3237
        %v3240 = vcombine.high %v2606, %v2606
        %v3242 = vunpack.c.l.s4 1983009808
        %v3243 = vunpack.c.0.s8 %v3242
        %v3244 = vlaneseq
        %v3245 = vshrl.u32 %v3244, 7
        %v3246 = vsub.s32 %v3243, %v3245
        %v3247 = vrot.slane %v2606, %v3246
        %v3249 = vunpack.c.l.s4 1983009808
        %v3250 = vunpack.c.0.s8 %v3249
        %v3251 = vlaneseq
        %v3252 = vshrl.u32 %v3251, 7
        %v3253 = vsub.s32 %v3250, %v3252
        %v3254 = vrot.slane %v3240, %v3253
        %v3255 = vcombine.high %v3247, %v3247
        %v3256 = vcombine.high %v3254, %v3254
        %v3257 = vcombine.high %v2609, %v2609
        %v3259 = vunpack.c.l.s4 1983009808
        %v3260 = vunpack.c.0.s8 %v3259
        %v3261 = vlaneseq
        %v3262 = vshrl.u32 %v3261, 7
        %v3263 = vsub.s32 %v3260, %v3262
        %v3264 = vrot.slane %v2609, %v3263
        %v3266 = vunpack.c.l.s4 1983009808
        %v3267 = vunpack.c.0.s8 %v3266
        %v3268 = vlaneseq
        %v3269 = vshrl.u32 %v3268, 7
        %v3270 = vsub.s32 %v3267, %v3269
        %v3271 = vrot.slane %v3257, %v3270
        %v3272 = vcombine.high %v3264, %v3264
        %v3273 = vcombine.high %v3271, %v3271
        %v3275 = vunpack.c.l.s4 1983009808
        %v3276 = vunpack.c.0.s8 %v3275
        %v3277 = vlaneseq
        %v3278 = vshrl.u32 %v3277, 7
        %v3279 = vsub.s32 %v3276, %v3278
        %v3280 = vrot.slane %v2614, %v3279
        %vm3281 = vcmask 1040384
        %vm3282 = vcmask 1042434
        %vm3283 = vmor %vm3281, %vm3282
        %vm3284 = vcmask 1044484
        %vm3285 = vmor %vm3283, %vm3284
        %vm3286 = vcmask 1046534
        %vm3287 = vmor %vm3285, %vm3286
        %v3288 = vrot.slane %v2677, 7
        %v3289 = vrot.slane %v3288, 2
        %v3290 = vrot.slane %v2676, 7
        %v3291 = vsel %vm3287, %v3289, %v3290
        %v3292 = vrot.slane %v3290, 2
        %v3293 = vrot.slane %v2678, 7
        %v3294 = vsel %vm3287, %v3292, %v3293
        %v3295 = vrot.slane %v3293, 2
        %v3296 = vrot.slane %v2686, 7
        %v3297 = vsel %vm3287, %v3295, %v3296
        %v3298 = vrot.slane %v3296, 2
        %v3299 = vrot.slane %v2694, 7
        %v3300 = vsel %vm3287, %v3298, %v3299
        %v3301 = vrot.slane %v3299, 2
        %v3302 = vrot.slane %v2693, 7
        %v3303 = vsel %vm3287, %v3301, %v3302
        %v3304 = vrot.slane %v3302, 2
        %v3305 = vrot.slane %v2695, 7
        %v3306 = vsel %vm3287, %v3304, %v3305
        %v3307 = vrot.slane %v3305, 2
        %v3308 = vrot.slane %v2703, 7
        %v3309 = vsel %vm3287, %v3307, %v3308
        %v3310 = vrot.slane %v3308, 2
        %v3311 = vrot.slane %v2711, 7
        %v3312 = vsel %vm3287, %v3310, %v3311
        %v3313 = vrot.slane %v2710, 7
        %v3314 = vrot.slane %v3313, 2
        %v3315 = vrot.slane %v2712, 7
        %v3316 = vsel %vm3287, %v3314, %v3315
        %v3317 = vrot.slane %v3315, 2
        %v3318 = vrot.slane %v2720, 7
        %v3319 = vsel %vm3287, %v3317, %v3318
        %v3320 = vrot.slane %v3318, 2
        %v3321 = vrot.slane %v2728, 7
        %v3322 = vsel %vm3287, %v3320, %v3321
        %v3323 = vrot.slane %v3321, 2
        %v3324 = vrot.slane %v2727, 7
        %v3325 = vsel %vm3287, %v3323, %v3324
        %v3326 = vrot.slane %v3324, 2
        %v3327 = vrot.slane %v2729, 7
        %v3328 = vsel %vm3287, %v3326, %v3327
        %v3329 = vrot.slane %v3327, 2
        %v3330 = vrot.slane %v2737, 7
        %v3331 = vsel %vm3287, %v3329, %v3330
        %v3332 = vrot.slane %v3330, 2
        %v3333 = vrot.slane %v2745, 7
        %v3334 = vsel %vm3287, %v3332, %v3333
        %v3335 = vrot.slane %v3333, 2
        %v3336 = vrot.slane %v2744, 7
        %v3337 = vsel %vm3287, %v3335, %v3336
        %v3338 = vrot.slane %v2746, 7
        %v3339 = vrot.slane %v3338, 2
        %v3340 = vrot.slane %v2754, 7
        %v3341 = vsel %vm3287, %v3339, %v3340
        %v3342 = vrot.slane %v3340, 2
        %v3343 = vrot.slane %v2762, 7
        %v3344 = vsel %vm3287, %v3342, %v3343
        %v3345 = vrot.slane %v3343, 2
        %v3346 = vrot.slane %v2761, 7
        %v3347 = vsel %vm3287, %v3345, %v3346
        %v3348 = vrot.slane %v3346, 2
        %v3349 = vrot.slane %v2763, 7
        %v3350 = vsel %vm3287, %v3348, %v3349
        %v3351 = vrot.slane %v3349, 2
        %v3352 = vrot.slane %v2771, 7
        %v3353 = vsel %vm3287, %v3351, %v3352
        %v3354 = vrot.slane %v3352, 2
        %v3355 = vrot.slane %v2779, 7
        %v3356 = vsel %vm3287, %v3354, %v3355
        %v3357 = vrot.slane %v3355, 2
        %v3358 = vrot.slane %v2778, 7
        %v3359 = vsel %vm3287, %v3357, %v3358
        %v3360 = vrot.slane %v3358, 2
        %v3361 = vrot.slane %v2780, 7
        %v3362 = vsel %vm3287, %v3360, %v3361
        %v3363 = vrot.slane %v2788, 7
        %v3364 = vrot.slane %v3363, 2
        %v3365 = vrot.slane %v2796, 7
        %v3366 = vsel %vm3287, %v3364, %v3365
        %v3367 = vrot.slane %v3365, 2
        %v3368 = vrot.slane %v2795, 7
        %v3369 = vsel %vm3287, %v3367, %v3368
        %v3370 = vrot.slane %v3368, 2
        %v3371 = vrot.slane %v2797, 7
        %v3372 = vsel %vm3287, %v3370, %v3371
        %v3373 = vrot.slane %v3371, 2
        %v3374 = vrot.slane %v2805, 7
        %v3375 = vsel %vm3287, %v3373, %v3374
        %v3376 = vrot.slane %v3374, 2
        %v3377 = vrot.slane %v2813, 7
        %v3378 = vsel %vm3287, %v3376, %v3377
        %v3379 = vrot.slane %v3377, 2
        %v3380 = vrot.slane %v2812, 7
        %v3381 = vsel %vm3287, %v3379, %v3380
        %v3382 = vrot.slane %v3380, 2
        %v3383 = vrot.slane %v2814, 7
        %v3384 = vsel %vm3287, %v3382, %v3383
        %v3385 = vrot.slane %v3383, 2
        %v3386 = vrot.slane %v2822, 7
        %v3387 = vsel %vm3287, %v3385, %v3386
        %v3388 = vrot.slane %v2830, 7
        %v3389 = vrot.slane %v3388, 2
        %v3390 = vrot.slane %v2829, 7
        %v3391 = vsel %vm3287, %v3389, %v3390
        %v3392 = vrot.slane %v3390, 2
        %v3393 = vrot.slane %v2831, 7
        %v3394 = vsel %vm3287, %v3392, %v3393
        %v3395 = vrot.slane %v3393, 2
        %v3396 = vrot.slane %v2839, 7
        %v3397 = vsel %vm3287, %v3395, %v3396
        %v3398 = vrot.slane %v3396, 2
        %v3399 = vrot.slane %v2847, 7
        %v3400 = vsel %vm3287, %v3398, %v3399
        %v3401 = vrot.slane %v3399, 2
        %v3402 = vrot.slane %v2846, 7
        %v3403 = vsel %vm3287, %v3401, %v3402
        %v3404 = vrot.slane %v3402, 2
        %v3405 = vrot.slane %v2848, 7
        %v3406 = vsel %vm3287, %v3404, %v3405
        %v3407 = vrot.slane %v3405, 2
        %v3408 = vrot.slane %v2856, 7
        %v3409 = vsel %vm3287, %v3407, %v3408
        %v3410 = vrot.slane %v3408, 2
        %v3411 = vrot.slane %v2864, 7
        %v3412 = vsel %vm3287, %v3410, %v3411
        %v3413 = vrot.slane %v2863, 7
        %v3414 = vrot.slane %v3413, 2
        %v3415 = vrot.slane %v2865, 7
        %v3416 = vsel %vm3287, %v3414, %v3415
        %v3417 = vrot.slane %v3415, 2
        %v3418 = vrot.slane %v2873, 7
        %v3419 = vsel %vm3287, %v3417, %v3418
        %v3420 = vrot.slane %v3418, 2
        %v3421 = vrot.slane %v2881, 7
        %v3422 = vsel %vm3287, %v3420, %v3421
        %v3423 = vrot.slane %v3421, 2
        %v3424 = vrot.slane %v2880, 7
        %v3425 = vsel %vm3287, %v3423, %v3424
        %v3426 = vrot.slane %v3424, 2
        %v3427 = vrot.slane %v2882, 7
        %v3428 = vsel %vm3287, %v3426, %v3427
        %v3429 = vrot.slane %v3427, 2
        %v3430 = vrot.slane %v2890, 7
        %v3431 = vsel %vm3287, %v3429, %v3430
        %v3432 = vrot.slane %v3430, 2
        %v3433 = vrot.slane %v2898, 7
        %v3434 = vsel %vm3287, %v3432, %v3433
        %v3435 = vrot.slane %v3433, 2
        %v3436 = vrot.slane %v2897, 7
        %v3437 = vsel %vm3287, %v3435, %v3436
        %v3438 = vrot.slane %v2899, 7
        %v3439 = vrot.slane %v3438, 2
        %v3440 = vrot.slane %v2907, 7
        %v3441 = vsel %vm3287, %v3439, %v3440
        %v3442 = vrot.slane %v3440, 2
        %v3443 = vrot.slane %v2915, 7
        %v3444 = vsel %vm3287, %v3442, %v3443
        %v3445 = vrot.slane %v3443, 2
        %v3446 = vrot.slane %v2914, 7
        %v3447 = vsel %vm3287, %v3445, %v3446
        %v3448 = vrot.slane %v3446, 2
        %v3449 = vrot.slane %v2916, 7
        %v3450 = vsel %vm3287, %v3448, %v3449
        %v3451 = vrot.slane %v3449, 2
        %v3452 = vrot.slane %v2924, 7
        %v3453 = vsel %vm3287, %v3451, %v3452
        %v3454 = vrot.slane %v3452, 2
        %v3455 = vrot.slane %v2932, 7
        %v3456 = vsel %vm3287, %v3454, %v3455
        %v3457 = vrot.slane %v3455, 2
        %v3458 = vrot.slane %v2931, 7
        %v3459 = vsel %vm3287, %v3457, %v3458
        %v3460 = vrot.slane %v3458, 2
        %v3461 = vrot.slane %v2933, 7
        %v3462 = vsel %vm3287, %v3460, %v3461
        %v3463 = vrot.slane %v2941, 7
        %v3464 = vrot.slane %v3463, 2
        %v3465 = vrot.slane %v2949, 7
        %v3466 = vsel %vm3287, %v3464, %v3465
        %v3467 = vrot.slane %v3465, 2
        %v3468 = vrot.slane %v2948, 7
        %v3469 = vsel %vm3287, %v3467, %v3468
        %v3470 = vrot.slane %v3468, 2
        %v3471 = vrot.slane %v2950, 7
        %v3472 = vsel %vm3287, %v3470, %v3471
        %v3473 = vrot.slane %v3471, 2
        %v3474 = vrot.slane %v2958, 7
        %v3475 = vsel %vm3287, %v3473, %v3474
        %v3476 = vrot.slane %v3474, 2
        %v3477 = vrot.slane %v2966, 7
        %v3478 = vsel %vm3287, %v3476, %v3477
        %v3479 = vrot.slane %v3477, 2
        %v3480 = vrot.slane %v2965, 7
        %v3481 = vsel %vm3287, %v3479, %v3480
        %v3482 = vrot.slane %v3480, 2
        %v3483 = vrot.slane %v2967, 7
        %v3484 = vsel %vm3287, %v3482, %v3483
        %v3485 = vrot.slane %v3483, 2
        %v3486 = vrot.slane %v2975, 7
        %v3487 = vsel %vm3287, %v3485, %v3486
        %v3488 = vrot.slane %v2983, 7
        %v3489 = vrot.slane %v3488, 2
        %v3490 = vrot.slane %v2982, 7
        %v3491 = vsel %vm3287, %v3489, %v3490
        %v3492 = vrot.slane %v3490, 2
        %v3493 = vrot.slane %v2984, 7
        %v3494 = vsel %vm3287, %v3492, %v3493
        %v3495 = vrot.slane %v3493, 2
        %v3496 = vrot.slane %v2992, 7
        %v3497 = vsel %vm3287, %v3495, %v3496
        %v3498 = vrot.slane %v3496, 2
        %v3499 = vrot.slane %v3000, 7
        %v3500 = vsel %vm3287, %v3498, %v3499
        %v3501 = vrot.slane %v3499, 2
        %v3502 = vrot.slane %v2999, 7
        %v3503 = vsel %vm3287, %v3501, %v3502
        %v3504 = vrot.slane %v3502, 2
        %v3505 = vrot.slane %v3001, 7
        %v3506 = vsel %vm3287, %v3504, %v3505
        %v3507 = vrot.slane %v3505, 2
        %v3508 = vrot.slane %v3009, 7
        %v3509 = vsel %vm3287, %v3507, %v3508
        %v3510 = vrot.slane %v3508, 2
        %v3511 = vrot.slane %v3017, 7
        %v3512 = vsel %vm3287, %v3510, %v3511
        %v3513 = vrot.slane %v3016, 7
        %v3514 = vrot.slane %v3513, 2
        %v3515 = vrot.slane %v3018, 7
        %v3516 = vsel %vm3287, %v3514, %v3515
        %v3517 = vrot.slane %v3515, 2
        %v3518 = vrot.slane %v3026, 7
        %v3519 = vsel %vm3287, %v3517, %v3518
        %v3520 = vrot.slane %v3518, 2
        %v3521 = vrot.slane %v3034, 7
        %v3522 = vsel %vm3287, %v3520, %v3521
        %v3523 = vrot.slane %v3521, 2
        %v3524 = vrot.slane %v3033, 7
        %v3525 = vsel %vm3287, %v3523, %v3524
        %v3526 = vrot.slane %v3524, 2
        %v3527 = vrot.slane %v3035, 7
        %v3528 = vsel %vm3287, %v3526, %v3527
        %v3529 = vrot.slane %v3527, 2
        %v3530 = vrot.slane %v3043, 7
        %v3531 = vsel %vm3287, %v3529, %v3530
        %v3532 = vrot.slane %v3530, 2
        %v3533 = vrot.slane %v3051, 7
        %v3534 = vsel %vm3287, %v3532, %v3533
        %v3535 = vrot.slane %v3533, 2
        %v3536 = vrot.slane %v3050, 7
        %v3537 = vsel %vm3287, %v3535, %v3536
        %v3538 = vrot.slane %v3052, 7
        %v3539 = vrot.slane %v3538, 2
        %v3540 = vrot.slane %v3060, 7
        %v3541 = vsel %vm3287, %v3539, %v3540
        %v3542 = vrot.slane %v3540, 2
        %v3543 = vrot.slane %v3068, 7
        %v3544 = vsel %vm3287, %v3542, %v3543
        %v3545 = vrot.slane %v3543, 2
        %v3546 = vrot.slane %v3067, 7
        %v3547 = vsel %vm3287, %v3545, %v3546
        %v3548 = vrot.slane %v3546, 2
        %v3549 = vrot.slane %v3069, 7
        %v3550 = vsel %vm3287, %v3548, %v3549
        %v3551 = vrot.slane %v3549, 2
        %v3552 = vrot.slane %v3077, 7
        %v3553 = vsel %vm3287, %v3551, %v3552
        %v3554 = vrot.slane %v3552, 2
        %v3555 = vrot.slane %v3085, 7
        %v3556 = vsel %vm3287, %v3554, %v3555
        %v3557 = vrot.slane %v3555, 2
        %v3558 = vrot.slane %v3084, 7
        %v3559 = vsel %vm3287, %v3557, %v3558
        %v3560 = vrot.slane %v3558, 2
        %v3561 = vrot.slane %v3086, 7
        %v3562 = vsel %vm3287, %v3560, %v3561
        %v3563 = vrot.slane %v3094, 7
        %v3564 = vrot.slane %v3563, 2
        %v3565 = vrot.slane %v3102, 7
        %v3566 = vsel %vm3287, %v3564, %v3565
        %v3567 = vrot.slane %v3565, 2
        %v3568 = vrot.slane %v3101, 7
        %v3569 = vsel %vm3287, %v3567, %v3568
        %v3570 = vrot.slane %v3568, 2
        %v3571 = vrot.slane %v3103, 7
        %v3572 = vsel %vm3287, %v3570, %v3571
        %v3573 = vrot.slane %v3571, 2
        %v3574 = vrot.slane %v3111, 7
        %v3575 = vsel %vm3287, %v3573, %v3574
        %v3576 = vrot.slane %v3574, 2
        %v3577 = vrot.slane %v3119, 7
        %v3578 = vsel %vm3287, %v3576, %v3577
        %v3579 = vrot.slane %v3577, 2
        %v3580 = vrot.slane %v3118, 7
        %v3581 = vsel %vm3287, %v3579, %v3580
        %v3582 = vrot.slane %v3580, 2
        %v3583 = vrot.slane %v3120, 7
        %v3584 = vsel %vm3287, %v3582, %v3583
        %v3585 = vrot.slane %v3583, 2
        %v3586 = vrot.slane %v3128, 7
        %v3587 = vsel %vm3287, %v3585, %v3586
        %v3588 = vrot.slane %v3136, 7
        %v3589 = vrot.slane %v3588, 2
        %v3590 = vrot.slane %v3135, 7
        %v3591 = vsel %vm3287, %v3589, %v3590
        %v3592 = vrot.slane %v3590, 2
        %v3593 = vrot.slane %v3137, 7
        %v3594 = vsel %vm3287, %v3592, %v3593
        %v3595 = vrot.slane %v3593, 2
        %v3596 = vrot.slane %v3145, 7
        %v3597 = vsel %vm3287, %v3595, %v3596
        %v3598 = vrot.slane %v3596, 2
        %v3599 = vrot.slane %v3153, 7
        %v3600 = vsel %vm3287, %v3598, %v3599
        %v3601 = vrot.slane %v3599, 2
        %v3602 = vrot.slane %v3152, 7
        %v3603 = vsel %vm3287, %v3601, %v3602
        %v3604 = vrot.slane %v3602, 2
        %v3605 = vrot.slane %v3154, 7
        %v3606 = vsel %vm3287, %v3604, %v3605
        %v3607 = vrot.slane %v3605, 2
        %v3608 = vrot.slane %v3162, 7
        %v3609 = vsel %vm3287, %v3607, %v3608
        %v3610 = vrot.slane %v3608, 2
        %v3611 = vrot.slane %v3170, 7
        %v3612 = vsel %vm3287, %v3610, %v3611
        %v3613 = vrot.slane %v3169, 7
        %v3614 = vrot.slane %v3613, 2
        %v3615 = vrot.slane %v3171, 7
        %v3616 = vsel %vm3287, %v3614, %v3615
        %v3617 = vrot.slane %v3615, 2
        %v3618 = vrot.slane %v3179, 7
        %v3619 = vsel %vm3287, %v3617, %v3618
        %v3620 = vrot.slane %v3618, 2
        %v3621 = vrot.slane %v3187, 7
        %v3622 = vsel %vm3287, %v3620, %v3621
        %v3623 = vrot.slane %v3621, 2
        %v3624 = vrot.slane %v3186, 7
        %v3625 = vsel %vm3287, %v3623, %v3624
        %v3626 = vrot.slane %v3624, 2
        %v3627 = vrot.slane %v3188, 7
        %v3628 = vsel %vm3287, %v3626, %v3627
        %v3629 = vrot.slane %v3627, 2
        %v3630 = vrot.slane %v3196, 7
        %v3631 = vsel %vm3287, %v3629, %v3630
        %v3632 = vrot.slane %v3630, 2
        %v3633 = vrot.slane %v3204, 7
        %v3634 = vsel %vm3287, %v3632, %v3633
        %v3635 = vrot.slane %v3633, 2
        %v3636 = vrot.slane %v3203, 7
        %v3637 = vsel %vm3287, %v3635, %v3636
        %v3638 = vrot.slane %v3205, 7
        %v3639 = vrot.slane %v3638, 2
        %v3640 = vrot.slane %v3213, 7
        %v3641 = vsel %vm3287, %v3639, %v3640
        %v3642 = vrot.slane %v3640, 2
        %v3643 = vrot.slane %v3221, 7
        %v3644 = vsel %vm3287, %v3642, %v3643
        %v3645 = vrot.slane %v3643, 2
        %v3646 = vrot.slane %v3220, 7
        %v3647 = vsel %vm3287, %v3645, %v3646
        %v3648 = vrot.slane %v3646, 2
        %v3649 = vrot.slane %v3222, 7
        %v3650 = vsel %vm3287, %v3648, %v3649
        %v3651 = vrot.slane %v3649, 2
        %v3652 = vrot.slane %v3230, 7
        %v3653 = vsel %vm3287, %v3651, %v3652
        %v3654 = vrot.slane %v3652, 2
        %v3655 = vrot.slane %v3238, 7
        %v3656 = vsel %vm3287, %v3654, %v3655
        %v3657 = vrot.slane %v3655, 2
        %v3658 = vrot.slane %v3237, 7
        %v3659 = vsel %vm3287, %v3657, %v3658
        %v3660 = vrot.slane %v3658, 2
        %v3661 = vrot.slane %v3239, 7
        %v3662 = vsel %vm3287, %v3660, %v3661
        %v3663 = vrot.slane %v3247, 7
        %v3664 = vrot.slane %v3663, 2
        %v3665 = vrot.slane %v3255, 7
        %v3666 = vsel %vm3287, %v3664, %v3665
        %v3667 = vrot.slane %v3665, 2
        %v3668 = vrot.slane %v3254, 7
        %v3669 = vsel %vm3287, %v3667, %v3668
        %v3670 = vrot.slane %v3668, 2
        %v3671 = vrot.slane %v3256, 7
        %v3672 = vsel %vm3287, %v3670, %v3671
        %v3673 = vrot.slane %v3671, 2
        %v3674 = vrot.slane %v3264, 7
        %v3675 = vsel %vm3287, %v3673, %v3674
        %v3676 = vrot.slane %v3674, 2
        %v3677 = vrot.slane %v3272, 7
        %v3678 = vsel %vm3287, %v3676, %v3677
        %v3679 = vrot.slane %v3677, 2
        %v3680 = vrot.slane %v3271, 7
        %v3681 = vsel %vm3287, %v3679, %v3680
        %v3682 = vrot.slane %v3680, 2
        %v3683 = vrot.slane %v3273, 7
        %v3684 = vsel %vm3287, %v3682, %v3683
        %v3685 = vrot.slane %v3683, 2
        %v3686 = vrot.slane %v3280, 7
        %v3687 = vsel %vm3287, %v3685, %v3686
        %v3816 = vld [vmem:[%s5] sm:$0x1]
        %v3818 = vlaneseq
        %v3819 = vshrl.u32 %v3818, 7
        %v3820 = vsub.s32 0, %v3819
        %v3821 = vrot.slane %v3816, %v3820
        %v3822 = vcombine.high %v3821, %v3821
        %v3824 = vunpack.c.l.s4 1983009808
        %v3825 = vunpack.c.0.s8 %v3824
        %v3826 = vlaneseq
        %v3827 = vshrl.u32 %v3826, 7
        %v3828 = vsub.s32 %v3825, %v3827
        %v3829 = vrot.slane %v3821, %v3828
        %v3831 = vunpack.c.l.s4 1983009808
        %v3832 = vunpack.c.0.s8 %v3831
        %v3833 = vlaneseq
        %v3834 = vshrl.u32 %v3833, 7
        %v3835 = vsub.s32 %v3832, %v3834
        %v3836 = vrot.slane %v3822, %v3835
        %v3837 = vcombine.high %v3829, %v3829
        %v3838 = vcombine.high %v3836, %v3836
        %v3843 = vadd.f32 %v3291, %v3829
        %v3844 = vadd.f32 %v3294, %v3837
        %v3845 = vadd.f32 %v3297, %v3836
        %v3846 = vadd.f32 %v3300, %v3838
        %v3847 = vadd.f32 %v3303, %v3829
        %v3848 = vadd.f32 %v3306, %v3837
        %v3849 = vadd.f32 %v3309, %v3836
        %v3850 = vadd.f32 %v3312, %v3838
        %v3851 = vadd.f32 %v3316, %v3829
        %v3852 = vadd.f32 %v3319, %v3837
        %v3853 = vadd.f32 %v3322, %v3836
        %v3854 = vadd.f32 %v3325, %v3838
        %v3855 = vadd.f32 %v3328, %v3829
        %v3856 = vadd.f32 %v3331, %v3837
        %v3857 = vadd.f32 %v3334, %v3836
        %v3858 = vadd.f32 %v3337, %v3838
        %v3859 = vadd.f32 %v3341, %v3829
        %v3860 = vadd.f32 %v3344, %v3837
        %v3861 = vadd.f32 %v3347, %v3836
        %v3862 = vadd.f32 %v3350, %v3838
        %v3863 = vadd.f32 %v3353, %v3829
        %v3864 = vadd.f32 %v3356, %v3837
        %v3865 = vadd.f32 %v3359, %v3836
        %v3866 = vadd.f32 %v3362, %v3838
        %v3867 = vadd.f32 %v3366, %v3829
        %v3868 = vadd.f32 %v3369, %v3837
        %v3869 = vadd.f32 %v3372, %v3836
        %v3870 = vadd.f32 %v3375, %v3838
        %v3871 = vadd.f32 %v3378, %v3829
        %v3872 = vadd.f32 %v3381, %v3837
        %v3873 = vadd.f32 %v3384, %v3836
        %v3874 = vadd.f32 %v3387, %v3838
        %v3875 = vadd.f32 %v3391, %v3829
        %v3876 = vadd.f32 %v3394, %v3837
        %v3877 = vadd.f32 %v3397, %v3836
        %v3878 = vadd.f32 %v3400, %v3838
        %v3879 = vadd.f32 %v3403, %v3829
        %v3880 = vadd.f32 %v3406, %v3837
        %v3881 = vadd.f32 %v3409, %v3836
        %v3882 = vadd.f32 %v3412, %v3838
        %v3883 = vadd.f32 %v3416, %v3829
        %v3884 = vadd.f32 %v3419, %v3837
        %v3885 = vadd.f32 %v3422, %v3836
        %v3886 = vadd.f32 %v3425, %v3838
        %v3887 = vadd.f32 %v3428, %v3829
        %v3888 = vadd.f32 %v3431, %v3837
        %v3889 = vadd.f32 %v3434, %v3836
        %v3890 = vadd.f32 %v3437, %v3838
        %v3891 = vadd.f32 %v3441, %v3829
        %v3892 = vadd.f32 %v3444, %v3837
        %v3893 = vadd.f32 %v3447, %v3836
        %v3894 = vadd.f32 %v3450, %v3838
        %v3895 = vadd.f32 %v3453, %v3829
        %v3896 = vadd.f32 %v3456, %v3837
        %v3897 = vadd.f32 %v3459, %v3836
        %v3898 = vadd.f32 %v3462, %v3838
        %v3899 = vadd.f32 %v3466, %v3829
        %v3900 = vadd.f32 %v3469, %v3837
        %v3901 = vadd.f32 %v3472, %v3836
        %v3902 = vadd.f32 %v3475, %v3838
        %v3903 = vadd.f32 %v3478, %v3829
        %v3904 = vadd.f32 %v3481, %v3837
        %v3905 = vadd.f32 %v3484, %v3836
        %v3906 = vadd.f32 %v3487, %v3838
        %v3907 = vadd.f32 %v3491, %v3829
        %v3908 = vadd.f32 %v3494, %v3837
        %v3909 = vadd.f32 %v3497, %v3836
        %v3910 = vadd.f32 %v3500, %v3838
        %v3911 = vadd.f32 %v3503, %v3829
        %v3912 = vadd.f32 %v3506, %v3837
        %v3913 = vadd.f32 %v3509, %v3836
        %v3914 = vadd.f32 %v3512, %v3838
        %v3915 = vadd.f32 %v3516, %v3829
        %v3916 = vadd.f32 %v3519, %v3837
        %v3917 = vadd.f32 %v3522, %v3836
        %v3918 = vadd.f32 %v3525, %v3838
        %v3919 = vadd.f32 %v3528, %v3829
        %v3920 = vadd.f32 %v3531, %v3837
        %v3921 = vadd.f32 %v3534, %v3836
        %v3922 = vadd.f32 %v3537, %v3838
        %v3923 = vadd.f32 %v3541, %v3829
        %v3924 = vadd.f32 %v3544, %v3837
        %v3925 = vadd.f32 %v3547, %v3836
        %v3926 = vadd.f32 %v3550, %v3838
        %v3927 = vadd.f32 %v3553, %v3829
        %v3928 = vadd.f32 %v3556, %v3837
        %v3929 = vadd.f32 %v3559, %v3836
        %v3930 = vadd.f32 %v3562, %v3838
        %v3931 = vadd.f32 %v3566, %v3829
        %v3932 = vadd.f32 %v3569, %v3837
        %v3933 = vadd.f32 %v3572, %v3836
        %v3934 = vadd.f32 %v3575, %v3838
        %v3935 = vadd.f32 %v3578, %v3829
        %v3936 = vadd.f32 %v3581, %v3837
        %v3937 = vadd.f32 %v3584, %v3836
        %v3938 = vadd.f32 %v3587, %v3838
        %v3939 = vadd.f32 %v3591, %v3829
        %v3940 = vadd.f32 %v3594, %v3837
        %v3941 = vadd.f32 %v3597, %v3836
        %v3942 = vadd.f32 %v3600, %v3838
        %v3943 = vadd.f32 %v3603, %v3829
        %v3944 = vadd.f32 %v3606, %v3837
        %v3945 = vadd.f32 %v3609, %v3836
        %v3946 = vadd.f32 %v3612, %v3838
        %v3947 = vadd.f32 %v3616, %v3829
        %v3948 = vadd.f32 %v3619, %v3837
        %v3949 = vadd.f32 %v3622, %v3836
        %v3950 = vadd.f32 %v3625, %v3838
        %v3951 = vadd.f32 %v3628, %v3829
        %v3952 = vadd.f32 %v3631, %v3837
        %v3953 = vadd.f32 %v3634, %v3836
        %v3954 = vadd.f32 %v3637, %v3838
        %v3955 = vadd.f32 %v3641, %v3829
        %v3956 = vadd.f32 %v3644, %v3837
        %v3957 = vadd.f32 %v3647, %v3836
        %v3958 = vadd.f32 %v3650, %v3838
        %v3959 = vadd.f32 %v3653, %v3829
        %v3960 = vadd.f32 %v3656, %v3837
        %v3961 = vadd.f32 %v3659, %v3836
        %v3962 = vadd.f32 %v3662, %v3838
        %v3963 = vadd.f32 %v3666, %v3829
        %v3964 = vadd.f32 %v3669, %v3837
        %v3965 = vadd.f32 %v3672, %v3836
        %v3966 = vadd.f32 %v3675, %v3838
        %v3967 = vadd.f32 %v3678, %v3829
        %v3968 = vadd.f32 %v3681, %v3837
        %v3969 = vadd.f32 %v3684, %v3836
        %v3970 = vadd.f32 %v3687, %v3838
        %v3971 = vmax.f32 %v3843, 0.0
        %v3972 = vmax.f32 %v3844, 0.0
        %v3973 = vmax.f32 %v3845, 0.0
        %v3974 = vmax.f32 %v3846, 0.0
        %v3975 = vmax.f32 %v3847, 0.0
        %v3976 = vmax.f32 %v3848, 0.0
        %v3977 = vmax.f32 %v3849, 0.0
        %v3978 = vmax.f32 %v3850, 0.0
        %v3979 = vmax.f32 %v3851, 0.0
        %v3980 = vmax.f32 %v3852, 0.0
        %v3981 = vmax.f32 %v3853, 0.0
        %v3982 = vmax.f32 %v3854, 0.0
        %v3983 = vmax.f32 %v3855, 0.0
        %v3984 = vmax.f32 %v3856, 0.0
        %v3985 = vmax.f32 %v3857, 0.0
        %v3986 = vmax.f32 %v3858, 0.0
        %v3987 = vmax.f32 %v3859, 0.0
        %v3988 = vmax.f32 %v3860, 0.0
        %v3989 = vmax.f32 %v3861, 0.0
        %v3990 = vmax.f32 %v3862, 0.0
        %v3991 = vmax.f32 %v3863, 0.0
        %v3992 = vmax.f32 %v3864, 0.0
        %v3993 = vmax.f32 %v3865, 0.0
        %v3994 = vmax.f32 %v3866, 0.0
        %v3995 = vmax.f32 %v3867, 0.0
        %v3996 = vmax.f32 %v3868, 0.0
        %v3997 = vmax.f32 %v3869, 0.0
        %v3998 = vmax.f32 %v3870, 0.0
        %v3999 = vmax.f32 %v3871, 0.0
        %v4000 = vmax.f32 %v3872, 0.0
        %v4001 = vmax.f32 %v3873, 0.0
        %v4002 = vmax.f32 %v3874, 0.0
        %v4003 = vmax.f32 %v3875, 0.0
        %v4004 = vmax.f32 %v3876, 0.0
        %v4005 = vmax.f32 %v3877, 0.0
        %v4006 = vmax.f32 %v3878, 0.0
        %v4007 = vmax.f32 %v3879, 0.0
        %v4008 = vmax.f32 %v3880, 0.0
        %v4009 = vmax.f32 %v3881, 0.0
        %v4010 = vmax.f32 %v3882, 0.0
        %v4011 = vmax.f32 %v3883, 0.0
        %v4012 = vmax.f32 %v3884, 0.0
        %v4013 = vmax.f32 %v3885, 0.0
        %v4014 = vmax.f32 %v3886, 0.0
        %v4015 = vmax.f32 %v3887, 0.0
        %v4016 = vmax.f32 %v3888, 0.0
        %v4017 = vmax.f32 %v3889, 0.0
        %v4018 = vmax.f32 %v3890, 0.0
        %v4019 = vmax.f32 %v3891, 0.0
        %v4020 = vmax.f32 %v3892, 0.0
        %v4021 = vmax.f32 %v3893, 0.0
        %v4022 = vmax.f32 %v3894, 0.0
        %v4023 = vmax.f32 %v3895, 0.0
        %v4024 = vmax.f32 %v3896, 0.0
        %v4025 = vmax.f32 %v3897, 0.0
        %v4026 = vmax.f32 %v3898, 0.0
        %v4027 = vmax.f32 %v3899, 0.0
        %v4028 = vmax.f32 %v3900, 0.0
        %v4029 = vmax.f32 %v3901, 0.0
        %v4030 = vmax.f32 %v3902, 0.0
        %v4031 = vmax.f32 %v3903, 0.0
        %v4032 = vmax.f32 %v3904, 0.0
        %v4033 = vmax.f32 %v3905, 0.0
        %v4034 = vmax.f32 %v3906, 0.0
        %v4035 = vmax.f32 %v3907, 0.0
        %v4036 = vmax.f32 %v3908, 0.0
        %v4037 = vmax.f32 %v3909, 0.0
        %v4038 = vmax.f32 %v3910, 0.0
        %v4039 = vmax.f32 %v3911, 0.0
        %v4040 = vmax.f32 %v3912, 0.0
        %v4041 = vmax.f32 %v3913, 0.0
        %v4042 = vmax.f32 %v3914, 0.0
        %v4043 = vmax.f32 %v3915, 0.0
        %v4044 = vmax.f32 %v3916, 0.0
        %v4045 = vmax.f32 %v3917, 0.0
        %v4046 = vmax.f32 %v3918, 0.0
        %v4047 = vmax.f32 %v3919, 0.0
        %v4048 = vmax.f32 %v3920, 0.0
        %v4049 = vmax.f32 %v3921, 0.0
        %v4050 = vmax.f32 %v3922, 0.0
        %v4051 = vmax.f32 %v3923, 0.0
        %v4052 = vmax.f32 %v3924, 0.0
        %v4053 = vmax.f32 %v3925, 0.0
        %v4054 = vmax.f32 %v3926, 0.0
        %v4055 = vmax.f32 %v3927, 0.0
        %v4056 = vmax.f32 %v3928, 0.0
        %v4057 = vmax.f32 %v3929, 0.0
        %v4058 = vmax.f32 %v3930, 0.0
        %v4059 = vmax.f32 %v3931, 0.0
        %v4060 = vmax.f32 %v3932, 0.0
        %v4061 = vmax.f32 %v3933, 0.0
        %v4062 = vmax.f32 %v3934, 0.0
        %v4063 = vmax.f32 %v3935, 0.0
        %v4064 = vmax.f32 %v3936, 0.0
        %v4065 = vmax.f32 %v3937, 0.0
        %v4066 = vmax.f32 %v3938, 0.0
        %v4067 = vmax.f32 %v3939, 0.0
        %v4068 = vmax.f32 %v3940, 0.0
        %v4069 = vmax.f32 %v3941, 0.0
        %v4070 = vmax.f32 %v3942, 0.0
        %v4071 = vmax.f32 %v3943, 0.0
        %v4072 = vmax.f32 %v3944, 0.0
        %v4073 = vmax.f32 %v3945, 0.0
        %v4074 = vmax.f32 %v3946, 0.0
        %v4075 = vmax.f32 %v3947, 0.0
        %v4076 = vmax.f32 %v3948, 0.0
        %v4077 = vmax.f32 %v3949, 0.0
        %v4078 = vmax.f32 %v3950, 0.0
        %v4079 = vmax.f32 %v3951, 0.0
        %v4080 = vmax.f32 %v3952, 0.0
        %v4081 = vmax.f32 %v3953, 0.0
        %v4082 = vmax.f32 %v3954, 0.0
        %v4083 = vmax.f32 %v3955, 0.0
        %v4084 = vmax.f32 %v3956, 0.0
        %v4085 = vmax.f32 %v3957, 0.0
        %v4086 = vmax.f32 %v3958, 0.0
        %v4087 = vmax.f32 %v3959, 0.0
        %v4088 = vmax.f32 %v3960, 0.0
        %v4089 = vmax.f32 %v3961, 0.0
        %v4090 = vmax.f32 %v3962, 0.0
        %v4091 = vmax.f32 %v3963, 0.0
        %v4092 = vmax.f32 %v3964, 0.0
        %v4093 = vmax.f32 %v3965, 0.0
        %v4094 = vmax.f32 %v3966, 0.0
        %v4095 = vmax.f32 %v3967, 0.0
        %v4096 = vmax.f32 %v3968, 0.0
        %v4097 = vmax.f32 %v3969, 0.0
        %v4098 = vmax.f32 %v3970, 0.0
        %v4227 = vcombine.low %v3971, %v3972
        %v4228 = vcombine.low %v3973, %v3974
        %v4230 = vunpack.c.l.s4 1983009808
        %v4231 = vunpack.c.0.s8 %v4230
        %v4232 = vlaneseq
        %v4233 = vshrl.u32 %v4232, 7
        %v4234 = vsub.s32 %v4231, %v4233
        %v4235 = vrot.slane %v4227, %v4234
        %v4237 = vunpack.c.l.s4 1983009808
        %v4238 = vunpack.c.0.s8 %v4237
        %v4239 = vlaneseq
        %v4240 = vshrl.u32 %v4239, 7
        %v4241 = vsub.s32 %v4238, %v4240
        %v4242 = vrot.slane %v4228, %v4241
        %v4243 = vcombine.low %v4235, %v4242
        %v4244 = vcombine.low %v3975, %v3976
        %v4245 = vcombine.low %v3977, %v3978
        %v4247 = vunpack.c.l.s4 1983009808
        %v4248 = vunpack.c.0.s8 %v4247
        %v4249 = vlaneseq
        %v4250 = vshrl.u32 %v4249, 7
        %v4251 = vsub.s32 %v4248, %v4250
        %v4252 = vrot.slane %v4244, %v4251
        %v4254 = vunpack.c.l.s4 1983009808
        %v4255 = vunpack.c.0.s8 %v4254
        %v4256 = vlaneseq
        %v4257 = vshrl.u32 %v4256, 7
        %v4258 = vsub.s32 %v4255, %v4257
        %v4259 = vrot.slane %v4245, %v4258
        %v4260 = vcombine.low %v4252, %v4259
        %v4261 = vcombine.low %v3979, %v3980
        %v4262 = vcombine.low %v3981, %v3982
        %v4264 = vunpack.c.l.s4 1983009808
        %v4265 = vunpack.c.0.s8 %v4264
        %v4266 = vlaneseq
        %v4267 = vshrl.u32 %v4266, 7
        %v4268 = vsub.s32 %v4265, %v4267
        %v4269 = vrot.slane %v4261, %v4268
        %v4271 = vunpack.c.l.s4 1983009808
        %v4272 = vunpack.c.0.s8 %v4271
        %v4273 = vlaneseq
        %v4274 = vshrl.u32 %v4273, 7
        %v4275 = vsub.s32 %v4272, %v4274
        %v4276 = vrot.slane %v4262, %v4275
        %v4277 = vcombine.low %v4269, %v4276
        %v4278 = vcombine.low %v3983, %v3984
        %v4279 = vcombine.low %v3985, %v3986
        %v4281 = vunpack.c.l.s4 1983009808
        %v4282 = vunpack.c.0.s8 %v4281
        %v4283 = vlaneseq
        %v4284 = vshrl.u32 %v4283, 7
        %v4285 = vsub.s32 %v4282, %v4284
        %v4286 = vrot.slane %v4278, %v4285
        %v4288 = vunpack.c.l.s4 1983009808
        %v4289 = vunpack.c.0.s8 %v4288
        %v4290 = vlaneseq
        %v4291 = vshrl.u32 %v4290, 7
        %v4292 = vsub.s32 %v4289, %v4291
        %v4293 = vrot.slane %v4279, %v4292
        %v4294 = vcombine.low %v4286, %v4293
        %v4295 = vcombine.low %v3987, %v3988
        %v4296 = vcombine.low %v3989, %v3990
        %v4298 = vunpack.c.l.s4 1983009808
        %v4299 = vunpack.c.0.s8 %v4298
        %v4300 = vlaneseq
        %v4301 = vshrl.u32 %v4300, 7
        %v4302 = vsub.s32 %v4299, %v4301
        %v4303 = vrot.slane %v4295, %v4302
        %v4305 = vunpack.c.l.s4 1983009808
        %v4306 = vunpack.c.0.s8 %v4305
        %v4307 = vlaneseq
        %v4308 = vshrl.u32 %v4307, 7
        %v4309 = vsub.s32 %v4306, %v4308
        %v4310 = vrot.slane %v4296, %v4309
        %v4311 = vcombine.low %v4303, %v4310
        %v4312 = vcombine.low %v3991, %v3992
        %v4313 = vcombine.low %v3993, %v3994
        %v4315 = vunpack.c.l.s4 1983009808
        %v4316 = vunpack.c.0.s8 %v4315
        %v4317 = vlaneseq
        %v4318 = vshrl.u32 %v4317, 7
        %v4319 = vsub.s32 %v4316, %v4318
        %v4320 = vrot.slane %v4312, %v4319
        %v4322 = vunpack.c.l.s4 1983009808
        %v4323 = vunpack.c.0.s8 %v4322
        %v4324 = vlaneseq
        %v4325 = vshrl.u32 %v4324, 7
        %v4326 = vsub.s32 %v4323, %v4325
        %v4327 = vrot.slane %v4313, %v4326
        %v4328 = vcombine.low %v4320, %v4327
        %v4329 = vcombine.low %v3995, %v3996
        %v4330 = vcombine.low %v3997, %v3998
        %v4332 = vunpack.c.l.s4 1983009808
        %v4333 = vunpack.c.0.s8 %v4332
        %v4334 = vlaneseq
        %v4335 = vshrl.u32 %v4334, 7
        %v4336 = vsub.s32 %v4333, %v4335
        %v4337 = vrot.slane %v4329, %v4336
        %v4339 = vunpack.c.l.s4 1983009808
        %v4340 = vunpack.c.0.s8 %v4339
        %v4341 = vlaneseq
        %v4342 = vshrl.u32 %v4341, 7
        %v4343 = vsub.s32 %v4340, %v4342
        %v4344 = vrot.slane %v4330, %v4343
        %v4345 = vcombine.low %v4337, %v4344
        %v4346 = vcombine.low %v3999, %v4000
        %v4347 = vcombine.low %v4001, %v4002
        %v4349 = vunpack.c.l.s4 1983009808
        %v4350 = vunpack.c.0.s8 %v4349
        %v4351 = vlaneseq
        %v4352 = vshrl.u32 %v4351, 7
        %v4353 = vsub.s32 %v4350, %v4352
        %v4354 = vrot.slane %v4346, %v4353
        %v4356 = vunpack.c.l.s4 1983009808
        %v4357 = vunpack.c.0.s8 %v4356
        %v4358 = vlaneseq
        %v4359 = vshrl.u32 %v4358, 7
        %v4360 = vsub.s32 %v4357, %v4359
        %v4361 = vrot.slane %v4347, %v4360
        %v4362 = vcombine.low %v4354, %v4361
        %v4363 = vcombine.low %v4003, %v4004
        %v4364 = vcombine.low %v4005, %v4006
        %v4366 = vunpack.c.l.s4 1983009808
        %v4367 = vunpack.c.0.s8 %v4366
        %v4368 = vlaneseq
        %v4369 = vshrl.u32 %v4368, 7
        %v4370 = vsub.s32 %v4367, %v4369
        %v4371 = vrot.slane %v4363, %v4370
        %v4373 = vunpack.c.l.s4 1983009808
        %v4374 = vunpack.c.0.s8 %v4373
        %v4375 = vlaneseq
        %v4376 = vshrl.u32 %v4375, 7
        %v4377 = vsub.s32 %v4374, %v4376
        %v4378 = vrot.slane %v4364, %v4377
        %v4379 = vcombine.low %v4371, %v4378
        %v4380 = vcombine.low %v4007, %v4008
        %v4381 = vcombine.low %v4009, %v4010
        %v4383 = vunpack.c.l.s4 1983009808
        %v4384 = vunpack.c.0.s8 %v4383
        %v4385 = vlaneseq
        %v4386 = vshrl.u32 %v4385, 7
        %v4387 = vsub.s32 %v4384, %v4386
        %v4388 = vrot.slane %v4380, %v4387
        %v4390 = vunpack.c.l.s4 1983009808
        %v4391 = vunpack.c.0.s8 %v4390
        %v4392 = vlaneseq
        %v4393 = vshrl.u32 %v4392, 7
        %v4394 = vsub.s32 %v4391, %v4393
        %v4395 = vrot.slane %v4381, %v4394
        %v4396 = vcombine.low %v4388, %v4395
        %v4397 = vcombine.low %v4011, %v4012
        %v4398 = vcombine.low %v4013, %v4014
        %v4400 = vunpack.c.l.s4 1983009808
        %v4401 = vunpack.c.0.s8 %v4400
        %v4402 = vlaneseq
        %v4403 = vshrl.u32 %v4402, 7
        %v4404 = vsub.s32 %v4401, %v4403
        %v4405 = vrot.slane %v4397, %v4404
        %v4407 = vunpack.c.l.s4 1983009808
        %v4408 = vunpack.c.0.s8 %v4407
        %v4409 = vlaneseq
        %v4410 = vshrl.u32 %v4409, 7
        %v4411 = vsub.s32 %v4408, %v4410
        %v4412 = vrot.slane %v4398, %v4411
        %v4413 = vcombine.low %v4405, %v4412
        %v4414 = vcombine.low %v4015, %v4016
        %v4415 = vcombine.low %v4017, %v4018
        %v4417 = vunpack.c.l.s4 1983009808
        %v4418 = vunpack.c.0.s8 %v4417
        %v4419 = vlaneseq
        %v4420 = vshrl.u32 %v4419, 7
        %v4421 = vsub.s32 %v4418, %v4420
        %v4422 = vrot.slane %v4414, %v4421
        %v4424 = vunpack.c.l.s4 1983009808
        %v4425 = vunpack.c.0.s8 %v4424
        %v4426 = vlaneseq
        %v4427 = vshrl.u32 %v4426, 7
        %v4428 = vsub.s32 %v4425, %v4427
        %v4429 = vrot.slane %v4415, %v4428
        %v4430 = vcombine.low %v4422, %v4429
        %v4431 = vcombine.low %v4019, %v4020
        %v4432 = vcombine.low %v4021, %v4022
        %v4434 = vunpack.c.l.s4 1983009808
        %v4435 = vunpack.c.0.s8 %v4434
        %v4436 = vlaneseq
        %v4437 = vshrl.u32 %v4436, 7
        %v4438 = vsub.s32 %v4435, %v4437
        %v4439 = vrot.slane %v4431, %v4438
        %v4441 = vunpack.c.l.s4 1983009808
        %v4442 = vunpack.c.0.s8 %v4441
        %v4443 = vlaneseq
        %v4444 = vshrl.u32 %v4443, 7
        %v4445 = vsub.s32 %v4442, %v4444
        %v4446 = vrot.slane %v4432, %v4445
        %v4447 = vcombine.low %v4439, %v4446
        %v4448 = vcombine.low %v4023, %v4024
        %v4449 = vcombine.low %v4025, %v4026
        %v4451 = vunpack.c.l.s4 1983009808
        %v4452 = vunpack.c.0.s8 %v4451
        %v4453 = vlaneseq
        %v4454 = vshrl.u32 %v4453, 7
        %v4455 = vsub.s32 %v4452, %v4454
        %v4456 = vrot.slane %v4448, %v4455
        %v4458 = vunpack.c.l.s4 1983009808
        %v4459 = vunpack.c.0.s8 %v4458
        %v4460 = vlaneseq
        %v4461 = vshrl.u32 %v4460, 7
        %v4462 = vsub.s32 %v4459, %v4461
        %v4463 = vrot.slane %v4449, %v4462
        %v4464 = vcombine.low %v4456, %v4463
        %v4465 = vcombine.low %v4027, %v4028
        %v4466 = vcombine.low %v4029, %v4030
        %v4468 = vunpack.c.l.s4 1983009808
        %v4469 = vunpack.c.0.s8 %v4468
        %v4470 = vlaneseq
        %v4471 = vshrl.u32 %v4470, 7
        %v4472 = vsub.s32 %v4469, %v4471
        %v4473 = vrot.slane %v4465, %v4472
        %v4475 = vunpack.c.l.s4 1983009808
        %v4476 = vunpack.c.0.s8 %v4475
        %v4477 = vlaneseq
        %v4478 = vshrl.u32 %v4477, 7
        %v4479 = vsub.s32 %v4476, %v4478
        %v4480 = vrot.slane %v4466, %v4479
        %v4481 = vcombine.low %v4473, %v4480
        %v4482 = vcombine.low %v4031, %v4032
        %v4483 = vcombine.low %v4033, %v4034
        %v4485 = vunpack.c.l.s4 1983009808
        %v4486 = vunpack.c.0.s8 %v4485
        %v4487 = vlaneseq
        %v4488 = vshrl.u32 %v4487, 7
        %v4489 = vsub.s32 %v4486, %v4488
        %v4490 = vrot.slane %v4482, %v4489
        %v4492 = vunpack.c.l.s4 1983009808
        %v4493 = vunpack.c.0.s8 %v4492
        %v4494 = vlaneseq
        %v4495 = vshrl.u32 %v4494, 7
        %v4496 = vsub.s32 %v4493, %v4495
        %v4497 = vrot.slane %v4483, %v4496
        %v4498 = vcombine.low %v4490, %v4497
        %v4499 = vcombine.low %v4035, %v4036
        %v4500 = vcombine.low %v4037, %v4038
        %v4502 = vunpack.c.l.s4 1983009808
        %v4503 = vunpack.c.0.s8 %v4502
        %v4504 = vlaneseq
        %v4505 = vshrl.u32 %v4504, 7
        %v4506 = vsub.s32 %v4503, %v4505
        %v4507 = vrot.slane %v4499, %v4506
        %v4509 = vunpack.c.l.s4 1983009808
        %v4510 = vunpack.c.0.s8 %v4509
        %v4511 = vlaneseq
        %v4512 = vshrl.u32 %v4511, 7
        %v4513 = vsub.s32 %v4510, %v4512
        %v4514 = vrot.slane %v4500, %v4513
        %v4515 = vcombine.low %v4507, %v4514
        %v4516 = vcombine.low %v4039, %v4040
        %v4517 = vcombine.low %v4041, %v4042
        %v4519 = vunpack.c.l.s4 1983009808
        %v4520 = vunpack.c.0.s8 %v4519
        %v4521 = vlaneseq
        %v4522 = vshrl.u32 %v4521, 7
        %v4523 = vsub.s32 %v4520, %v4522
        %v4524 = vrot.slane %v4516, %v4523
        %v4526 = vunpack.c.l.s4 1983009808
        %v4527 = vunpack.c.0.s8 %v4526
        %v4528 = vlaneseq
        %v4529 = vshrl.u32 %v4528, 7
        %v4530 = vsub.s32 %v4527, %v4529
        %v4531 = vrot.slane %v4517, %v4530
        %v4532 = vcombine.low %v4524, %v4531
        %v4533 = vcombine.low %v4043, %v4044
        %v4534 = vcombine.low %v4045, %v4046
        %v4536 = vunpack.c.l.s4 1983009808
        %v4537 = vunpack.c.0.s8 %v4536
        %v4538 = vlaneseq
        %v4539 = vshrl.u32 %v4538, 7
        %v4540 = vsub.s32 %v4537, %v4539
        %v4541 = vrot.slane %v4533, %v4540
        %v4543 = vunpack.c.l.s4 1983009808
        %v4544 = vunpack.c.0.s8 %v4543
        %v4545 = vlaneseq
        %v4546 = vshrl.u32 %v4545, 7
        %v4547 = vsub.s32 %v4544, %v4546
        %v4548 = vrot.slane %v4534, %v4547
        %v4549 = vcombine.low %v4541, %v4548
        %v4550 = vcombine.low %v4047, %v4048
        %v4551 = vcombine.low %v4049, %v4050
        %v4553 = vunpack.c.l.s4 1983009808
        %v4554 = vunpack.c.0.s8 %v4553
        %v4555 = vlaneseq
        %v4556 = vshrl.u32 %v4555, 7
        %v4557 = vsub.s32 %v4554, %v4556
        %v4558 = vrot.slane %v4550, %v4557
        %v4560 = vunpack.c.l.s4 1983009808
        %v4561 = vunpack.c.0.s8 %v4560
        %v4562 = vlaneseq
        %v4563 = vshrl.u32 %v4562, 7
        %v4564 = vsub.s32 %v4561, %v4563
        %v4565 = vrot.slane %v4551, %v4564
        %v4566 = vcombine.low %v4558, %v4565
        %v4567 = vcombine.low %v4051, %v4052
        %v4568 = vcombine.low %v4053, %v4054
        %v4570 = vunpack.c.l.s4 1983009808
        %v4571 = vunpack.c.0.s8 %v4570
        %v4572 = vlaneseq
        %v4573 = vshrl.u32 %v4572, 7
        %v4574 = vsub.s32 %v4571, %v4573
        %v4575 = vrot.slane %v4567, %v4574
        %v4577 = vunpack.c.l.s4 1983009808
        %v4578 = vunpack.c.0.s8 %v4577
        %v4579 = vlaneseq
        %v4580 = vshrl.u32 %v4579, 7
        %v4581 = vsub.s32 %v4578, %v4580
        %v4582 = vrot.slane %v4568, %v4581
        %v4583 = vcombine.low %v4575, %v4582
        %v4584 = vcombine.low %v4055, %v4056
        %v4585 = vcombine.low %v4057, %v4058
        %v4587 = vunpack.c.l.s4 1983009808
        %v4588 = vunpack.c.0.s8 %v4587
        %v4589 = vlaneseq
        %v4590 = vshrl.u32 %v4589, 7
        %v4591 = vsub.s32 %v4588, %v4590
        %v4592 = vrot.slane %v4584, %v4591
        %v4594 = vunpack.c.l.s4 1983009808
        %v4595 = vunpack.c.0.s8 %v4594
        %v4596 = vlaneseq
        %v4597 = vshrl.u32 %v4596, 7
        %v4598 = vsub.s32 %v4595, %v4597
        %v4599 = vrot.slane %v4585, %v4598
        %v4600 = vcombine.low %v4592, %v4599
        %v4601 = vcombine.low %v4059, %v4060
        %v4602 = vcombine.low %v4061, %v4062
        %v4604 = vunpack.c.l.s4 1983009808
        %v4605 = vunpack.c.0.s8 %v4604
        %v4606 = vlaneseq
        %v4607 = vshrl.u32 %v4606, 7
        %v4608 = vsub.s32 %v4605, %v4607
        %v4609 = vrot.slane %v4601, %v4608
        %v4611 = vunpack.c.l.s4 1983009808
        %v4612 = vunpack.c.0.s8 %v4611
        %v4613 = vlaneseq
        %v4614 = vshrl.u32 %v4613, 7
        %v4615 = vsub.s32 %v4612, %v4614
        %v4616 = vrot.slane %v4602, %v4615
        %v4617 = vcombine.low %v4609, %v4616
        %v4618 = vcombine.low %v4063, %v4064
        %v4619 = vcombine.low %v4065, %v4066
        %v4621 = vunpack.c.l.s4 1983009808
        %v4622 = vunpack.c.0.s8 %v4621
        %v4623 = vlaneseq
        %v4624 = vshrl.u32 %v4623, 7
        %v4625 = vsub.s32 %v4622, %v4624
        %v4626 = vrot.slane %v4618, %v4625
        %v4628 = vunpack.c.l.s4 1983009808
        %v4629 = vunpack.c.0.s8 %v4628
        %v4630 = vlaneseq
        %v4631 = vshrl.u32 %v4630, 7
        %v4632 = vsub.s32 %v4629, %v4631
        %v4633 = vrot.slane %v4619, %v4632
        %v4634 = vcombine.low %v4626, %v4633
        %v4635 = vcombine.low %v4067, %v4068
        %v4636 = vcombine.low %v4069, %v4070
        %v4638 = vunpack.c.l.s4 1983009808
        %v4639 = vunpack.c.0.s8 %v4638
        %v4640 = vlaneseq
        %v4641 = vshrl.u32 %v4640, 7
        %v4642 = vsub.s32 %v4639, %v4641
        %v4643 = vrot.slane %v4635, %v4642
        %v4645 = vunpack.c.l.s4 1983009808
        %v4646 = vunpack.c.0.s8 %v4645
        %v4647 = vlaneseq
        %v4648 = vshrl.u32 %v4647, 7
        %v4649 = vsub.s32 %v4646, %v4648
        %v4650 = vrot.slane %v4636, %v4649
        %v4651 = vcombine.low %v4643, %v4650
        %v4652 = vcombine.low %v4071, %v4072
        %v4653 = vcombine.low %v4073, %v4074
        %v4655 = vunpack.c.l.s4 1983009808
        %v4656 = vunpack.c.0.s8 %v4655
        %v4657 = vlaneseq
        %v4658 = vshrl.u32 %v4657, 7
        %v4659 = vsub.s32 %v4656, %v4658
        %v4660 = vrot.slane %v4652, %v4659
        %v4662 = vunpack.c.l.s4 1983009808
        %v4663 = vunpack.c.0.s8 %v4662
        %v4664 = vlaneseq
        %v4665 = vshrl.u32 %v4664, 7
        %v4666 = vsub.s32 %v4663, %v4665
        %v4667 = vrot.slane %v4653, %v4666
        %v4668 = vcombine.low %v4660, %v4667
        %v4669 = vcombine.low %v4075, %v4076
        %v4670 = vcombine.low %v4077, %v4078
        %v4672 = vunpack.c.l.s4 1983009808
        %v4673 = vunpack.c.0.s8 %v4672
        %v4674 = vlaneseq
        %v4675 = vshrl.u32 %v4674, 7
        %v4676 = vsub.s32 %v4673, %v4675
        %v4677 = vrot.slane %v4669, %v4676
        %v4679 = vunpack.c.l.s4 1983009808
        %v4680 = vunpack.c.0.s8 %v4679
        %v4681 = vlaneseq
        %v4682 = vshrl.u32 %v4681, 7
        %v4683 = vsub.s32 %v4680, %v4682
        %v4684 = vrot.slane %v4670, %v4683
        %v4685 = vcombine.low %v4677, %v4684
        %v4686 = vcombine.low %v4079, %v4080
        %v4687 = vcombine.low %v4081, %v4082
        %v4689 = vunpack.c.l.s4 1983009808
        %v4690 = vunpack.c.0.s8 %v4689
        %v4691 = vlaneseq
        %v4692 = vshrl.u32 %v4691, 7
        %v4693 = vsub.s32 %v4690, %v4692
        %v4694 = vrot.slane %v4686, %v4693
        %v4696 = vunpack.c.l.s4 1983009808
        %v4697 = vunpack.c.0.s8 %v4696
        %v4698 = vlaneseq
        %v4699 = vshrl.u32 %v4698, 7
        %v4700 = vsub.s32 %v4697, %v4699
        %v4701 = vrot.slane %v4687, %v4700
        %v4702 = vcombine.low %v4694, %v4701
        %v4703 = vcombine.low %v4083, %v4084
        %v4704 = vcombine.low %v4085, %v4086
        %v4706 = vunpack.c.l.s4 1983009808
        %v4707 = vunpack.c.0.s8 %v4706
        %v4708 = vlaneseq
        %v4709 = vshrl.u32 %v4708, 7
        %v4710 = vsub.s32 %v4707, %v4709
        %v4711 = vrot.slane %v4703, %v4710
        %v4713 = vunpack.c.l.s4 1983009808
        %v4714 = vunpack.c.0.s8 %v4713
        %v4715 = vlaneseq
        %v4716 = vshrl.u32 %v4715, 7
        %v4717 = vsub.s32 %v4714, %v4716
        %v4718 = vrot.slane %v4704, %v4717
        %v4719 = vcombine.low %v4711, %v4718
        %v4720 = vcombine.low %v4087, %v4088
        %v4721 = vcombine.low %v4089, %v4090
        %v4723 = vunpack.c.l.s4 1983009808
        %v4724 = vunpack.c.0.s8 %v4723
        %v4725 = vlaneseq
        %v4726 = vshrl.u32 %v4725, 7
        %v4727 = vsub.s32 %v4724, %v4726
        %v4728 = vrot.slane %v4720, %v4727
        %v4730 = vunpack.c.l.s4 1983009808
        %v4731 = vunpack.c.0.s8 %v4730
        %v4732 = vlaneseq
        %v4733 = vshrl.u32 %v4732, 7
        %v4734 = vsub.s32 %v4731, %v4733
        %v4735 = vrot.slane %v4721, %v4734
        %v4736 = vcombine.low %v4728, %v4735
        %v4737 = vcombine.low %v4091, %v4092
        %v4738 = vcombine.low %v4093, %v4094
        %v4740 = vunpack.c.l.s4 1983009808
        %v4741 = vunpack.c.0.s8 %v4740
        %v4742 = vlaneseq
        %v4743 = vshrl.u32 %v4742, 7
        %v4744 = vsub.s32 %v4741, %v4743
        %v4745 = vrot.slane %v4737, %v4744
        %v4747 = vunpack.c.l.s4 1983009808
        %v4748 = vunpack.c.0.s8 %v4747
        %v4749 = vlaneseq
        %v4750 = vshrl.u32 %v4749, 7
        %v4751 = vsub.s32 %v4748, %v4750
        %v4752 = vrot.slane %v4738, %v4751
        %v4753 = vcombine.low %v4745, %v4752
        %v4754 = vcombine.low %v4095, %v4096
        %v4755 = vcombine.low %v4097, %v4098
        %v4757 = vunpack.c.l.s4 1983009808
        %v4758 = vunpack.c.0.s8 %v4757
        %v4759 = vlaneseq
        %v4760 = vshrl.u32 %v4759, 7
        %v4761 = vsub.s32 %v4758, %v4760
        %v4762 = vrot.slane %v4754, %v4761
        %v4764 = vunpack.c.l.s4 1983009808
        %v4765 = vunpack.c.0.s8 %v4764
        %v4766 = vlaneseq
        %v4767 = vshrl.u32 %v4766, 7
        %v4768 = vsub.s32 %v4765, %v4767
        %v4769 = vrot.slane %v4755, %v4768
        %v4770 = vcombine.low %v4762, %v4769
        %v4803 = vpack.c.bf16 %v4260, %v4243
        %v4804 = vpack.c.bf16 %v4294, %v4277
        %v4805 = vpack.c.bf16 %v4328, %v4311
        %v4806 = vpack.c.bf16 %v4362, %v4345
        %v4807 = vpack.c.bf16 %v4396, %v4379
        %v4808 = vpack.c.bf16 %v4430, %v4413
        %v4809 = vpack.c.bf16 %v4464, %v4447
        %v4810 = vpack.c.bf16 %v4498, %v4481
        %v4811 = vpack.c.bf16 %v4532, %v4515
        %v4812 = vpack.c.bf16 %v4566, %v4549
        %v4813 = vpack.c.bf16 %v4600, %v4583
        %v4814 = vpack.c.bf16 %v4634, %v4617
        %v4815 = vpack.c.bf16 %v4668, %v4651
        %v4816 = vpack.c.bf16 %v4702, %v4685
        %v4817 = vpack.c.bf16 %v4736, %v4719
        %v4818 = vpack.c.bf16 %v4770, %v4753
        %v4819 = vld [vmem:[%s3] sm:$0xf]
        %v4820 = vld [vmem:[%s3 + $0x4] sm:$0xf]
        %v4823 = vunpack.c.l.b16 %v4819
        %v4824 = vunpack.c.l.b16 %v4820
        %v4825 = vpack.c.b16 %v4824, %v4823
        %v4828 = vsel %vm1972, %v4803, 0
        %v4831 = vsel %vm1972, %v4804, 0
        %v4834 = vsel %vm1972, %v4805, 0
        %v4837 = vsel %vm1972, %v4806, 0
        %v4840 = vsel %vm1972, %v4807, 0
        %v4843 = vsel %vm1972, %v4808, 0
        %v4846 = vsel %vm1972, %v4809, 0
        %v4849 = vsel %vm1972, %v4810, 0
        %v4852 = vsel %vm1972, %v4811, 0
        %v4855 = vsel %vm1972, %v4812, 0
        %v4858 = vsel %vm1972, %v4813, 0
        %v4861 = vsel %vm1972, %v4814, 0
        %v4864 = vsel %vm1972, %v4815, 0
        %v4867 = vsel %vm1972, %v4816, 0
        %v4870 = vsel %vm1972, %v4817, 0
        %v4873 = vsel %vm1972, %v4818, 0
        %4875 = vmatprep.subr.bf16.mxu0 0
        %4876 = vmatpush1.bf16.msra.mxu0 0
        %4877 = vmatprep.subr.bf16.mxu0 0
        %4878 = vmatpush1.bf16.msra.mxu0 0
        %4879 = vmatprep.subr.bf16.mxu0 0
        %4880 = vmatpush1.bf16.msra.mxu0 0
        %4881 = vmatprep.subr.bf16.mxu0 0
        %4882 = vmatpush1.bf16.msra.mxu0 0
        %4883 = vmatprep.subr.bf16.mxu0 0
        %4884 = vmatpush1.bf16.msra.mxu0 0
        %4885 = vmatprep.subr.bf16.mxu0 0
        %4886 = vmatpush1.bf16.msra.mxu0 0
        %4887 = vmatprep.subr.bf16.mxu0 0
        %4888 = vmatpush1.bf16.msra.mxu0 0
        %4889 = vmatprep.subr.bf16.mxu0 0
        %4890 = vmatpush1.bf16.msra.mxu0 %v4825
        %4891 = vmatprep.subr.bf16.mxu0 0
        %4892 = vmatpush2.bf16.msra.mxu0 0
        %4893 = vmatprep.subr.bf16.mxu0 0
        %4894 = vmatpush2.bf16.msra.mxu0 0
        %4895 = vmatprep.subr.bf16.mxu0 0
        %4896 = vmatpush2.bf16.msra.mxu0 0
        %4897 = vmatprep.subr.bf16.mxu0 0
        %4898 = vmatpush2.bf16.msra.mxu0 0
        %4899 = vmatprep.subr.bf16.mxu0 0
        %4900 = vmatpush2.bf16.msra.mxu0 0
        %4901 = vmatprep.subr.bf16.mxu0 0
        %4902 = vmatpush2.bf16.msra.mxu0 0
        %4903 = vmatprep.subr.bf16.mxu0 0
        %4904 = vmatpush2.bf16.msra.mxu0 0
        %4905 = vmatprep.subr.bf16.mxu0 0
        %4906 = vmatpush2.bf16.msra.mxu0 0
        %4907 = vmatprep.mubr.bf16.mxu0 0
        %4908 = vmatmul.mubr.bf16.gmra.mxu0 %v4828
        %v4909 = vpop.f32.mrf.mxu0
        %v4910 = vadd.f32 %v483, %v4909
        %v4911 = vpop.f32.mrf.mxu0
        %v4912 = vpop.f32.mrf.mxu0
        %v4913 = vadd.f32 %v487, %v4912
        %v4914 = vpop.f32.mrf.mxu0
        %4915 = vmatprep.mubr.bf16.mxu0 0
        %4916 = vmatmul.mubr.bf16.gmra.mxu0 %v4831
        %v4917 = vpop.f32.mrf.mxu0
        %v4918 = vadd.f32 %v493, %v4917
        %v4919 = vpop.f32.mrf.mxu0
        %v4920 = vpop.f32.mrf.mxu0
        %v4921 = vadd.f32 %v497, %v4920
        %v4922 = vpop.f32.mrf.mxu0
        %4923 = vmatprep.mubr.bf16.mxu0 0
        %4924 = vmatmul.mubr.bf16.gmra.mxu0 %v4834
        %v4925 = vpop.f32.mrf.mxu0
        %v4926 = vadd.f32 %v503, %v4925
        %v4927 = vpop.f32.mrf.mxu0
        %v4928 = vpop.f32.mrf.mxu0
        %v4929 = vadd.f32 %v507, %v4928
        %v4930 = vpop.f32.mrf.mxu0
        %4931 = vmatprep.mubr.bf16.mxu0 0
        %4932 = vmatmul.mubr.bf16.gmra.mxu0 %v4837
        %v4933 = vpop.f32.mrf.mxu0
        %v4934 = vadd.f32 %v513, %v4933
        %v4935 = vpop.f32.mrf.mxu0
        %v4936 = vpop.f32.mrf.mxu0
        %v4937 = vadd.f32 %v517, %v4936
        %v4938 = vpop.f32.mrf.mxu0
        %4939 = vmatprep.mubr.bf16.mxu0 0
        %4940 = vmatmul.mubr.bf16.gmra.mxu0 %v4840
        %v4941 = vpop.f32.mrf.mxu0
        %v4942 = vadd.f32 %v523, %v4941
        %v4943 = vpop.f32.mrf.mxu0
        %v4944 = vpop.f32.mrf.mxu0
        %v4945 = vadd.f32 %v527, %v4944
        %v4946 = vpop.f32.mrf.mxu0
        %4947 = vmatprep.mubr.bf16.mxu0 0
        %4948 = vmatmul.mubr.bf16.gmra.mxu0 %v4843
        %v4949 = vpop.f32.mrf.mxu0
        %v4950 = vadd.f32 %v533, %v4949
        %v4951 = vpop.f32.mrf.mxu0
        %v4952 = vpop.f32.mrf.mxu0
        %v4953 = vadd.f32 %v537, %v4952
        %v4954 = vpop.f32.mrf.mxu0
        %4955 = vmatprep.mubr.bf16.mxu0 0
        %4956 = vmatmul.mubr.bf16.gmra.mxu0 %v4846
        %v4957 = vpop.f32.mrf.mxu0
        %v4958 = vadd.f32 %v543, %v4957
        %v4959 = vpop.f32.mrf.mxu0
        %v4960 = vpop.f32.mrf.mxu0
        %v4961 = vadd.f32 %v547, %v4960
        %v4962 = vpop.f32.mrf.mxu0
        %4963 = vmatprep.mubr.bf16.mxu0 0
        %4964 = vmatmul.mubr.bf16.gmra.mxu0 %v4849
        %v4965 = vpop.f32.mrf.mxu0
        %v4966 = vadd.f32 %v553, %v4965
        %v4967 = vpop.f32.mrf.mxu0
        %v4968 = vpop.f32.mrf.mxu0
        %v4969 = vadd.f32 %v557, %v4968
        %v4970 = vpop.f32.mrf.mxu0
        %4971 = vmatprep.mubr.bf16.mxu0 0
        %4972 = vmatmul.mubr.bf16.gmra.mxu0 %v4852
        %v4973 = vpop.f32.mrf.mxu0
        %v4974 = vadd.f32 %v563, %v4973
        %v4975 = vpop.f32.mrf.mxu0
        %v4976 = vpop.f32.mrf.mxu0
        %v4977 = vadd.f32 %v567, %v4976
        %v4978 = vpop.f32.mrf.mxu0
        %4979 = vmatprep.mubr.bf16.mxu0 0
        %4980 = vmatmul.mubr.bf16.gmra.mxu0 %v4855
        %v4981 = vpop.f32.mrf.mxu0
        %v4982 = vadd.f32 %v573, %v4981
        %v4983 = vpop.f32.mrf.mxu0
        %v4984 = vpop.f32.mrf.mxu0
        %v4985 = vadd.f32 %v577, %v4984
        %v4986 = vpop.f32.mrf.mxu0
        %4987 = vmatprep.mubr.bf16.mxu0 0
        %4988 = vmatmul.mubr.bf16.gmra.mxu0 %v4858
        %v4989 = vpop.f32.mrf.mxu0
        %v4990 = vadd.f32 %v583, %v4989
        %v4991 = vpop.f32.mrf.mxu0
        %v4992 = vpop.f32.mrf.mxu0
        %v4993 = vadd.f32 %v587, %v4992
        %v4994 = vpop.f32.mrf.mxu0
        %4995 = vmatprep.mubr.bf16.mxu0 0
        %4996 = vmatmul.mubr.bf16.gmra.mxu0 %v4861
        %v4997 = vpop.f32.mrf.mxu0
        %v4998 = vadd.f32 %v593, %v4997
        %v4999 = vpop.f32.mrf.mxu0
        %v5000 = vpop.f32.mrf.mxu0
        %v5001 = vadd.f32 %v597, %v5000
        %v5002 = vpop.f32.mrf.mxu0
        %5003 = vmatprep.mubr.bf16.mxu0 0
        %5004 = vmatmul.mubr.bf16.gmra.mxu0 %v4864
        %v5005 = vpop.f32.mrf.mxu0
        %v5006 = vadd.f32 %v603, %v5005
        %v5007 = vpop.f32.mrf.mxu0
        %v5008 = vpop.f32.mrf.mxu0
        %v5009 = vadd.f32 %v607, %v5008
        %v5010 = vpop.f32.mrf.mxu0
        %5011 = vmatprep.mubr.bf16.mxu0 0
        %5012 = vmatmul.mubr.bf16.gmra.mxu0 %v4867
        %v5013 = vpop.f32.mrf.mxu0
        %v5014 = vadd.f32 %v613, %v5013
        %v5015 = vpop.f32.mrf.mxu0
        %v5016 = vpop.f32.mrf.mxu0
        %v5017 = vadd.f32 %v617, %v5016
        %v5018 = vpop.f32.mrf.mxu0
        %5019 = vmatprep.mubr.bf16.mxu0 0
        %5020 = vmatmul.mubr.bf16.gmra.mxu0 %v4870
        %v5021 = vpop.f32.mrf.mxu0
        %v5022 = vadd.f32 %v623, %v5021
        %v5023 = vpop.f32.mrf.mxu0
        %v5024 = vpop.f32.mrf.mxu0
        %v5025 = vadd.f32 %v627, %v5024
        %v5026 = vpop.f32.mrf.mxu0
        %5027 = vmatprep.mubr.bf16.mxu0 0
        %5028 = vmatmul.mubr.bf16.gmra.mxu0 %v4873
        %v5029 = vpop.f32.mrf.mxu0
        %v5030 = vadd.f32 %v633, %v5029
        %v5031 = vpop.f32.mrf.mxu0
        %v5032 = vpop.f32.mrf.mxu0
        %v5033 = vadd.f32 %v637, %v5032
        %v5034 = vpop.f32.mrf.mxu0
        %5035 = vdwg.mxu0
        %v5036 = vmax.f32 %v4910, 0.0
        %v5037 = vmax.f32 %v4913, 0.0
        %v5038 = vmax.f32 %v4918, 0.0
        %v5039 = vmax.f32 %v4921, 0.0
        %v5040 = vmax.f32 %v4926, 0.0
        %v5041 = vmax.f32 %v4929, 0.0
        %v5042 = vmax.f32 %v4934, 0.0
        %v5043 = vmax.f32 %v4937, 0.0
        %v5044 = vmax.f32 %v4942, 0.0
        %v5045 = vmax.f32 %v4945, 0.0
        %v5046 = vmax.f32 %v4950, 0.0
        %v5047 = vmax.f32 %v4953, 0.0
        %v5048 = vmax.f32 %v4958, 0.0
        %v5049 = vmax.f32 %v4961, 0.0
        %v5050 = vmax.f32 %v4966, 0.0
        %v5051 = vmax.f32 %v4969, 0.0
        %v5052 = vmax.f32 %v4974, 0.0
        %v5053 = vmax.f32 %v4977, 0.0
        %v5054 = vmax.f32 %v4982, 0.0
        %v5055 = vmax.f32 %v4985, 0.0
        %v5056 = vmax.f32 %v4990, 0.0
        %v5057 = vmax.f32 %v4993, 0.0
        %v5058 = vmax.f32 %v4998, 0.0
        %v5059 = vmax.f32 %v5001, 0.0
        %v5060 = vmax.f32 %v5006, 0.0
        %v5061 = vmax.f32 %v5009, 0.0
        %v5062 = vmax.f32 %v5014, 0.0
        %v5063 = vmax.f32 %v5017, 0.0
        %v5064 = vmax.f32 %v5022, 0.0
        %v5065 = vmax.f32 %v5025, 0.0
        %v5066 = vmax.f32 %v5030, 0.0
        %v5067 = vmax.f32 %v5033, 0.0
        %v5068 = vpack.c.bf16 %v5037, %v5036
        %v5069 = vpack.c.bf16 %v5039, %v5038
        %v5070 = vpack.c.bf16 %v5041, %v5040
        %v5071 = vpack.c.bf16 %v5043, %v5042
        %v5072 = vpack.c.bf16 %v5045, %v5044
        %v5073 = vpack.c.bf16 %v5047, %v5046
        %v5074 = vpack.c.bf16 %v5049, %v5048
        %v5075 = vpack.c.bf16 %v5051, %v5050
        %v5076 = vpack.c.bf16 %v5053, %v5052
        %v5077 = vpack.c.bf16 %v5055, %v5054
        %v5078 = vpack.c.bf16 %v5057, %v5056
        %v5079 = vpack.c.bf16 %v5059, %v5058
        %v5080 = vpack.c.bf16 %v5061, %v5060
        %v5081 = vpack.c.bf16 %v5063, %v5062
        %v5082 = vpack.c.bf16 %v5065, %v5064
        %v5083 = vpack.c.bf16 %v5067, %v5066
        %v5100 = vunpack.c.l.b16 %v5068
        %v5101 = vunpack.c.h.b16 %v5068
        %v5102 = vunpack.c.l.b16 %v5069
        %v5103 = vunpack.c.h.b16 %v5069
        %v5104 = vunpack.c.l.b16 %v5070
        %v5105 = vunpack.c.h.b16 %v5070
        %v5106 = vunpack.c.l.b16 %v5071
        %v5107 = vunpack.c.h.b16 %v5071
        %v5108 = vunpack.c.l.b16 %v5072
        %v5109 = vunpack.c.h.b16 %v5072
        %v5110 = vunpack.c.l.b16 %v5073
        %v5111 = vunpack.c.h.b16 %v5073
        %v5112 = vunpack.c.l.b16 %v5074
        %v5113 = vunpack.c.h.b16 %v5074
        %v5114 = vunpack.c.l.b16 %v5075
        %v5115 = vunpack.c.h.b16 %v5075
        %v5116 = vunpack.c.l.b16 %v5076
        %v5117 = vunpack.c.h.b16 %v5076
        %v5118 = vunpack.c.l.b16 %v5077
        %v5119 = vunpack.c.h.b16 %v5077
        %v5120 = vunpack.c.l.b16 %v5078
        %v5121 = vunpack.c.h.b16 %v5078
        %v5122 = vunpack.c.l.b16 %v5079
        %v5123 = vunpack.c.h.b16 %v5079
        %v5124 = vunpack.c.l.b16 %v5080
        %v5125 = vunpack.c.h.b16 %v5080
        %v5126 = vunpack.c.l.b16 %v5081
        %v5127 = vunpack.c.h.b16 %v5081
        %v5128 = vunpack.c.l.b16 %v5082
        %v5129 = vunpack.c.h.b16 %v5082
        %v5130 = vunpack.c.l.b16 %v5083
        %v5131 = vunpack.c.h.b16 %v5083
        %v5132 = vpack.c.b16 %v5100, %v5100
        %v5133 = vpack.c.b16 %v5101, %v5101
        %v5134 = vpack.c.b16 %v5102, %v5102
        %v5135 = vpack.c.b16 %v5103, %v5103
        %v5136 = vpack.c.b16 %v5104, %v5104
        %v5137 = vpack.c.b16 %v5105, %v5105
        %v5138 = vpack.c.b16 %v5106, %v5106
        %v5139 = vpack.c.b16 %v5107, %v5107
        %v5140 = vpack.c.b16 %v5108, %v5108
        %v5141 = vpack.c.b16 %v5109, %v5109
        %v5142 = vpack.c.b16 %v5110, %v5110
        %v5143 = vpack.c.b16 %v5111, %v5111
        %v5144 = vpack.c.b16 %v5112, %v5112
        %v5145 = vpack.c.b16 %v5113, %v5113
        %v5146 = vpack.c.b16 %v5114, %v5114
        %v5147 = vpack.c.b16 %v5115, %v5115
        %v5148 = vpack.c.b16 %v5116, %v5116
        %v5149 = vpack.c.b16 %v5117, %v5117
        %v5150 = vpack.c.b16 %v5118, %v5118
        %v5151 = vpack.c.b16 %v5119, %v5119
        %v5152 = vpack.c.b16 %v5120, %v5120
        %v5153 = vpack.c.b16 %v5121, %v5121
        %v5154 = vpack.c.b16 %v5122, %v5122
        %v5155 = vpack.c.b16 %v5123, %v5123
        %v5156 = vpack.c.b16 %v5124, %v5124
        %v5157 = vpack.c.b16 %v5125, %v5125
        %v5158 = vpack.c.b16 %v5126, %v5126
        %v5159 = vpack.c.b16 %v5127, %v5127
        %v5160 = vpack.c.b16 %v5128, %v5128
        %v5161 = vpack.c.b16 %v5129, %v5129
        %v5162 = vpack.c.b16 %v5130, %v5130
        %v5163 = vpack.c.b16 %v5131, %v5131
        %5196 = vst [vmem:[%s244] sm:$0xf] %v5132
        %5197 = vst [vmem:[%s244 + $0x4] sm:$0xf] %v5133
        %5198 = vst [vmem:[%s244 + $0x8] sm:$0xf] %v5134
        %5199 = vst [vmem:[%s244 + $0xc] sm:$0xf] %v5135
        %5200 = vst [vmem:[%s244 + $0x10] sm:$0xf] %v5136
        %5201 = vst [vmem:[%s244 + $0x14] sm:$0xf] %v5137
        %5202 = vst [vmem:[%s244 + $0x18] sm:$0xf] %v5138
        %5203 = vst [vmem:[%s244 + $0x1c] sm:$0xf] %v5139
        %5204 = vst [vmem:[%s244 + $0x20] sm:$0xf] %v5140
        %5205 = vst [vmem:[%s244 + $0x24] sm:$0xf] %v5141
        %5206 = vst [vmem:[%s244 + $0x28] sm:$0xf] %v5142
        %5207 = vst [vmem:[%s244 + $0x2c] sm:$0xf] %v5143
        %5208 = vst [vmem:[%s244 + $0x30] sm:$0xf] %v5144
        %5209 = vst [vmem:[%s244 + $0x34] sm:$0xf] %v5145
        %5210 = vst [vmem:[%s244 + $0x38] sm:$0xf] %v5146
        %5211 = vst [vmem:[%s244 + $0x3c] sm:$0xf] %v5147
        %5212 = vst [vmem:[%s244 + $0x40] sm:$0xf] %v5148
        %5213 = vst [vmem:[%s244 + $0x44] sm:$0xf] %v5149
        %5214 = vst [vmem:[%s244 + $0x48] sm:$0xf] %v5150
        %5215 = vst [vmem:[%s244 + $0x4c] sm:$0xf] %v5151
        %5216 = vst [vmem:[%s244 + $0x50] sm:$0xf] %v5152
        %5217 = vst [vmem:[%s244 + $0x54] sm:$0xf] %v5153
        %5218 = vst [vmem:[%s244 + $0x58] sm:$0xf] %v5154
        %5219 = vst [vmem:[%s244 + $0x5c] sm:$0xf] %v5155
        %5220 = vst [vmem:[%s244 + $0x60] sm:$0xf] %v5156
        %5221 = vst [vmem:[%s244 + $0x64] sm:$0xf] %v5157
        %5222 = vst [vmem:[%s244 + $0x68] sm:$0xf] %v5158
        %5223 = vst [vmem:[%s244 + $0x6c] sm:$0xf] %v5159
        %5224 = vst [vmem:[%s244 + $0x70] sm:$0xf] %v5160
        %5225 = vst [vmem:[%s244 + $0x74] sm:$0xf] %v5161
        %5226 = vst [vmem:[%s244 + $0x78] sm:$0xf] %v5162
        %5227 = vst [vmem:[%s244 + $0x7c] sm:$0xf] %v5163
        %s5228 = sand.u32 %s159, 1
        %s5229 = scalar_lea.sflag [#allocation4], %s5228
        %s5230 = sand.u32 %s159, 1
        %s5231 = smul.addr %s5230, 128
        %s5232 = scalar_lea.vmem [#allocation3], %s5231
        // Predicated region
        $region45: #{tpu_custom_call.1} parent=43 // pred_check
          %p5233 = pneg %p169
        $region46: #{tpu_custom_call.1} parent=43 // pred_check_branch
          %5235 = sbr.rel (%p5233) target = $region48
        $region47: #{tpu_custom_call.1} parent=43 // pred_region
          %s5237 = ssub.s32 2048, 2048
          %5238 = vsyncadd %s5229, %s5237
          %s5239 = smul.addr %s20, 32
          %s5240 = smul.addr %s5239, 64
          %s5241 = scalar_lea.hbm %s6, %s5240
          %s5242 = sshll.u32 %s5232, 4
          %s5243 = int_to_ptr.vmem [resolvable:$true] %s5242
          %5248 = dma.vmem_to_hbm [thread:$0]  %s5243, 2048, %s5241, %s5229, 64, 64, 4
        $region48: #{tpu_custom_call.1} parent=43 // pred_fallthru
          _
      $region44: #{tpu_custom_call.1} parent=5 // pred_fallthru
        _
      %p5249 = scmp.le.s32.totalorder 2, %s15
      // Predicated region
      $region49: #{tpu_custom_call.1} parent=5 // pred_check
        %p5250 = pneg %p5249
      $region50: #{tpu_custom_call.1} parent=5 // pred_check_branch
        %5252 = sbr.rel (%p5250) target = $region52
      $region51: #{tpu_custom_call.1} parent=5 // pred_region
        %s5253 = ssub.s32 %s15, 2
        // Predicated region
        $region53: #{tpu_custom_call.1} parent=51 // pred_check
          %p5254 = pneg %p175
        $region54: #{tpu_custom_call.1} parent=51 // pred_check_branch
          %5256 = sbr.rel (%p5254) target = $region56
        $region55: #{tpu_custom_call.1} parent=51 // pred_region
          %s5257 = sand.u32 %s160, 1
          %s5258 = scalar_lea.sflag [#allocation4], %s5257
          %s5259 = sand.u32 %s160, 1
          %s5260 = smul.addr %s5259, 128
          %s5261 = scalar_lea.vmem [#allocation3], %s5260
          %5262 = dma.done %s5258, 2048
        $region56: #{tpu_custom_call.1} parent=51 // pred_fallthru
          _
      $region52: #{tpu_custom_call.1} parent=5 // pred_fallthru
        _
    $region6: #{tpu_custom_call.1} parent=1 // loop_footer
      %s19 = sadd.s32 1, %s15
    $region7: #{tpu_custom_call.1} parent=1 // loop_footer_branch
      %14 = sbr.rel target = $region3
    $region8: #{tpu_custom_call.1} parent=1 // loop_exit
      _
    %5263 = vsyncpa [#allocation4], 1
    %s5264 = scalar_lea.sflag [#allocation4], 1
    %5265 = vsyncpa %s5264, 1

</llo_original>
